<compile_context>
chip_gen: v5e
topology: v5e:2x2
jax: 0.10.0
libtpu: 0.0.40
codegen_flags: <defaults>
</compile_context>

<pallas_src>
import functools

import jax
import jax.numpy as jnp
import numpy as np
from jax.experimental import pallas as pl
from jax.experimental.pallas import tpu as pltpu


def attention_kernel(num_pixels, enc_ref, dec_ref, we_ref, wd_ref, bias_ref,
                     wf_ref, bf_ref, awe_ref, alpha_ref):
    Tb, Pp, E = enc_ref.shape
    A = we_ref.shape[1]

    enc = enc_ref[...]                                               # (Tb, Pp, E) bf16

    # Encoder projection as one MXU-shaped GEMM over the whole batch tile:
    # (Tb*Pp, E) @ (E, A), f32 accumulation.  Pp is a multiple of 128, so the
    # (Tb, Pp) -> Tb*Pp merge is a layout no-op for bf16 (pack of 16).
    att1 = jnp.dot(enc.reshape(Tb * Pp, E), we_ref[...],
                   preferred_element_type=jnp.float32).reshape(Tb, Pp, A)

    # Decoder projection batched over the tile: (Tb, D) @ (D, A).
    att2 = jnp.dot(dec_ref[...], wd_ref[...],
                   preferred_element_type=jnp.float32)               # (Tb, A)

    # relu(att1 + att2.unsqueeze(1)); the two Linear biases are pre-folded into
    # a single (1, A) vector added once.
    h = jnp.maximum(att1 + att2[:, None, :] + bias_ref[...], 0.0)    # (Tb, Pp, A) f32

    # full_att (Linear(A, 1)): VPU multiply + lane reduce (an N=1 matmul would
    # waste 127/128 MXU lanes); the scalar bias comes from SMEM.
    att = jnp.sum(h * wf_ref[...], axis=-1) + bf_ref[0]              # (Tb, Pp)

    # Mask padded pixel columns so they receive zero attention weight.
    if num_pixels < Pp:
        lane = jax.lax.broadcasted_iota(jnp.int32, (Tb, Pp), 1)
        att = jnp.where(lane < num_pixels, att, -1e30)

    # Softmax over the pixel dimension (max-subtracted, f32); normalization
    # goes through the EUP reciprocal instead of an f32 VALU divide.
    m = jnp.max(att, axis=-1, keepdims=True)
    e = jnp.exp(att - m)
    alpha = e * pl.reciprocal(jnp.sum(e, axis=-1, keepdims=True), approx=True)

    # Attention-weighted encoding on the MXU: batched contraction over the
    # pixel dim (batch=Tb, K=Pp, N=E), f32 accumulation.  Padded pixels have
    # alpha == 0 and zero enc rows, so they contribute nothing.
    awe = jnp.einsum('bqp,bpe->bqe',
                     alpha.astype(enc.dtype)[:, None, :], enc,
                     preferred_element_type=jnp.float32)             # (Tb, 1, E)

    awe_ref[...] = awe[:, 0, :]
    alpha_ref[...] = alpha


def attention_forward(encoder_out, decoder_hidden, params, *,
                      batch_tile=16, matmul_dtype=jnp.bfloat16,
                      vmem_limit_bytes=48 * 1024 * 1024):
    B, P, E = encoder_out.shape
    D = decoder_hidden.shape[1]
    A = params["w_enc"].shape[1]

    Tb = batch_tile
    assert Tb % 8 == 0, "batch_tile should be a multiple of 8 for dense sublane tiles"

    # Pad batch to a multiple of the tile (padded rows sliced off at the end)
    # and pad pixels to a multiple of 128 (padded pixels masked to -inf before
    # the in-kernel softmax, so correctness is preserved).
    Bp = -(-B // Tb) * Tb
    Pp = -(-P // 128) * 128
    enc = encoder_out
    dec = decoder_hidden
    if Bp != B or Pp != P:
        enc = jnp.pad(enc, ((0, Bp - B), (0, Pp - P), (0, 0)))
    if Bp != B:
        dec = jnp.pad(dec, ((0, Bp - B), (0, 0)))

    # bf16 operands for the MXU matmuls (accumulation stays f32 in-kernel);
    # also halves the enc / weight HBM->VMEM DMA bytes.
    enc_mm = enc.astype(matmul_dtype)
    dec_mm = dec.astype(matmul_dtype)
    w_enc = params["w_enc"].astype(matmul_dtype)
    w_dec = params["w_dec"].astype(matmul_dtype)

    # Fold the encoder/decoder linear biases into one vector, added once in-kernel.
    bias = (params["b_enc"] + params["b_dec"]).reshape(1, A).astype(jnp.float32)
    w_full = params["w_full"].reshape(1, A).astype(jnp.float32)
    b_full = params["b_full"].reshape(1).astype(jnp.float32)

    rep2 = lambda b: (0, 0)
    grid = (Bp // Tb,)
    # Note (v7x): at production shapes keep Bp//Tb >= 2 and even so the
    # "parallel" axis load-balances across both TensorCores.

    kernel = functools.partial(attention_kernel, P)

    awe, alpha = pl.pallas_call(
        kernel,
        out_shape=(jax.ShapeDtypeStruct((Bp, E), jnp.float32),
                   jax.ShapeDtypeStruct((Bp, Pp), jnp.float32)),
        grid=grid,
        in_specs=[
            pl.BlockSpec((Tb, Pp, E), lambda b: (b, 0, 0)),       # encoder_out tile
            pl.BlockSpec((Tb, D), lambda b: (b, 0)),              # decoder_hidden tile
            pl.BlockSpec((E, A), rep2),                           # encoder_att weight
            pl.BlockSpec((D, A), rep2),                           # decoder_att weight
            pl.BlockSpec((1, A), rep2),                           # folded biases (b_enc+b_dec)
            pl.BlockSpec((1, A), rep2),                           # full_att weight
            pl.BlockSpec(memory_space=pltpu.MemorySpace.SMEM),    # full_att bias (scalar)
        ],
        out_specs=(pl.BlockSpec((Tb, E), lambda b: (b, 0)),
                   pl.BlockSpec((Tb, Pp), lambda b: (b, 0))),
        compiler_params=pltpu.CompilerParams(
            dimension_semantics=("parallel",),
            vmem_limit_bytes=vmem_limit_bytes),
    )(enc_mm, dec_mm, w_enc, w_dec, bias, w_full, b_full)

    return awe[:B], alpha[:B, :P]


def attention_reference(encoder_out, decoder_hidden, params):
    """Pure-JAX f32 reference matching the PyTorch forward exactly."""
    att1 = encoder_out @ params["w_enc"] + params["b_enc"]                  # (B, P, A)
    att2 = decoder_hidden @ params["w_dec"] + params["b_dec"]               # (B, A)
    h = jnp.maximum(att1 + att2[:, None, :], 0.0)                           # (B, P, A)
    att = h @ params["w_full"] + params["b_full"]                           # (B, P)
    alpha = jax.nn.softmax(att, axis=1)                                     # (B, P)
    awe = jnp.sum(encoder_out * alpha[:, :, None], axis=1)                  # (B, E)
    return awe, alpha


def init_params(key, encoder_dim, decoder_dim, attention_dim):
    """Deterministic init mimicking nn.Linear default (uniform +-1/sqrt(fan_in))."""
    ks = jax.random.split(key, 6)

    def lin(kw, kb, fan_in, fan_out):
        bound = 1.0 / np.sqrt(fan_in)
        w = jax.random.uniform(kw, (fan_in, fan_out), jnp.float32, -bound, bound)
        b = jax.random.uniform(kb, (fan_out,), jnp.float32, -bound, bound)
        return w, b

    w_enc, b_enc = lin(ks[0], ks[1], encoder_dim, attention_dim)
    w_dec, b_dec = lin(ks[2], ks[3], decoder_dim, attention_dim)
    w_full2, b_full2 = lin(ks[4], ks[5], attention_dim, 1)
    return {
        "w_enc": w_enc, "b_enc": b_enc,
        "w_dec": w_dec, "b_dec": b_dec,
        "w_full": w_full2.reshape(attention_dim),   # Linear(A, 1) weight as (A,)
        "b_full": b_full2.reshape(()),              # scalar bias
    }


if __name__ == "__main__":
    # batch, num_pixels, encoder_dim, decoder_dim, attention_dim
    B, P, E, D, A = 16, 16, 32, 32, 32

    key = jax.random.PRNGKey(0)
    k_enc, k_dec, k_par = jax.random.split(key, 3)
    encoder_out = jax.random.normal(k_enc, (B, P, E), jnp.float32)
    decoder_hidden = jax.random.normal(k_dec, (B, D), jnp.float32)
    params = init_params(k_par, E, D, A)

    awe, alpha = attention_forward(encoder_out, decoder_hidden, params)
    jax.block_until_ready((awe, alpha))

    awe_ref, alpha_ref = attention_reference(encoder_out, decoder_hidden, params)
    # bf16 matmul operands (f32 accumulation) -> relaxed tolerances.
    np.testing.assert_allclose(np.asarray(awe), np.asarray(awe_ref), rtol=2e-2, atol=3e-2)
    np.testing.assert_allclose(np.asarray(alpha), np.asarray(alpha_ref), rtol=2e-2, atol=3e-2)

    # Ragged batch (exercises the batch-padding path).
    awe2, alpha2 = attention_forward(encoder_out[:5], decoder_hidden[:5], params)
    jax.block_until_ready((awe2, alpha2))
    np.testing.assert_allclose(np.asarray(awe2), np.asarray(awe_ref[:5]), rtol=2e-2, atol=3e-2)
    np.testing.assert_allclose(np.asarray(alpha2), np.asarray(alpha_ref[:5]), rtol=2e-2, atol=3e-2)

    print("KERNEL_OK")
</pallas_src>

<mosaic_0001>
module attributes {stable_mosaic.version = 11 : i64} {
  func.func @attention_kernel(%arg0: i32, %arg1: memref<16x128x32xbf16, #tpu.memory_space<vmem>>, %arg2: memref<16x32xbf16, #tpu.memory_space<vmem>>, %arg3: memref<32x32xbf16, #tpu.memory_space<vmem>>, %arg4: memref<32x32xbf16, #tpu.memory_space<vmem>>, %arg5: memref<1x32xf32, #tpu.memory_space<vmem>>, %arg6: memref<1x32xf32, #tpu.memory_space<vmem>>, %arg7: memref<1xf32, #tpu.memory_space<smem>>, %arg8: memref<16x32xf32, #tpu.memory_space<vmem>>, %arg9: memref<16x128xf32, #tpu.memory_space<vmem>>) attributes {dimension_semantics = [#tpu.dimension_semantics<parallel>], iteration_bounds = array<i64: 1>, scalar_prefetch = 0 : i64, scratch_operands = 0 : i64, tpu.core_type = #tpu.core_type<tc>, window_params = [{transform_indices = @transform_0, window_bounds = array<i64: 16, 128, 32>}, {transform_indices = @transform_1, window_bounds = array<i64: 16, 32>}, {pipeline_mode = #tpu.pipeline_mode<synchronous>, transform_indices = @transform_2, window_bounds = array<i64: 32, 32>}, {pipeline_mode = #tpu.pipeline_mode<synchronous>, transform_indices = @transform_3, window_bounds = array<i64: 32, 32>}, {pipeline_mode = #tpu.pipeline_mode<synchronous>, transform_indices = @transform_4, window_bounds = array<i64: 1, 32>}, {pipeline_mode = #tpu.pipeline_mode<synchronous>, transform_indices = @transform_5, window_bounds = array<i64: 1, 32>}, {transform_indices = @transform_6, window_bounds = array<i64: 1>}, {transform_indices = @transform_7, window_bounds = array<i64: 16, 32>}, {transform_indices = @transform_8, window_bounds = array<i64: 16, 128>}]} {
    %c0 = arith.constant 0 : index
    %c0_0 = arith.constant 0 : index
    %c0_1 = arith.constant 0 : index
    %0 = vector.load %arg1[%c0, %c0_0, %c0_1] : memref<16x128x32xbf16, #tpu.memory_space<vmem>>, vector<16x128x32xbf16>
    %1 = vector.shape_cast %0 : vector<16x128x32xbf16> to vector<2048x32xbf16>
    %c0_2 = arith.constant 0 : index
    %c0_3 = arith.constant 0 : index
    %2 = vector.load %arg3[%c0_2, %c0_3] : memref<32x32xbf16, #tpu.memory_space<vmem>>, vector<32x32xbf16>
    %cst = arith.constant dense<0.000000e+00> : vector<2048x32xf32>
    %3 = tpu.matmul %1, %2, %cst {dimension_numbers = #tpu.dot_dimension_numbers<[1], [0], [0], [1], [0, 0, 1, 1], [], []>} : vector<2048x32xbf16>, vector<32x32xbf16>, vector<2048x32xf32> -> vector<2048x32xf32>
    %4 = vector.shape_cast %3 : vector<2048x32xf32> to vector<16x128x32xf32>
    %c0_4 = arith.constant 0 : index
    %c0_5 = arith.constant 0 : index
    %5 = vector.load %arg2[%c0_4, %c0_5] : memref<16x32xbf16, #tpu.memory_space<vmem>>, vector<16x32xbf16>
    %c0_6 = arith.constant 0 : index
    %c0_7 = arith.constant 0 : index
    %6 = vector.load %arg4[%c0_6, %c0_7] : memref<32x32xbf16, #tpu.memory_space<vmem>>, vector<32x32xbf16>
    %cst_8 = arith.constant dense<0.000000e+00> : vector<16x32xf32>
    %7 = tpu.matmul %5, %6, %cst_8 {dimension_numbers = #tpu.dot_dimension_numbers<[1], [0], [0], [1], [0, 0, 1, 1], [], []>} : vector<16x32xbf16>, vector<32x32xbf16>, vector<16x32xf32> -> vector<16x32xf32>
    %8 = vector.shape_cast %7 : vector<16x32xf32> to vector<16x1x32xf32>
    %9 = vector.broadcast %8 : vector<16x1x32xf32> to vector<16x128x32xf32>
    %10 = arith.addf %4, %9 : vector<16x128x32xf32>
    %c0_9 = arith.constant 0 : index
    %c0_10 = arith.constant 0 : index
    %11 = vector.load %arg5[%c0_9, %c0_10] : memref<1x32xf32, #tpu.memory_space<vmem>>, vector<1x32xf32>
    %12 = vector.shape_cast %11 : vector<1x32xf32> to vector<1x1x32xf32>
    %13 = vector.broadcast %12 : vector<1x1x32xf32> to vector<16x128x32xf32>
    %14 = arith.addf %10, %13 : vector<16x128x32xf32>
    %cst_11 = arith.constant 0.000000e+00 : f32
    %15 = vector.broadcast %cst_11 : f32 to vector<16x128x32xf32>
    %16 = arith.maximumf %14, %15 : vector<16x128x32xf32>
    %c0_12 = arith.constant 0 : index
    %c0_13 = arith.constant 0 : index
    %17 = vector.load %arg6[%c0_12, %c0_13] : memref<1x32xf32, #tpu.memory_space<vmem>>, vector<1x32xf32>
    %18 = vector.shape_cast %17 : vector<1x32xf32> to vector<1x1x32xf32>
    %19 = vector.broadcast %18 : vector<1x1x32xf32> to vector<16x128x32xf32>
    %20 = arith.mulf %16, %19 : vector<16x128x32xf32>
    %cst_14 = arith.constant dense<0.000000e+00> : vector<16x128xf32>
    %21 = vector.multi_reduction <add>, %20, %cst_14 [2] : vector<16x128x32xf32> to vector<16x128xf32>
    %c0_15 = arith.constant 0 : index
    %22 = memref.load %arg7[%c0_15] : memref<1xf32, #tpu.memory_space<smem>>
    %23 = vector.broadcast %22 : f32 to vector<16x128xf32>
    %24 = arith.addf %21, %23 : vector<16x128xf32>
    %25 = tpu.iota {dimensions = array<i32: 1>} : vector<16x128xi32>
    %c16_i32 = arith.constant 16 : i32
    %26 = vector.broadcast %c16_i32 : i32 to vector<16x128xi32>
    %27 = arith.cmpi slt, %25, %26 : vector<16x128xi32>
    %cst_16 = arith.constant -1.000000e+30 : f32
    %28 = vector.broadcast %cst_16 : f32 to vector<16x128xf32>
    %29 = arith.select %27, %24, %28 : vector<16x128xi1>, vector<16x128xf32>
    %cst_17 = arith.constant dense<0xFF800000> : vector<16xf32>
    %30 = vector.multi_reduction <maximumf>, %29, %cst_17 [1] : vector<16x128xf32> to vector<16xf32>
    %31 = vector.shape_cast %30 : vector<16xf32> to vector<16x1xf32>
    %32 = vector.broadcast %31 : vector<16x1xf32> to vector<16x128xf32>
    %33 = arith.subf %29, %32 : vector<16x128xf32>
    %34 = math.exp %33 : vector<16x128xf32>
    %cst_18 = arith.constant dense<0.000000e+00> : vector<16xf32>
    %35 = vector.multi_reduction <add>, %34, %cst_18 [1] : vector<16x128xf32> to vector<16xf32>
    %36 = vector.shape_cast %35 : vector<16xf32> to vector<16x1xf32>
    %37 = tpu.reciprocal %36 {approx = true} : vector<16x1xf32> -> vector<16x1xf32>
    %38 = vector.broadcast %37 : vector<16x1xf32> to vector<16x128xf32>
    %39 = arith.mulf %34, %38 : vector<16x128xf32>
    %40 = arith.truncf %39 : vector<16x128xf32> to vector<16x128xbf16>
    %41 = vector.shape_cast %40 : vector<16x128xbf16> to vector<16x1x128xbf16>
    "tpu.trace_start"() <{level = 10 : i32, message = "bqp,bpe->bqe"}> : () -> ()
    %cst_19 = arith.constant dense<0.000000e+00> : vector<16x1x32xf32>
    %42 = tpu.matmul %41, %0, %cst_19 {dimension_numbers = #tpu.dot_dimension_numbers<[2], [1], [1], [2], [0, 0, 0, 1, 1, 2], [0], [0]>} : vector<16x1x128xbf16>, vector<16x128x32xbf16>, vector<16x1x32xf32> -> vector<16x1x32xf32>
    "tpu.trace_stop"() : () -> ()
    %43 = vector.shape_cast %42 : vector<16x1x32xf32> to vector<16x32xf32>
    %c0_20 = arith.constant 0 : index
    %c0_21 = arith.constant 0 : index
    %44 = vector.load %arg8[%c0_20, %c0_21] : memref<16x32xf32, #tpu.memory_space<vmem>>, vector<16x32xf32>
    tpu.vector_store %arg8[%c0_20, %c0_21], %43 {strides = array<i32>} : memref<16x32xf32, #tpu.memory_space<vmem>>, vector<16x32xf32>,
    %c0_22 = arith.constant 0 : index
    %c0_23 = arith.constant 0 : index
    %45 = vector.load %arg9[%c0_22, %c0_23] : memref<16x128xf32, #tpu.memory_space<vmem>>, vector<16x128xf32>
    tpu.vector_store %arg9[%c0_22, %c0_23], %39 {strides = array<i32>} : memref<16x128xf32, #tpu.memory_space<vmem>>, vector<16x128xf32>,
    return
  }
  func.func @transform_0(%arg0: i32) -> (i32, i32, i32) {
    %c0_i32 = arith.constant 0 : i32
    %c0_i32_0 = arith.constant 0 : i32
    %c0_i32_1 = arith.constant 0 : i32
    return %arg0, %c0_i32, %c0_i32_0 : i32, i32, i32
  }
  func.func @transform_1(%arg0: i32) -> (i32, i32) {
    %c0_i32 = arith.constant 0 : i32
    %c0_i32_0 = arith.constant 0 : i32
    return %arg0, %c0_i32 : i32, i32
  }
  func.func @transform_2(%arg0: i32) -> (i32, i32) {
    %c0_i32 = arith.constant 0 : i32
    %c0_i32_0 = arith.constant 0 : i32
    %c0_i32_1 = arith.constant 0 : i32
    return %c0_i32, %c0_i32_0 : i32, i32
  }
  func.func @transform_3(%arg0: i32) -> (i32, i32) {
    %c0_i32 = arith.constant 0 : i32
    %c0_i32_0 = arith.constant 0 : i32
    %c0_i32_1 = arith.constant 0 : i32
    return %c0_i32, %c0_i32_0 : i32, i32
  }
  func.func @transform_4(%arg0: i32) -> (i32, i32) {
    %c0_i32 = arith.constant 0 : i32
    %c0_i32_0 = arith.constant 0 : i32
    %c0_i32_1 = arith.constant 0 : i32
    return %c0_i32, %c0_i32_0 : i32, i32
  }
  func.func @transform_5(%arg0: i32) -> (i32, i32) {
    %c0_i32 = arith.constant 0 : i32
    %c0_i32_0 = arith.constant 0 : i32
    %c0_i32_1 = arith.constant 0 : i32
    return %c0_i32, %c0_i32_0 : i32, i32
  }
  func.func @transform_6(%arg0: i32) -> i32 {
    %c0_i32 = arith.constant 0 : i32
    %c0_i32_0 = arith.constant 0 : i32
    return %c0_i32 : i32
  }
  func.func @transform_7(%arg0: i32) -> (i32, i32) {
    %c0_i32 = arith.constant 0 : i32
    %c0_i32_0 = arith.constant 0 : i32
    return %arg0, %c0_i32 : i32, i32
  }
  func.func @transform_8(%arg0: i32) -> (i32, i32) {
    %c0_i32 = arith.constant 0 : i32
    %c0_i32_0 = arith.constant 0 : i32
    return %arg0, %c0_i32 : i32, i32
  }
}

</mosaic_0001>

<llo_original>
// kernel: tpu_custom_call.1
$region0: #{tpu_custom_call.1}
  #allocation0 [shape = 'u32[]', space=smem, size = 0x4, offset = 0x4, fixed_abs, tag = 'smem constant byte address 0x4 - core index']
  #allocation1 [shape = 'u32[72,128]{1,0:T(1,128)}', space=vmem, size = 0x9000, scoped, tag = 'internal scratch']
  #allocation2 [shape = 'f32[1]{0:T(128)S(6)}', space=smem, size = 0x200, scoped, tag = 'scoped memory for tpu_custom_call.1']
  %s0 = inlined_call_operand.vmem [shape: bf16[16,128,32], index: 0, kind: input, shape index: {}]
  %s1 = inlined_call_operand.vmem [shape: bf16[16,32], index: 1, kind: input, shape index: {}]
  %s2 = inlined_call_operand.vmem [shape: bf16[32,32], index: 2, kind: input, shape index: {}]
  %s3 = inlined_call_operand.vmem [shape: bf16[32,32], index: 3, kind: input, shape index: {}]
  %s4 = inlined_call_operand.vmem [shape: f32[1,32], index: 4, kind: input, shape index: {}]
  %s5 = inlined_call_operand.vmem [shape: f32[1,32], index: 5, kind: input, shape index: {}]
  %s6 = inlined_call_operand.<no memory space> [shape: f32[1], index: 6, kind: input, shape index: {}]
  %s7 = inlined_call_operand.hbm [shape: f32[16,32], index: 7, kind: output, shape index: {0}]
  %s8 = inlined_call_operand.hbm [shape: f32[16,128], index: 8, kind: output, shape index: {1}]
  %9 = xla_tuple %s7, %s8
  %s10 = sld [smem:[#allocation0]]
  $region46: #{tpu_custom_call.1} parent=0
    _
  %s12 = ssub.s32 1, %s10
  %s13 = scalar_select 0, %s12, %s10
  %14 = sst [smem:[#allocation2]] %s6
  $region1: #{tpu_custom_call.1} parent=0
    #allocation3 [shape = 'u8[8192]{0}', space=vmem, size = 0x2000, scoped, tag = 'output window, operand 0, single buffered']
    #allocation4 [shape = 's32[1]{0}', space=sflag, size = 0x4, scoped, tag = 'scoped memory for tpu_custom_call.1']
    #allocation5 [shape = 'u8[8192]{0}', space=vmem, size = 0x2000, scoped, tag = 'output window, operand 1, single buffered']
    #allocation6 [shape = 's32[1]{0}', space=sflag, size = 0x4, scoped, tag = 'scoped memory for tpu_custom_call.1']
    %15 = vsyncpa [#allocation4], 0
    %16 = vsyncpa [#allocation6], 0
    // Predicated region
    $region2: #{tpu_custom_call.1} parent=1 // pred_check
      _
    $region3: #{tpu_custom_call.1} parent=1 // pred_check_branch
      %18 = sbr.rel (0) target = $region5
    $region4: #{tpu_custom_call.1} parent=1 // pred_region
      _
    $region5: #{tpu_custom_call.1} parent=1 // pred_fallthru
      _
    // Predicated region
    $region6: #{tpu_custom_call.1} parent=1 // pred_check
      _
    $region7: #{tpu_custom_call.1} parent=1 // pred_check_branch
      %20 = sbr.rel (0) target = $region9
    $region8: #{tpu_custom_call.1} parent=1 // pred_region
      _
    $region9: #{tpu_custom_call.1} parent=1 // pred_fallthru
      _
    // Predicated region
    $region10: #{tpu_custom_call.1} parent=1 // pred_check
      _
    $region11: #{tpu_custom_call.1} parent=1 // pred_check_branch
      %22 = sbr.rel (0) target = $region13
    $region12: #{tpu_custom_call.1} parent=1 // pred_region
      _
    $region13: #{tpu_custom_call.1} parent=1 // pred_fallthru
      _
    // Predicated region
    $region14: #{tpu_custom_call.1} parent=1 // pred_check
      _
    $region15: #{tpu_custom_call.1} parent=1 // pred_check_branch
      %24 = sbr.rel (0) target = $region17
    $region16: #{tpu_custom_call.1} parent=1 // pred_region
      _
    $region17: #{tpu_custom_call.1} parent=1 // pred_fallthru
      _
    // Predicated region
    $region18: #{tpu_custom_call.1} parent=1 // pred_check
      _
    $region19: #{tpu_custom_call.1} parent=1 // pred_check_branch
      %26 = sbr.rel (0) target = $region21
    $region20: #{tpu_custom_call.1} parent=1 // pred_region
      _
    $region21: #{tpu_custom_call.1} parent=1 // pred_fallthru
      _
    // Predicated region
    $region22: #{tpu_custom_call.1} parent=1 // pred_check
      _
    $region23: #{tpu_custom_call.1} parent=1 // pred_check_branch
      %28 = sbr.rel (0) target = $region25
    $region24: #{tpu_custom_call.1} parent=1 // pred_region
      _
    $region25: #{tpu_custom_call.1} parent=1 // pred_fallthru
      _
    // Predicated region
    $region26: #{tpu_custom_call.1} parent=1 // pred_check
      _
    $region27: #{tpu_custom_call.1} parent=1 // pred_check_branch
      %30 = sbr.rel (0) target = $region29
    $region28: #{tpu_custom_call.1} parent=1 // pred_region
      _
    $region29: #{tpu_custom_call.1} parent=1 // pred_fallthru
      _
    %v32 = vld [vmem:[%s0] sm:$0xf]
    %v33 = vld [vmem:[%s0 + $0x4] sm:$0xf]
    %v34 = vld [vmem:[%s0 + $0x8] sm:$0xf]
    %v35 = vld [vmem:[%s0 + $0xc] sm:$0xf]
    %v36 = vld [vmem:[%s0 + $0x10] sm:$0xf]
    %v37 = vld [vmem:[%s0 + $0x14] sm:$0xf]
    %v38 = vld [vmem:[%s0 + $0x18] sm:$0xf]
    %v39 = vld [vmem:[%s0 + $0x1c] sm:$0xf]
    %v40 = vld [vmem:[%s0 + $0x20] sm:$0xf]
    %v41 = vld [vmem:[%s0 + $0x24] sm:$0xf]
    %v42 = vld [vmem:[%s0 + $0x28] sm:$0xf]
    %v43 = vld [vmem:[%s0 + $0x2c] sm:$0xf]
    %v44 = vld [vmem:[%s0 + $0x30] sm:$0xf]
    %v45 = vld [vmem:[%s0 + $0x34] sm:$0xf]
    %v46 = vld [vmem:[%s0 + $0x38] sm:$0xf]
    %v47 = vld [vmem:[%s0 + $0x3c] sm:$0xf]
    %v48 = vld [vmem:[%s0 + $0x40] sm:$0xf]
    %v49 = vld [vmem:[%s0 + $0x44] sm:$0xf]
    %v50 = vld [vmem:[%s0 + $0x48] sm:$0xf]
    %v51 = vld [vmem:[%s0 + $0x4c] sm:$0xf]
    %v52 = vld [vmem:[%s0 + $0x50] sm:$0xf]
    %v53 = vld [vmem:[%s0 + $0x54] sm:$0xf]
    %v54 = vld [vmem:[%s0 + $0x58] sm:$0xf]
    %v55 = vld [vmem:[%s0 + $0x5c] sm:$0xf]
    %v56 = vld [vmem:[%s0 + $0x60] sm:$0xf]
    %v57 = vld [vmem:[%s0 + $0x64] sm:$0xf]
    %v58 = vld [vmem:[%s0 + $0x68] sm:$0xf]
    %v59 = vld [vmem:[%s0 + $0x6c] sm:$0xf]
    %v60 = vld [vmem:[%s0 + $0x70] sm:$0xf]
    %v61 = vld [vmem:[%s0 + $0x74] sm:$0xf]
    %v62 = vld [vmem:[%s0 + $0x78] sm:$0xf]
    %v63 = vld [vmem:[%s0 + $0x7c] sm:$0xf]
    %v64 = vld [vmem:[%s0 + $0x80] sm:$0xf]
    %v65 = vld [vmem:[%s0 + $0x84] sm:$0xf]
    %v66 = vld [vmem:[%s0 + $0x88] sm:$0xf]
    %v67 = vld [vmem:[%s0 + $0x8c] sm:$0xf]
    %v68 = vld [vmem:[%s0 + $0x90] sm:$0xf]
    %v69 = vld [vmem:[%s0 + $0x94] sm:$0xf]
    %v70 = vld [vmem:[%s0 + $0x98] sm:$0xf]
    %v71 = vld [vmem:[%s0 + $0x9c] sm:$0xf]
    %v72 = vld [vmem:[%s0 + $0xa0] sm:$0xf]
    %v73 = vld [vmem:[%s0 + $0xa4] sm:$0xf]
    %v74 = vld [vmem:[%s0 + $0xa8] sm:$0xf]
    %v75 = vld [vmem:[%s0 + $0xac] sm:$0xf]
    %v76 = vld [vmem:[%s0 + $0xb0] sm:$0xf]
    %v77 = vld [vmem:[%s0 + $0xb4] sm:$0xf]
    %v78 = vld [vmem:[%s0 + $0xb8] sm:$0xf]
    %v79 = vld [vmem:[%s0 + $0xbc] sm:$0xf]
    %v80 = vld [vmem:[%s0 + $0xc0] sm:$0xf]
    %v81 = vld [vmem:[%s0 + $0xc4] sm:$0xf]
    %v82 = vld [vmem:[%s0 + $0xc8] sm:$0xf]
    %v83 = vld [vmem:[%s0 + $0xcc] sm:$0xf]
    %v84 = vld [vmem:[%s0 + $0xd0] sm:$0xf]
    %v85 = vld [vmem:[%s0 + $0xd4] sm:$0xf]
    %v86 = vld [vmem:[%s0 + $0xd8] sm:$0xf]
    %v87 = vld [vmem:[%s0 + $0xdc] sm:$0xf]
    %v88 = vld [vmem:[%s0 + $0xe0] sm:$0xf]
    %v89 = vld [vmem:[%s0 + $0xe4] sm:$0xf]
    %v90 = vld [vmem:[%s0 + $0xe8] sm:$0xf]
    %v91 = vld [vmem:[%s0 + $0xec] sm:$0xf]
    %v92 = vld [vmem:[%s0 + $0xf0] sm:$0xf]
    %v93 = vld [vmem:[%s0 + $0xf4] sm:$0xf]
    %v94 = vld [vmem:[%s0 + $0xf8] sm:$0xf]
    %v95 = vld [vmem:[%s0 + $0xfc] sm:$0xf]
    %v96 = vld [vmem:[%s0 + $0x100] sm:$0xf]
    %v97 = vld [vmem:[%s0 + $0x104] sm:$0xf]
    %v98 = vld [vmem:[%s0 + $0x108] sm:$0xf]
    %v99 = vld [vmem:[%s0 + $0x10c] sm:$0xf]
    %v100 = vld [vmem:[%s0 + $0x110] sm:$0xf]
    %v101 = vld [vmem:[%s0 + $0x114] sm:$0xf]
    %v102 = vld [vmem:[%s0 + $0x118] sm:$0xf]
    %v103 = vld [vmem:[%s0 + $0x11c] sm:$0xf]
    %v104 = vld [vmem:[%s0 + $0x120] sm:$0xf]
    %v105 = vld [vmem:[%s0 + $0x124] sm:$0xf]
    %v106 = vld [vmem:[%s0 + $0x128] sm:$0xf]
    %v107 = vld [vmem:[%s0 + $0x12c] sm:$0xf]
    %v108 = vld [vmem:[%s0 + $0x130] sm:$0xf]
    %v109 = vld [vmem:[%s0 + $0x134] sm:$0xf]
    %v110 = vld [vmem:[%s0 + $0x138] sm:$0xf]
    %v111 = vld [vmem:[%s0 + $0x13c] sm:$0xf]
    %v112 = vld [vmem:[%s0 + $0x140] sm:$0xf]
    %v113 = vld [vmem:[%s0 + $0x144] sm:$0xf]
    %v114 = vld [vmem:[%s0 + $0x148] sm:$0xf]
    %v115 = vld [vmem:[%s0 + $0x14c] sm:$0xf]
    %v116 = vld [vmem:[%s0 + $0x150] sm:$0xf]
    %v117 = vld [vmem:[%s0 + $0x154] sm:$0xf]
    %v118 = vld [vmem:[%s0 + $0x158] sm:$0xf]
    %v119 = vld [vmem:[%s0 + $0x15c] sm:$0xf]
    %v120 = vld [vmem:[%s0 + $0x160] sm:$0xf]
    %v121 = vld [vmem:[%s0 + $0x164] sm:$0xf]
    %v122 = vld [vmem:[%s0 + $0x168] sm:$0xf]
    %v123 = vld [vmem:[%s0 + $0x16c] sm:$0xf]
    %v124 = vld [vmem:[%s0 + $0x170] sm:$0xf]
    %v125 = vld [vmem:[%s0 + $0x174] sm:$0xf]
    %v126 = vld [vmem:[%s0 + $0x178] sm:$0xf]
    %v127 = vld [vmem:[%s0 + $0x17c] sm:$0xf]
    %v128 = vld [vmem:[%s0 + $0x180] sm:$0xf]
    %v129 = vld [vmem:[%s0 + $0x184] sm:$0xf]
    %v130 = vld [vmem:[%s0 + $0x188] sm:$0xf]
    %v131 = vld [vmem:[%s0 + $0x18c] sm:$0xf]
    %v132 = vld [vmem:[%s0 + $0x190] sm:$0xf]
    %v133 = vld [vmem:[%s0 + $0x194] sm:$0xf]
    %v134 = vld [vmem:[%s0 + $0x198] sm:$0xf]
    %v135 = vld [vmem:[%s0 + $0x19c] sm:$0xf]
    %v136 = vld [vmem:[%s0 + $0x1a0] sm:$0xf]
    %v137 = vld [vmem:[%s0 + $0x1a4] sm:$0xf]
    %v138 = vld [vmem:[%s0 + $0x1a8] sm:$0xf]
    %v139 = vld [vmem:[%s0 + $0x1ac] sm:$0xf]
    %v140 = vld [vmem:[%s0 + $0x1b0] sm:$0xf]
    %v141 = vld [vmem:[%s0 + $0x1b4] sm:$0xf]
    %v142 = vld [vmem:[%s0 + $0x1b8] sm:$0xf]
    %v143 = vld [vmem:[%s0 + $0x1bc] sm:$0xf]
    %v144 = vld [vmem:[%s0 + $0x1c0] sm:$0xf]
    %v145 = vld [vmem:[%s0 + $0x1c4] sm:$0xf]
    %v146 = vld [vmem:[%s0 + $0x1c8] sm:$0xf]
    %v147 = vld [vmem:[%s0 + $0x1cc] sm:$0xf]
    %v148 = vld [vmem:[%s0 + $0x1d0] sm:$0xf]
    %v149 = vld [vmem:[%s0 + $0x1d4] sm:$0xf]
    %v150 = vld [vmem:[%s0 + $0x1d8] sm:$0xf]
    %v151 = vld [vmem:[%s0 + $0x1dc] sm:$0xf]
    %v152 = vld [vmem:[%s0 + $0x1e0] sm:$0xf]
    %v153 = vld [vmem:[%s0 + $0x1e4] sm:$0xf]
    %v154 = vld [vmem:[%s0 + $0x1e8] sm:$0xf]
    %v155 = vld [vmem:[%s0 + $0x1ec] sm:$0xf]
    %v156 = vld [vmem:[%s0 + $0x1f0] sm:$0xf]
    %v157 = vld [vmem:[%s0 + $0x1f4] sm:$0xf]
    %v158 = vld [vmem:[%s0 + $0x1f8] sm:$0xf]
    %v159 = vld [vmem:[%s0 + $0x1fc] sm:$0xf]
    %v160 = vld [vmem:[%s0 + $0x200] sm:$0xf]
    %v161 = vld [vmem:[%s0 + $0x204] sm:$0xf]
    %v162 = vld [vmem:[%s0 + $0x208] sm:$0xf]
    %v163 = vld [vmem:[%s0 + $0x20c] sm:$0xf]
    %v164 = vld [vmem:[%s0 + $0x210] sm:$0xf]
    %v165 = vld [vmem:[%s0 + $0x214] sm:$0xf]
    %v166 = vld [vmem:[%s0 + $0x218] sm:$0xf]
    %v167 = vld [vmem:[%s0 + $0x21c] sm:$0xf]
    %v168 = vld [vmem:[%s0 + $0x220] sm:$0xf]
    %v169 = vld [vmem:[%s0 + $0x224] sm:$0xf]
    %v170 = vld [vmem:[%s0 + $0x228] sm:$0xf]
    %v171 = vld [vmem:[%s0 + $0x22c] sm:$0xf]
    %v172 = vld [vmem:[%s0 + $0x230] sm:$0xf]
    %v173 = vld [vmem:[%s0 + $0x234] sm:$0xf]
    %v174 = vld [vmem:[%s0 + $0x238] sm:$0xf]
    %v175 = vld [vmem:[%s0 + $0x23c] sm:$0xf]
    %v176 = vld [vmem:[%s0 + $0x240] sm:$0xf]
    %v177 = vld [vmem:[%s0 + $0x244] sm:$0xf]
    %v178 = vld [vmem:[%s0 + $0x248] sm:$0xf]
    %v179 = vld [vmem:[%s0 + $0x24c] sm:$0xf]
    %v180 = vld [vmem:[%s0 + $0x250] sm:$0xf]
    %v181 = vld [vmem:[%s0 + $0x254] sm:$0xf]
    %v182 = vld [vmem:[%s0 + $0x258] sm:$0xf]
    %v183 = vld [vmem:[%s0 + $0x25c] sm:$0xf]
    %v184 = vld [vmem:[%s0 + $0x260] sm:$0xf]
    %v185 = vld [vmem:[%s0 + $0x264] sm:$0xf]
    %v186 = vld [vmem:[%s0 + $0x268] sm:$0xf]
    %v187 = vld [vmem:[%s0 + $0x26c] sm:$0xf]
    %v188 = vld [vmem:[%s0 + $0x270] sm:$0xf]
    %v189 = vld [vmem:[%s0 + $0x274] sm:$0xf]
    %v190 = vld [vmem:[%s0 + $0x278] sm:$0xf]
    %v191 = vld [vmem:[%s0 + $0x27c] sm:$0xf]
    %v192 = vld [vmem:[%s0 + $0x280] sm:$0xf]
    %v193 = vld [vmem:[%s0 + $0x284] sm:$0xf]
    %v194 = vld [vmem:[%s0 + $0x288] sm:$0xf]
    %v195 = vld [vmem:[%s0 + $0x28c] sm:$0xf]
    %v196 = vld [vmem:[%s0 + $0x290] sm:$0xf]
    %v197 = vld [vmem:[%s0 + $0x294] sm:$0xf]
    %v198 = vld [vmem:[%s0 + $0x298] sm:$0xf]
    %v199 = vld [vmem:[%s0 + $0x29c] sm:$0xf]
    %v200 = vld [vmem:[%s0 + $0x2a0] sm:$0xf]
    %v201 = vld [vmem:[%s0 + $0x2a4] sm:$0xf]
    %v202 = vld [vmem:[%s0 + $0x2a8] sm:$0xf]
    %v203 = vld [vmem:[%s0 + $0x2ac] sm:$0xf]
    %v204 = vld [vmem:[%s0 + $0x2b0] sm:$0xf]
    %v205 = vld [vmem:[%s0 + $0x2b4] sm:$0xf]
    %v206 = vld [vmem:[%s0 + $0x2b8] sm:$0xf]
    %v207 = vld [vmem:[%s0 + $0x2bc] sm:$0xf]
    %v208 = vld [vmem:[%s0 + $0x2c0] sm:$0xf]
    %v209 = vld [vmem:[%s0 + $0x2c4] sm:$0xf]
    %v210 = vld [vmem:[%s0 + $0x2c8] sm:$0xf]
    %v211 = vld [vmem:[%s0 + $0x2cc] sm:$0xf]
    %v212 = vld [vmem:[%s0 + $0x2d0] sm:$0xf]
    %v213 = vld [vmem:[%s0 + $0x2d4] sm:$0xf]
    %v214 = vld [vmem:[%s0 + $0x2d8] sm:$0xf]
    %v215 = vld [vmem:[%s0 + $0x2dc] sm:$0xf]
    %v216 = vld [vmem:[%s0 + $0x2e0] sm:$0xf]
    %v217 = vld [vmem:[%s0 + $0x2e4] sm:$0xf]
    %v218 = vld [vmem:[%s0 + $0x2e8] sm:$0xf]
    %v219 = vld [vmem:[%s0 + $0x2ec] sm:$0xf]
    %v220 = vld [vmem:[%s0 + $0x2f0] sm:$0xf]
    %v221 = vld [vmem:[%s0 + $0x2f4] sm:$0xf]
    %v222 = vld [vmem:[%s0 + $0x2f8] sm:$0xf]
    %v223 = vld [vmem:[%s0 + $0x2fc] sm:$0xf]
    %v224 = vld [vmem:[%s0 + $0x300] sm:$0xf]
    %v225 = vld [vmem:[%s0 + $0x304] sm:$0xf]
    %v226 = vld [vmem:[%s0 + $0x308] sm:$0xf]
    %v227 = vld [vmem:[%s0 + $0x30c] sm:$0xf]
    %v228 = vld [vmem:[%s0 + $0x310] sm:$0xf]
    %v229 = vld [vmem:[%s0 + $0x314] sm:$0xf]
    %v230 = vld [vmem:[%s0 + $0x318] sm:$0xf]
    %v231 = vld [vmem:[%s0 + $0x31c] sm:$0xf]
    %v232 = vld [vmem:[%s0 + $0x320] sm:$0xf]
    %v233 = vld [vmem:[%s0 + $0x324] sm:$0xf]
    %v234 = vld [vmem:[%s0 + $0x328] sm:$0xf]
    %v235 = vld [vmem:[%s0 + $0x32c] sm:$0xf]
    %v236 = vld [vmem:[%s0 + $0x330] sm:$0xf]
    %v237 = vld [vmem:[%s0 + $0x334] sm:$0xf]
    %v238 = vld [vmem:[%s0 + $0x338] sm:$0xf]
    %v239 = vld [vmem:[%s0 + $0x33c] sm:$0xf]
    %v240 = vld [vmem:[%s0 + $0x340] sm:$0xf]
    %v241 = vld [vmem:[%s0 + $0x344] sm:$0xf]
    %v242 = vld [vmem:[%s0 + $0x348] sm:$0xf]
    %v243 = vld [vmem:[%s0 + $0x34c] sm:$0xf]
    %v244 = vld [vmem:[%s0 + $0x350] sm:$0xf]
    %v245 = vld [vmem:[%s0 + $0x354] sm:$0xf]
    %v246 = vld [vmem:[%s0 + $0x358] sm:$0xf]
    %v247 = vld [vmem:[%s0 + $0x35c] sm:$0xf]
    %v248 = vld [vmem:[%s0 + $0x360] sm:$0xf]
    %v249 = vld [vmem:[%s0 + $0x364] sm:$0xf]
    %v250 = vld [vmem:[%s0 + $0x368] sm:$0xf]
    %v251 = vld [vmem:[%s0 + $0x36c] sm:$0xf]
    %v252 = vld [vmem:[%s0 + $0x370] sm:$0xf]
    %v253 = vld [vmem:[%s0 + $0x374] sm:$0xf]
    %v254 = vld [vmem:[%s0 + $0x378] sm:$0xf]
    %v255 = vld [vmem:[%s0 + $0x37c] sm:$0xf]
    %v256 = vld [vmem:[%s0 + $0x380] sm:$0xf]
    %v257 = vld [vmem:[%s0 + $0x384] sm:$0xf]
    %v258 = vld [vmem:[%s0 + $0x388] sm:$0xf]
    %v259 = vld [vmem:[%s0 + $0x38c] sm:$0xf]
    %v260 = vld [vmem:[%s0 + $0x390] sm:$0xf]
    %v261 = vld [vmem:[%s0 + $0x394] sm:$0xf]
    %v262 = vld [vmem:[%s0 + $0x398] sm:$0xf]
    %v263 = vld [vmem:[%s0 + $0x39c] sm:$0xf]
    %v264 = vld [vmem:[%s0 + $0x3a0] sm:$0xf]
    %v265 = vld [vmem:[%s0 + $0x3a4] sm:$0xf]
    %v266 = vld [vmem:[%s0 + $0x3a8] sm:$0xf]
    %v267 = vld [vmem:[%s0 + $0x3ac] sm:$0xf]
    %v268 = vld [vmem:[%s0 + $0x3b0] sm:$0xf]
    %v269 = vld [vmem:[%s0 + $0x3b4] sm:$0xf]
    %v270 = vld [vmem:[%s0 + $0x3b8] sm:$0xf]
    %v271 = vld [vmem:[%s0 + $0x3bc] sm:$0xf]
    %v272 = vld [vmem:[%s0 + $0x3c0] sm:$0xf]
    %v273 = vld [vmem:[%s0 + $0x3c4] sm:$0xf]
    %v274 = vld [vmem:[%s0 + $0x3c8] sm:$0xf]
    %v275 = vld [vmem:[%s0 + $0x3cc] sm:$0xf]
    %v276 = vld [vmem:[%s0 + $0x3d0] sm:$0xf]
    %v277 = vld [vmem:[%s0 + $0x3d4] sm:$0xf]
    %v278 = vld [vmem:[%s0 + $0x3d8] sm:$0xf]
    %v279 = vld [vmem:[%s0 + $0x3dc] sm:$0xf]
    %v280 = vld [vmem:[%s0 + $0x3e0] sm:$0xf]
    %v281 = vld [vmem:[%s0 + $0x3e4] sm:$0xf]
    %v282 = vld [vmem:[%s0 + $0x3e8] sm:$0xf]
    %v283 = vld [vmem:[%s0 + $0x3ec] sm:$0xf]
    %v284 = vld [vmem:[%s0 + $0x3f0] sm:$0xf]
    %v285 = vld [vmem:[%s0 + $0x3f4] sm:$0xf]
    %v286 = vld [vmem:[%s0 + $0x3f8] sm:$0xf]
    %v287 = vld [vmem:[%s0 + $0x3fc] sm:$0xf]
    %v288 = vld [vmem:[%s2] sm:$0xf]
    %v289 = vld [vmem:[%s2 + $0x4] sm:$0xf]
    %v290 = vld [vmem:[%s2 + $0x8] sm:$0xf]
    %v291 = vld [vmem:[%s2 + $0xc] sm:$0xf]
    %v548 = vunpack.c.l.b16 %v32
    %v549 = vunpack.c.l.b16 %v33
    %v550 = vunpack.c.l.b16 %v34
    %v551 = vunpack.c.l.b16 %v35
    %v552 = vunpack.c.l.b16 %v36
    %v553 = vunpack.c.l.b16 %v37
    %v554 = vunpack.c.l.b16 %v38
    %v555 = vunpack.c.l.b16 %v39
    %v556 = vunpack.c.l.b16 %v40
    %v557 = vunpack.c.l.b16 %v41
    %v558 = vunpack.c.l.b16 %v42
    %v559 = vunpack.c.l.b16 %v43
    %v560 = vunpack.c.l.b16 %v44
    %v561 = vunpack.c.l.b16 %v45
    %v562 = vunpack.c.l.b16 %v46
    %v563 = vunpack.c.l.b16 %v47
    %v564 = vunpack.c.l.b16 %v48
    %v565 = vunpack.c.l.b16 %v49
    %v566 = vunpack.c.l.b16 %v50
    %v567 = vunpack.c.l.b16 %v51
    %v568 = vunpack.c.l.b16 %v52
    %v569 = vunpack.c.l.b16 %v53
    %v570 = vunpack.c.l.b16 %v54
    %v571 = vunpack.c.l.b16 %v55
    %v572 = vunpack.c.l.b16 %v56
    %v573 = vunpack.c.l.b16 %v57
    %v574 = vunpack.c.l.b16 %v58
    %v575 = vunpack.c.l.b16 %v59
    %v576 = vunpack.c.l.b16 %v60
    %v577 = vunpack.c.l.b16 %v61
    %v578 = vunpack.c.l.b16 %v62
    %v579 = vunpack.c.l.b16 %v63
    %v580 = vunpack.c.l.b16 %v64
    %v581 = vunpack.c.l.b16 %v65
    %v582 = vunpack.c.l.b16 %v66
    %v583 = vunpack.c.l.b16 %v67
    %v584 = vunpack.c.l.b16 %v68
    %v585 = vunpack.c.l.b16 %v69
    %v586 = vunpack.c.l.b16 %v70
    %v587 = vunpack.c.l.b16 %v71
    %v588 = vunpack.c.l.b16 %v72
    %v589 = vunpack.c.l.b16 %v73
    %v590 = vunpack.c.l.b16 %v74
    %v591 = vunpack.c.l.b16 %v75
    %v592 = vunpack.c.l.b16 %v76
    %v593 = vunpack.c.l.b16 %v77
    %v594 = vunpack.c.l.b16 %v78
    %v595 = vunpack.c.l.b16 %v79
    %v596 = vunpack.c.l.b16 %v80
    %v597 = vunpack.c.l.b16 %v81
    %v598 = vunpack.c.l.b16 %v82
    %v599 = vunpack.c.l.b16 %v83
    %v600 = vunpack.c.l.b16 %v84
    %v601 = vunpack.c.l.b16 %v85
    %v602 = vunpack.c.l.b16 %v86
    %v603 = vunpack.c.l.b16 %v87
    %v604 = vunpack.c.l.b16 %v88
    %v605 = vunpack.c.l.b16 %v89
    %v606 = vunpack.c.l.b16 %v90
    %v607 = vunpack.c.l.b16 %v91
    %v608 = vunpack.c.l.b16 %v92
    %v609 = vunpack.c.l.b16 %v93
    %v610 = vunpack.c.l.b16 %v94
    %v611 = vunpack.c.l.b16 %v95
    %v612 = vunpack.c.l.b16 %v96
    %v613 = vunpack.c.l.b16 %v97
    %v614 = vunpack.c.l.b16 %v98
    %v615 = vunpack.c.l.b16 %v99
    %v616 = vunpack.c.l.b16 %v100
    %v617 = vunpack.c.l.b16 %v101
    %v618 = vunpack.c.l.b16 %v102
    %v619 = vunpack.c.l.b16 %v103
    %v620 = vunpack.c.l.b16 %v104
    %v621 = vunpack.c.l.b16 %v105
    %v622 = vunpack.c.l.b16 %v106
    %v623 = vunpack.c.l.b16 %v107
    %v624 = vunpack.c.l.b16 %v108
    %v625 = vunpack.c.l.b16 %v109
    %v626 = vunpack.c.l.b16 %v110
    %v627 = vunpack.c.l.b16 %v111
    %v628 = vunpack.c.l.b16 %v112
    %v629 = vunpack.c.l.b16 %v113
    %v630 = vunpack.c.l.b16 %v114
    %v631 = vunpack.c.l.b16 %v115
    %v632 = vunpack.c.l.b16 %v116
    %v633 = vunpack.c.l.b16 %v117
    %v634 = vunpack.c.l.b16 %v118
    %v635 = vunpack.c.l.b16 %v119
    %v636 = vunpack.c.l.b16 %v120
    %v637 = vunpack.c.l.b16 %v121
    %v638 = vunpack.c.l.b16 %v122
    %v639 = vunpack.c.l.b16 %v123
    %v640 = vunpack.c.l.b16 %v124
    %v641 = vunpack.c.l.b16 %v125
    %v642 = vunpack.c.l.b16 %v126
    %v643 = vunpack.c.l.b16 %v127
    %v644 = vunpack.c.l.b16 %v128
    %v645 = vunpack.c.l.b16 %v129
    %v646 = vunpack.c.l.b16 %v130
    %v647 = vunpack.c.l.b16 %v131
    %v648 = vunpack.c.l.b16 %v132
    %v649 = vunpack.c.l.b16 %v133
    %v650 = vunpack.c.l.b16 %v134
    %v651 = vunpack.c.l.b16 %v135
    %v652 = vunpack.c.l.b16 %v136
    %v653 = vunpack.c.l.b16 %v137
    %v654 = vunpack.c.l.b16 %v138
    %v655 = vunpack.c.l.b16 %v139
    %v656 = vunpack.c.l.b16 %v140
    %v657 = vunpack.c.l.b16 %v141
    %v658 = vunpack.c.l.b16 %v142
    %v659 = vunpack.c.l.b16 %v143
    %v660 = vunpack.c.l.b16 %v144
    %v661 = vunpack.c.l.b16 %v145
    %v662 = vunpack.c.l.b16 %v146
    %v663 = vunpack.c.l.b16 %v147
    %v664 = vunpack.c.l.b16 %v148
    %v665 = vunpack.c.l.b16 %v149
    %v666 = vunpack.c.l.b16 %v150
    %v667 = vunpack.c.l.b16 %v151
    %v668 = vunpack.c.l.b16 %v152
    %v669 = vunpack.c.l.b16 %v153
    %v670 = vunpack.c.l.b16 %v154
    %v671 = vunpack.c.l.b16 %v155
    %v672 = vunpack.c.l.b16 %v156
    %v673 = vunpack.c.l.b16 %v157
    %v674 = vunpack.c.l.b16 %v158
    %v675 = vunpack.c.l.b16 %v159
    %v676 = vunpack.c.l.b16 %v160
    %v677 = vunpack.c.l.b16 %v161
    %v678 = vunpack.c.l.b16 %v162
    %v679 = vunpack.c.l.b16 %v163
    %v680 = vunpack.c.l.b16 %v164
    %v681 = vunpack.c.l.b16 %v165
    %v682 = vunpack.c.l.b16 %v166
    %v683 = vunpack.c.l.b16 %v167
    %v684 = vunpack.c.l.b16 %v168
    %v685 = vunpack.c.l.b16 %v169
    %v686 = vunpack.c.l.b16 %v170
    %v687 = vunpack.c.l.b16 %v171
    %v688 = vunpack.c.l.b16 %v172
    %v689 = vunpack.c.l.b16 %v173
    %v690 = vunpack.c.l.b16 %v174
    %v691 = vunpack.c.l.b16 %v175
    %v692 = vunpack.c.l.b16 %v176
    %v693 = vunpack.c.l.b16 %v177
    %v694 = vunpack.c.l.b16 %v178
    %v695 = vunpack.c.l.b16 %v179
    %v696 = vunpack.c.l.b16 %v180
    %v697 = vunpack.c.l.b16 %v181
    %v698 = vunpack.c.l.b16 %v182
    %v699 = vunpack.c.l.b16 %v183
    %v700 = vunpack.c.l.b16 %v184
    %v701 = vunpack.c.l.b16 %v185
    %v702 = vunpack.c.l.b16 %v186
    %v703 = vunpack.c.l.b16 %v187
    %v704 = vunpack.c.l.b16 %v188
    %v705 = vunpack.c.l.b16 %v189
    %v706 = vunpack.c.l.b16 %v190
    %v707 = vunpack.c.l.b16 %v191
    %v708 = vunpack.c.l.b16 %v192
    %v709 = vunpack.c.l.b16 %v193
    %v710 = vunpack.c.l.b16 %v194
    %v711 = vunpack.c.l.b16 %v195
    %v712 = vunpack.c.l.b16 %v196
    %v713 = vunpack.c.l.b16 %v197
    %v714 = vunpack.c.l.b16 %v198
    %v715 = vunpack.c.l.b16 %v199
    %v716 = vunpack.c.l.b16 %v200
    %v717 = vunpack.c.l.b16 %v201
    %v718 = vunpack.c.l.b16 %v202
    %v719 = vunpack.c.l.b16 %v203
    %v720 = vunpack.c.l.b16 %v204
    %v721 = vunpack.c.l.b16 %v205
    %v722 = vunpack.c.l.b16 %v206
    %v723 = vunpack.c.l.b16 %v207
    %v724 = vunpack.c.l.b16 %v208
    %v725 = vunpack.c.l.b16 %v209
    %v726 = vunpack.c.l.b16 %v210
    %v727 = vunpack.c.l.b16 %v211
    %v728 = vunpack.c.l.b16 %v212
    %v729 = vunpack.c.l.b16 %v213
    %v730 = vunpack.c.l.b16 %v214
    %v731 = vunpack.c.l.b16 %v215
    %v732 = vunpack.c.l.b16 %v216
    %v733 = vunpack.c.l.b16 %v217
    %v734 = vunpack.c.l.b16 %v218
    %v735 = vunpack.c.l.b16 %v219
    %v736 = vunpack.c.l.b16 %v220
    %v737 = vunpack.c.l.b16 %v221
    %v738 = vunpack.c.l.b16 %v222
    %v739 = vunpack.c.l.b16 %v223
    %v740 = vunpack.c.l.b16 %v224
    %v741 = vunpack.c.l.b16 %v225
    %v742 = vunpack.c.l.b16 %v226
    %v743 = vunpack.c.l.b16 %v227
    %v744 = vunpack.c.l.b16 %v228
    %v745 = vunpack.c.l.b16 %v229
    %v746 = vunpack.c.l.b16 %v230
    %v747 = vunpack.c.l.b16 %v231
    %v748 = vunpack.c.l.b16 %v232
    %v749 = vunpack.c.l.b16 %v233
    %v750 = vunpack.c.l.b16 %v234
    %v751 = vunpack.c.l.b16 %v235
    %v752 = vunpack.c.l.b16 %v236
    %v753 = vunpack.c.l.b16 %v237
    %v754 = vunpack.c.l.b16 %v238
    %v755 = vunpack.c.l.b16 %v239
    %v756 = vunpack.c.l.b16 %v240
    %v757 = vunpack.c.l.b16 %v241
    %v758 = vunpack.c.l.b16 %v242
    %v759 = vunpack.c.l.b16 %v243
    %v760 = vunpack.c.l.b16 %v244
    %v761 = vunpack.c.l.b16 %v245
    %v762 = vunpack.c.l.b16 %v246
    %v763 = vunpack.c.l.b16 %v247
    %v764 = vunpack.c.l.b16 %v248
    %v765 = vunpack.c.l.b16 %v249
    %v766 = vunpack.c.l.b16 %v250
    %v767 = vunpack.c.l.b16 %v251
    %v768 = vunpack.c.l.b16 %v252
    %v769 = vunpack.c.l.b16 %v253
    %v770 = vunpack.c.l.b16 %v254
    %v771 = vunpack.c.l.b16 %v255
    %v772 = vunpack.c.l.b16 %v256
    %v773 = vunpack.c.l.b16 %v257
    %v774 = vunpack.c.l.b16 %v258
    %v775 = vunpack.c.l.b16 %v259
    %v776 = vunpack.c.l.b16 %v260
    %v777 = vunpack.c.l.b16 %v261
    %v778 = vunpack.c.l.b16 %v262
    %v779 = vunpack.c.l.b16 %v263
    %v780 = vunpack.c.l.b16 %v264
    %v781 = vunpack.c.l.b16 %v265
    %v782 = vunpack.c.l.b16 %v266
    %v783 = vunpack.c.l.b16 %v267
    %v784 = vunpack.c.l.b16 %v268
    %v785 = vunpack.c.l.b16 %v269
    %v786 = vunpack.c.l.b16 %v270
    %v787 = vunpack.c.l.b16 %v271
    %v788 = vunpack.c.l.b16 %v272
    %v789 = vunpack.c.l.b16 %v273
    %v790 = vunpack.c.l.b16 %v274
    %v791 = vunpack.c.l.b16 %v275
    %v792 = vunpack.c.l.b16 %v276
    %v793 = vunpack.c.l.b16 %v277
    %v794 = vunpack.c.l.b16 %v278
    %v795 = vunpack.c.l.b16 %v279
    %v796 = vunpack.c.l.b16 %v280
    %v797 = vunpack.c.l.b16 %v281
    %v798 = vunpack.c.l.b16 %v282
    %v799 = vunpack.c.l.b16 %v283
    %v800 = vunpack.c.l.b16 %v284
    %v801 = vunpack.c.l.b16 %v285
    %v802 = vunpack.c.l.b16 %v286
    %v803 = vunpack.c.l.b16 %v287
    %v804 = vpack.c.b16 %v549, %v548
    %v805 = vpack.c.b16 %v551, %v550
    %v806 = vpack.c.b16 %v553, %v552
    %v807 = vpack.c.b16 %v555, %v554
    %v808 = vpack.c.b16 %v557, %v556
    %v809 = vpack.c.b16 %v559, %v558
    %v810 = vpack.c.b16 %v561, %v560
    %v811 = vpack.c.b16 %v563, %v562
    %v812 = vpack.c.b16 %v565, %v564
    %v813 = vpack.c.b16 %v567, %v566
    %v814 = vpack.c.b16 %v569, %v568
    %v815 = vpack.c.b16 %v571, %v570
    %v816 = vpack.c.b16 %v573, %v572
    %v817 = vpack.c.b16 %v575, %v574
    %v818 = vpack.c.b16 %v577, %v576
    %v819 = vpack.c.b16 %v579, %v578
    %v820 = vpack.c.b16 %v581, %v580
    %v821 = vpack.c.b16 %v583, %v582
    %v822 = vpack.c.b16 %v585, %v584
    %v823 = vpack.c.b16 %v587, %v586
    %v824 = vpack.c.b16 %v589, %v588
    %v825 = vpack.c.b16 %v591, %v590
    %v826 = vpack.c.b16 %v593, %v592
    %v827 = vpack.c.b16 %v595, %v594
    %v828 = vpack.c.b16 %v597, %v596
    %v829 = vpack.c.b16 %v599, %v598
    %v830 = vpack.c.b16 %v601, %v600
    %v831 = vpack.c.b16 %v603, %v602
    %v832 = vpack.c.b16 %v605, %v604
    %v833 = vpack.c.b16 %v607, %v606
    %v834 = vpack.c.b16 %v609, %v608
    %v835 = vpack.c.b16 %v611, %v610
    %v836 = vpack.c.b16 %v613, %v612
    %v837 = vpack.c.b16 %v615, %v614
    %v838 = vpack.c.b16 %v617, %v616
    %v839 = vpack.c.b16 %v619, %v618
    %v840 = vpack.c.b16 %v621, %v620
    %v841 = vpack.c.b16 %v623, %v622
    %v842 = vpack.c.b16 %v625, %v624
    %v843 = vpack.c.b16 %v627, %v626
    %v844 = vpack.c.b16 %v629, %v628
    %v845 = vpack.c.b16 %v631, %v630
    %v846 = vpack.c.b16 %v633, %v632
    %v847 = vpack.c.b16 %v635, %v634
    %v848 = vpack.c.b16 %v637, %v636
    %v849 = vpack.c.b16 %v639, %v638
    %v850 = vpack.c.b16 %v641, %v640
    %v851 = vpack.c.b16 %v643, %v642
    %v852 = vpack.c.b16 %v645, %v644
    %v853 = vpack.c.b16 %v647, %v646
    %v854 = vpack.c.b16 %v649, %v648
    %v855 = vpack.c.b16 %v651, %v650
    %v856 = vpack.c.b16 %v653, %v652
    %v857 = vpack.c.b16 %v655, %v654
    %v858 = vpack.c.b16 %v657, %v656
    %v859 = vpack.c.b16 %v659, %v658
    %v860 = vpack.c.b16 %v661, %v660
    %v861 = vpack.c.b16 %v663, %v662
    %v862 = vpack.c.b16 %v665, %v664
    %v863 = vpack.c.b16 %v667, %v666
    %v864 = vpack.c.b16 %v669, %v668
    %v865 = vpack.c.b16 %v671, %v670
    %v866 = vpack.c.b16 %v673, %v672
    %v867 = vpack.c.b16 %v675, %v674
    %v868 = vpack.c.b16 %v677, %v676
    %v869 = vpack.c.b16 %v679, %v678
    %v870 = vpack.c.b16 %v681, %v680
    %v871 = vpack.c.b16 %v683, %v682
    %v872 = vpack.c.b16 %v685, %v684
    %v873 = vpack.c.b16 %v687, %v686
    %v874 = vpack.c.b16 %v689, %v688
    %v875 = vpack.c.b16 %v691, %v690
    %v876 = vpack.c.b16 %v693, %v692
    %v877 = vpack.c.b16 %v695, %v694
    %v878 = vpack.c.b16 %v697, %v696
    %v879 = vpack.c.b16 %v699, %v698
    %v880 = vpack.c.b16 %v701, %v700
    %v881 = vpack.c.b16 %v703, %v702
    %v882 = vpack.c.b16 %v705, %v704
    %v883 = vpack.c.b16 %v707, %v706
    %v884 = vpack.c.b16 %v709, %v708
    %v885 = vpack.c.b16 %v711, %v710
    %v886 = vpack.c.b16 %v713, %v712
    %v887 = vpack.c.b16 %v715, %v714
    %v888 = vpack.c.b16 %v717, %v716
    %v889 = vpack.c.b16 %v719, %v718
    %v890 = vpack.c.b16 %v721, %v720
    %v891 = vpack.c.b16 %v723, %v722
    %v892 = vpack.c.b16 %v725, %v724
    %v893 = vpack.c.b16 %v727, %v726
    %v894 = vpack.c.b16 %v729, %v728
    %v895 = vpack.c.b16 %v731, %v730
    %v896 = vpack.c.b16 %v733, %v732
    %v897 = vpack.c.b16 %v735, %v734
    %v898 = vpack.c.b16 %v737, %v736
    %v899 = vpack.c.b16 %v739, %v738
    %v900 = vpack.c.b16 %v741, %v740
    %v901 = vpack.c.b16 %v743, %v742
    %v902 = vpack.c.b16 %v745, %v744
    %v903 = vpack.c.b16 %v747, %v746
    %v904 = vpack.c.b16 %v749, %v748
    %v905 = vpack.c.b16 %v751, %v750
    %v906 = vpack.c.b16 %v753, %v752
    %v907 = vpack.c.b16 %v755, %v754
    %v908 = vpack.c.b16 %v757, %v756
    %v909 = vpack.c.b16 %v759, %v758
    %v910 = vpack.c.b16 %v761, %v760
    %v911 = vpack.c.b16 %v763, %v762
    %v912 = vpack.c.b16 %v765, %v764
    %v913 = vpack.c.b16 %v767, %v766
    %v914 = vpack.c.b16 %v769, %v768
    %v915 = vpack.c.b16 %v771, %v770
    %v916 = vpack.c.b16 %v773, %v772
    %v917 = vpack.c.b16 %v775, %v774
    %v918 = vpack.c.b16 %v777, %v776
    %v919 = vpack.c.b16 %v779, %v778
    %v920 = vpack.c.b16 %v781, %v780
    %v921 = vpack.c.b16 %v783, %v782
    %v922 = vpack.c.b16 %v785, %v784
    %v923 = vpack.c.b16 %v787, %v786
    %v924 = vpack.c.b16 %v789, %v788
    %v925 = vpack.c.b16 %v791, %v790
    %v926 = vpack.c.b16 %v793, %v792
    %v927 = vpack.c.b16 %v795, %v794
    %v928 = vpack.c.b16 %v797, %v796
    %v929 = vpack.c.b16 %v799, %v798
    %v930 = vpack.c.b16 %v801, %v800
    %v931 = vpack.c.b16 %v803, %v802
    %v936 = vunpack.c.l.b16 %v288
    %v937 = vunpack.c.l.b16 %v289
    %v938 = vunpack.c.l.b16 %v290
    %v939 = vunpack.c.l.b16 %v291
    %v940 = vpack.c.b16 %v937, %v936
    %v941 = vpack.c.b16 %v939, %v938
    %vm944 = vcmask 261120
    %v946 = vsel %vm944, %v804, 0
    %v949 = vsel %vm944, %v805, 0
    %v952 = vsel %vm944, %v806, 0
    %v955 = vsel %vm944, %v807, 0
    %v958 = vsel %vm944, %v808, 0
    %v961 = vsel %vm944, %v809, 0
    %v964 = vsel %vm944, %v810, 0
    %v967 = vsel %vm944, %v811, 0
    %v970 = vsel %vm944, %v812, 0
    %v973 = vsel %vm944, %v813, 0
    %v976 = vsel %vm944, %v814, 0
    %v979 = vsel %vm944, %v815, 0
    %v982 = vsel %vm944, %v816, 0
    %v985 = vsel %vm944, %v817, 0
    %v988 = vsel %vm944, %v818, 0
    %v991 = vsel %vm944, %v819, 0
    %v994 = vsel %vm944, %v820, 0
    %v997 = vsel %vm944, %v821, 0
    %v1000 = vsel %vm944, %v822, 0
    %v1003 = vsel %vm944, %v823, 0
    %v1006 = vsel %vm944, %v824, 0
    %v1009 = vsel %vm944, %v825, 0
    %v1012 = vsel %vm944, %v826, 0
    %v1015 = vsel %vm944, %v827, 0
    %v1018 = vsel %vm944, %v828, 0
    %v1021 = vsel %vm944, %v829, 0
    %v1024 = vsel %vm944, %v830, 0
    %v1027 = vsel %vm944, %v831, 0
    %v1030 = vsel %vm944, %v832, 0
    %v1033 = vsel %vm944, %v833, 0
    %v1036 = vsel %vm944, %v834, 0
    %v1039 = vsel %vm944, %v835, 0
    %v1042 = vsel %vm944, %v836, 0
    %v1045 = vsel %vm944, %v837, 0
    %v1048 = vsel %vm944, %v838, 0
    %v1051 = vsel %vm944, %v839, 0
    %v1054 = vsel %vm944, %v840, 0
    %v1057 = vsel %vm944, %v841, 0
    %v1060 = vsel %vm944, %v842, 0
    %v1063 = vsel %vm944, %v843, 0
    %v1066 = vsel %vm944, %v844, 0
    %v1069 = vsel %vm944, %v845, 0
    %v1072 = vsel %vm944, %v846, 0
    %v1075 = vsel %vm944, %v847, 0
    %v1078 = vsel %vm944, %v848, 0
    %v1081 = vsel %vm944, %v849, 0
    %v1084 = vsel %vm944, %v850, 0
    %v1087 = vsel %vm944, %v851, 0
    %v1090 = vsel %vm944, %v852, 0
    %v1093 = vsel %vm944, %v853, 0
    %v1096 = vsel %vm944, %v854, 0
    %v1099 = vsel %vm944, %v855, 0
    %v1102 = vsel %vm944, %v856, 0
    %v1105 = vsel %vm944, %v857, 0
    %v1108 = vsel %vm944, %v858, 0
    %v1111 = vsel %vm944, %v859, 0
    %v1114 = vsel %vm944, %v860, 0
    %v1117 = vsel %vm944, %v861, 0
    %v1120 = vsel %vm944, %v862, 0
    %v1123 = vsel %vm944, %v863, 0
    %v1126 = vsel %vm944, %v864, 0
    %v1129 = vsel %vm944, %v865, 0
    %v1132 = vsel %vm944, %v866, 0
    %v1135 = vsel %vm944, %v867, 0
    %v1138 = vsel %vm944, %v868, 0
    %v1141 = vsel %vm944, %v869, 0
    %v1144 = vsel %vm944, %v870, 0
    %v1147 = vsel %vm944, %v871, 0
    %v1150 = vsel %vm944, %v872, 0
    %v1153 = vsel %vm944, %v873, 0
    %v1156 = vsel %vm944, %v874, 0
    %v1159 = vsel %vm944, %v875, 0
    %v1162 = vsel %vm944, %v876, 0
    %v1165 = vsel %vm944, %v877, 0
    %v1168 = vsel %vm944, %v878, 0
    %v1171 = vsel %vm944, %v879, 0
    %v1174 = vsel %vm944, %v880, 0
    %v1177 = vsel %vm944, %v881, 0
    %v1180 = vsel %vm944, %v882, 0
    %v1183 = vsel %vm944, %v883, 0
    %v1186 = vsel %vm944, %v884, 0
    %v1189 = vsel %vm944, %v885, 0
    %v1192 = vsel %vm944, %v886, 0
    %v1195 = vsel %vm944, %v887, 0
    %v1198 = vsel %vm944, %v888, 0
    %v1201 = vsel %vm944, %v889, 0
    %v1204 = vsel %vm944, %v890, 0
    %v1207 = vsel %vm944, %v891, 0
    %v1210 = vsel %vm944, %v892, 0
    %v1213 = vsel %vm944, %v893, 0
    %v1216 = vsel %vm944, %v894, 0
    %v1219 = vsel %vm944, %v895, 0
    %v1222 = vsel %vm944, %v896, 0
    %v1225 = vsel %vm944, %v897, 0
    %v1228 = vsel %vm944, %v898, 0
    %v1231 = vsel %vm944, %v899, 0
    %v1234 = vsel %vm944, %v900, 0
    %v1237 = vsel %vm944, %v901, 0
    %v1240 = vsel %vm944, %v902, 0
    %v1243 = vsel %vm944, %v903, 0
    %v1246 = vsel %vm944, %v904, 0
    %v1249 = vsel %vm944, %v905, 0
    %v1252 = vsel %vm944, %v906, 0
    %v1255 = vsel %vm944, %v907, 0
    %v1258 = vsel %vm944, %v908, 0
    %v1261 = vsel %vm944, %v909, 0
    %v1264 = vsel %vm944, %v910, 0
    %v1267 = vsel %vm944, %v911, 0
    %v1270 = vsel %vm944, %v912, 0
    %v1273 = vsel %vm944, %v913, 0
    %v1276 = vsel %vm944, %v914, 0
    %v1279 = vsel %vm944, %v915, 0
    %v1282 = vsel %vm944, %v916, 0
    %v1285 = vsel %vm944, %v917, 0
    %v1288 = vsel %vm944, %v918, 0
    %v1291 = vsel %vm944, %v919, 0
    %v1294 = vsel %vm944, %v920, 0
    %v1297 = vsel %vm944, %v921, 0
    %v1300 = vsel %vm944, %v922, 0
    %v1303 = vsel %vm944, %v923, 0
    %v1306 = vsel %vm944, %v924, 0
    %v1309 = vsel %vm944, %v925, 0
    %v1312 = vsel %vm944, %v926, 0
    %v1315 = vsel %vm944, %v927, 0
    %v1318 = vsel %vm944, %v928, 0
    %v1321 = vsel %vm944, %v929, 0
    %v1324 = vsel %vm944, %v930, 0
    %v1327 = vsel %vm944, %v931, 0
    %1329 = vmatpush.bf16.msra.mxu0 0
    %1330 = vmatpush.bf16.msra.mxu0 0
    %1331 = vmatpush.bf16.msra.mxu0 0
    %1332 = vmatpush.bf16.msra.mxu0 0
    %1333 = vmatpush.bf16.msra.mxu0 0
    %1334 = vmatpush.bf16.msra.mxu0 0
    %1335 = vmatpush.bf16.msra.mxu0 %v941
    %1336 = vmatpush.bf16.msra.mxu0 %v940
    %1337 = vmatmul.bf16.gmra.mxu0 %v946
    %v1338 = vpop.f32.mrf.mxu0
    %v1339 = vadd.f32 0.0, %v1338
    %v1340 = vpop.f32.mrf.mxu0
    %v1341 = vadd.f32 0.0, %v1340
    %1342 = vmatmul.bf16.gmra.mxu0 %v949
    %v1343 = vpop.f32.mrf.mxu0
    %v1344 = vadd.f32 0.0, %v1343
    %v1345 = vpop.f32.mrf.mxu0
    %v1346 = vadd.f32 0.0, %v1345
    %1347 = vmatmul.bf16.gmra.mxu0 %v952
    %v1348 = vpop.f32.mrf.mxu0
    %v1349 = vadd.f32 0.0, %v1348
    %v1350 = vpop.f32.mrf.mxu0
    %v1351 = vadd.f32 0.0, %v1350
    %1352 = vmatmul.bf16.gmra.mxu0 %v955
    %v1353 = vpop.f32.mrf.mxu0
    %v1354 = vadd.f32 0.0, %v1353
    %v1355 = vpop.f32.mrf.mxu0
    %v1356 = vadd.f32 0.0, %v1355
    %1357 = vmatmul.bf16.gmra.mxu0 %v958
    %v1358 = vpop.f32.mrf.mxu0
    %v1359 = vadd.f32 0.0, %v1358
    %v1360 = vpop.f32.mrf.mxu0
    %v1361 = vadd.f32 0.0, %v1360
    %1362 = vmatmul.bf16.gmra.mxu0 %v961
    %v1363 = vpop.f32.mrf.mxu0
    %v1364 = vadd.f32 0.0, %v1363
    %v1365 = vpop.f32.mrf.mxu0
    %v1366 = vadd.f32 0.0, %v1365
    %1367 = vmatmul.bf16.gmra.mxu0 %v964
    %v1368 = vpop.f32.mrf.mxu0
    %v1369 = vadd.f32 0.0, %v1368
    %v1370 = vpop.f32.mrf.mxu0
    %v1371 = vadd.f32 0.0, %v1370
    %1372 = vmatmul.bf16.gmra.mxu0 %v967
    %v1373 = vpop.f32.mrf.mxu0
    %v1374 = vadd.f32 0.0, %v1373
    %v1375 = vpop.f32.mrf.mxu0
    %v1376 = vadd.f32 0.0, %v1375
    %1377 = vmatmul.bf16.gmra.mxu0 %v970
    %v1378 = vpop.f32.mrf.mxu0
    %v1379 = vadd.f32 0.0, %v1378
    %v1380 = vpop.f32.mrf.mxu0
    %v1381 = vadd.f32 0.0, %v1380
    %1382 = vmatmul.bf16.gmra.mxu0 %v973
    %v1383 = vpop.f32.mrf.mxu0
    %v1384 = vadd.f32 0.0, %v1383
    %v1385 = vpop.f32.mrf.mxu0
    %v1386 = vadd.f32 0.0, %v1385
    %1387 = vmatmul.bf16.gmra.mxu0 %v976
    %v1388 = vpop.f32.mrf.mxu0
    %v1389 = vadd.f32 0.0, %v1388
    %v1390 = vpop.f32.mrf.mxu0
    %v1391 = vadd.f32 0.0, %v1390
    %1392 = vmatmul.bf16.gmra.mxu0 %v979
    %v1393 = vpop.f32.mrf.mxu0
    %v1394 = vadd.f32 0.0, %v1393
    %v1395 = vpop.f32.mrf.mxu0
    %v1396 = vadd.f32 0.0, %v1395
    %1397 = vmatmul.bf16.gmra.mxu0 %v982
    %v1398 = vpop.f32.mrf.mxu0
    %v1399 = vadd.f32 0.0, %v1398
    %v1400 = vpop.f32.mrf.mxu0
    %v1401 = vadd.f32 0.0, %v1400
    %1402 = vmatmul.bf16.gmra.mxu0 %v985
    %v1403 = vpop.f32.mrf.mxu0
    %v1404 = vadd.f32 0.0, %v1403
    %v1405 = vpop.f32.mrf.mxu0
    %v1406 = vadd.f32 0.0, %v1405
    %1407 = vmatmul.bf16.gmra.mxu0 %v988
    %v1408 = vpop.f32.mrf.mxu0
    %v1409 = vadd.f32 0.0, %v1408
    %v1410 = vpop.f32.mrf.mxu0
    %v1411 = vadd.f32 0.0, %v1410
    %1412 = vmatmul.bf16.gmra.mxu0 %v991
    %v1413 = vpop.f32.mrf.mxu0
    %v1414 = vadd.f32 0.0, %v1413
    %v1415 = vpop.f32.mrf.mxu0
    %v1416 = vadd.f32 0.0, %v1415
    %1417 = vmatmul.bf16.gmra.mxu0 %v994
    %v1418 = vpop.f32.mrf.mxu0
    %v1419 = vadd.f32 0.0, %v1418
    %v1420 = vpop.f32.mrf.mxu0
    %v1421 = vadd.f32 0.0, %v1420
    %1422 = vmatmul.bf16.gmra.mxu0 %v997
    %v1423 = vpop.f32.mrf.mxu0
    %v1424 = vadd.f32 0.0, %v1423
    %v1425 = vpop.f32.mrf.mxu0
    %v1426 = vadd.f32 0.0, %v1425
    %1427 = vmatmul.bf16.gmra.mxu0 %v1000
    %v1428 = vpop.f32.mrf.mxu0
    %v1429 = vadd.f32 0.0, %v1428
    %v1430 = vpop.f32.mrf.mxu0
    %v1431 = vadd.f32 0.0, %v1430
    %1432 = vmatmul.bf16.gmra.mxu0 %v1003
    %v1433 = vpop.f32.mrf.mxu0
    %v1434 = vadd.f32 0.0, %v1433
    %v1435 = vpop.f32.mrf.mxu0
    %v1436 = vadd.f32 0.0, %v1435
    %1437 = vmatmul.bf16.gmra.mxu0 %v1006
    %v1438 = vpop.f32.mrf.mxu0
    %v1439 = vadd.f32 0.0, %v1438
    %v1440 = vpop.f32.mrf.mxu0
    %v1441 = vadd.f32 0.0, %v1440
    %1442 = vmatmul.bf16.gmra.mxu0 %v1009
    %v1443 = vpop.f32.mrf.mxu0
    %v1444 = vadd.f32 0.0, %v1443
    %v1445 = vpop.f32.mrf.mxu0
    %v1446 = vadd.f32 0.0, %v1445
    %1447 = vmatmul.bf16.gmra.mxu0 %v1012
    %v1448 = vpop.f32.mrf.mxu0
    %v1449 = vadd.f32 0.0, %v1448
    %v1450 = vpop.f32.mrf.mxu0
    %v1451 = vadd.f32 0.0, %v1450
    %1452 = vmatmul.bf16.gmra.mxu0 %v1015
    %v1453 = vpop.f32.mrf.mxu0
    %v1454 = vadd.f32 0.0, %v1453
    %v1455 = vpop.f32.mrf.mxu0
    %v1456 = vadd.f32 0.0, %v1455
    %1457 = vmatmul.bf16.gmra.mxu0 %v1018
    %v1458 = vpop.f32.mrf.mxu0
    %v1459 = vadd.f32 0.0, %v1458
    %v1460 = vpop.f32.mrf.mxu0
    %v1461 = vadd.f32 0.0, %v1460
    %1462 = vmatmul.bf16.gmra.mxu0 %v1021
    %v1463 = vpop.f32.mrf.mxu0
    %v1464 = vadd.f32 0.0, %v1463
    %v1465 = vpop.f32.mrf.mxu0
    %v1466 = vadd.f32 0.0, %v1465
    %1467 = vmatmul.bf16.gmra.mxu0 %v1024
    %v1468 = vpop.f32.mrf.mxu0
    %v1469 = vadd.f32 0.0, %v1468
    %v1470 = vpop.f32.mrf.mxu0
    %v1471 = vadd.f32 0.0, %v1470
    %1472 = vmatmul.bf16.gmra.mxu0 %v1027
    %v1473 = vpop.f32.mrf.mxu0
    %v1474 = vadd.f32 0.0, %v1473
    %v1475 = vpop.f32.mrf.mxu0
    %v1476 = vadd.f32 0.0, %v1475
    %1477 = vmatmul.bf16.gmra.mxu0 %v1030
    %v1478 = vpop.f32.mrf.mxu0
    %v1479 = vadd.f32 0.0, %v1478
    %v1480 = vpop.f32.mrf.mxu0
    %v1481 = vadd.f32 0.0, %v1480
    %1482 = vmatmul.bf16.gmra.mxu0 %v1033
    %v1483 = vpop.f32.mrf.mxu0
    %v1484 = vadd.f32 0.0, %v1483
    %v1485 = vpop.f32.mrf.mxu0
    %v1486 = vadd.f32 0.0, %v1485
    %1487 = vmatmul.bf16.gmra.mxu0 %v1036
    %v1488 = vpop.f32.mrf.mxu0
    %v1489 = vadd.f32 0.0, %v1488
    %v1490 = vpop.f32.mrf.mxu0
    %v1491 = vadd.f32 0.0, %v1490
    %1492 = vmatmul.bf16.gmra.mxu0 %v1039
    %v1493 = vpop.f32.mrf.mxu0
    %v1494 = vadd.f32 0.0, %v1493
    %v1495 = vpop.f32.mrf.mxu0
    %v1496 = vadd.f32 0.0, %v1495
    %1497 = vmatmul.bf16.gmra.mxu0 %v1042
    %v1498 = vpop.f32.mrf.mxu0
    %v1499 = vadd.f32 0.0, %v1498
    %v1500 = vpop.f32.mrf.mxu0
    %v1501 = vadd.f32 0.0, %v1500
    %1502 = vmatmul.bf16.gmra.mxu0 %v1045
    %v1503 = vpop.f32.mrf.mxu0
    %v1504 = vadd.f32 0.0, %v1503
    %v1505 = vpop.f32.mrf.mxu0
    %v1506 = vadd.f32 0.0, %v1505
    %1507 = vmatmul.bf16.gmra.mxu0 %v1048
    %v1508 = vpop.f32.mrf.mxu0
    %v1509 = vadd.f32 0.0, %v1508
    %v1510 = vpop.f32.mrf.mxu0
    %v1511 = vadd.f32 0.0, %v1510
    %1512 = vmatmul.bf16.gmra.mxu0 %v1051
    %v1513 = vpop.f32.mrf.mxu0
    %v1514 = vadd.f32 0.0, %v1513
    %v1515 = vpop.f32.mrf.mxu0
    %v1516 = vadd.f32 0.0, %v1515
    %1517 = vmatmul.bf16.gmra.mxu0 %v1054
    %v1518 = vpop.f32.mrf.mxu0
    %v1519 = vadd.f32 0.0, %v1518
    %v1520 = vpop.f32.mrf.mxu0
    %v1521 = vadd.f32 0.0, %v1520
    %1522 = vmatmul.bf16.gmra.mxu0 %v1057
    %v1523 = vpop.f32.mrf.mxu0
    %v1524 = vadd.f32 0.0, %v1523
    %v1525 = vpop.f32.mrf.mxu0
    %v1526 = vadd.f32 0.0, %v1525
    %1527 = vmatmul.bf16.gmra.mxu0 %v1060
    %v1528 = vpop.f32.mrf.mxu0
    %v1529 = vadd.f32 0.0, %v1528
    %v1530 = vpop.f32.mrf.mxu0
    %v1531 = vadd.f32 0.0, %v1530
    %1532 = vmatmul.bf16.gmra.mxu0 %v1063
    %v1533 = vpop.f32.mrf.mxu0
    %v1534 = vadd.f32 0.0, %v1533
    %v1535 = vpop.f32.mrf.mxu0
    %v1536 = vadd.f32 0.0, %v1535
    %1537 = vmatmul.bf16.gmra.mxu0 %v1066
    %v1538 = vpop.f32.mrf.mxu0
    %v1539 = vadd.f32 0.0, %v1538
    %v1540 = vpop.f32.mrf.mxu0
    %v1541 = vadd.f32 0.0, %v1540
    %1542 = vmatmul.bf16.gmra.mxu0 %v1069
    %v1543 = vpop.f32.mrf.mxu0
    %v1544 = vadd.f32 0.0, %v1543
    %v1545 = vpop.f32.mrf.mxu0
    %v1546 = vadd.f32 0.0, %v1545
    %1547 = vmatmul.bf16.gmra.mxu0 %v1072
    %v1548 = vpop.f32.mrf.mxu0
    %v1549 = vadd.f32 0.0, %v1548
    %v1550 = vpop.f32.mrf.mxu0
    %v1551 = vadd.f32 0.0, %v1550
    %1552 = vmatmul.bf16.gmra.mxu0 %v1075
    %v1553 = vpop.f32.mrf.mxu0
    %v1554 = vadd.f32 0.0, %v1553
    %v1555 = vpop.f32.mrf.mxu0
    %v1556 = vadd.f32 0.0, %v1555
    %1557 = vmatmul.bf16.gmra.mxu0 %v1078
    %v1558 = vpop.f32.mrf.mxu0
    %v1559 = vadd.f32 0.0, %v1558
    %v1560 = vpop.f32.mrf.mxu0
    %v1561 = vadd.f32 0.0, %v1560
    %1562 = vmatmul.bf16.gmra.mxu0 %v1081
    %v1563 = vpop.f32.mrf.mxu0
    %v1564 = vadd.f32 0.0, %v1563
    %v1565 = vpop.f32.mrf.mxu0
    %v1566 = vadd.f32 0.0, %v1565
    %1567 = vmatmul.bf16.gmra.mxu0 %v1084
    %v1568 = vpop.f32.mrf.mxu0
    %v1569 = vadd.f32 0.0, %v1568
    %v1570 = vpop.f32.mrf.mxu0
    %v1571 = vadd.f32 0.0, %v1570
    %1572 = vmatmul.bf16.gmra.mxu0 %v1087
    %v1573 = vpop.f32.mrf.mxu0
    %v1574 = vadd.f32 0.0, %v1573
    %v1575 = vpop.f32.mrf.mxu0
    %v1576 = vadd.f32 0.0, %v1575
    %1577 = vmatmul.bf16.gmra.mxu0 %v1090
    %v1578 = vpop.f32.mrf.mxu0
    %v1579 = vadd.f32 0.0, %v1578
    %v1580 = vpop.f32.mrf.mxu0
    %v1581 = vadd.f32 0.0, %v1580
    %1582 = vmatmul.bf16.gmra.mxu0 %v1093
    %v1583 = vpop.f32.mrf.mxu0
    %v1584 = vadd.f32 0.0, %v1583
    %v1585 = vpop.f32.mrf.mxu0
    %v1586 = vadd.f32 0.0, %v1585
    %1587 = vmatmul.bf16.gmra.mxu0 %v1096
    %v1588 = vpop.f32.mrf.mxu0
    %v1589 = vadd.f32 0.0, %v1588
    %v1590 = vpop.f32.mrf.mxu0
    %v1591 = vadd.f32 0.0, %v1590
    %1592 = vmatmul.bf16.gmra.mxu0 %v1099
    %v1593 = vpop.f32.mrf.mxu0
    %v1594 = vadd.f32 0.0, %v1593
    %v1595 = vpop.f32.mrf.mxu0
    %v1596 = vadd.f32 0.0, %v1595
    %1597 = vmatmul.bf16.gmra.mxu0 %v1102
    %v1598 = vpop.f32.mrf.mxu0
    %v1599 = vadd.f32 0.0, %v1598
    %v1600 = vpop.f32.mrf.mxu0
    %v1601 = vadd.f32 0.0, %v1600
    %1602 = vmatmul.bf16.gmra.mxu0 %v1105
    %v1603 = vpop.f32.mrf.mxu0
    %v1604 = vadd.f32 0.0, %v1603
    %v1605 = vpop.f32.mrf.mxu0
    %v1606 = vadd.f32 0.0, %v1605
    %1607 = vmatmul.bf16.gmra.mxu0 %v1108
    %v1608 = vpop.f32.mrf.mxu0
    %v1609 = vadd.f32 0.0, %v1608
    %v1610 = vpop.f32.mrf.mxu0
    %v1611 = vadd.f32 0.0, %v1610
    %1612 = vmatmul.bf16.gmra.mxu0 %v1111
    %v1613 = vpop.f32.mrf.mxu0
    %v1614 = vadd.f32 0.0, %v1613
    %v1615 = vpop.f32.mrf.mxu0
    %v1616 = vadd.f32 0.0, %v1615
    %1617 = vmatmul.bf16.gmra.mxu0 %v1114
    %v1618 = vpop.f32.mrf.mxu0
    %v1619 = vadd.f32 0.0, %v1618
    %v1620 = vpop.f32.mrf.mxu0
    %v1621 = vadd.f32 0.0, %v1620
    %1622 = vmatmul.bf16.gmra.mxu0 %v1117
    %v1623 = vpop.f32.mrf.mxu0
    %v1624 = vadd.f32 0.0, %v1623
    %v1625 = vpop.f32.mrf.mxu0
    %v1626 = vadd.f32 0.0, %v1625
    %1627 = vmatmul.bf16.gmra.mxu0 %v1120
    %v1628 = vpop.f32.mrf.mxu0
    %v1629 = vadd.f32 0.0, %v1628
    %v1630 = vpop.f32.mrf.mxu0
    %v1631 = vadd.f32 0.0, %v1630
    %1632 = vmatmul.bf16.gmra.mxu0 %v1123
    %v1633 = vpop.f32.mrf.mxu0
    %v1634 = vadd.f32 0.0, %v1633
    %v1635 = vpop.f32.mrf.mxu0
    %v1636 = vadd.f32 0.0, %v1635
    %1637 = vmatmul.bf16.gmra.mxu0 %v1126
    %v1638 = vpop.f32.mrf.mxu0
    %v1639 = vadd.f32 0.0, %v1638
    %v1640 = vpop.f32.mrf.mxu0
    %v1641 = vadd.f32 0.0, %v1640
    %1642 = vmatmul.bf16.gmra.mxu0 %v1129
    %v1643 = vpop.f32.mrf.mxu0
    %v1644 = vadd.f32 0.0, %v1643
    %v1645 = vpop.f32.mrf.mxu0
    %v1646 = vadd.f32 0.0, %v1645
    %1647 = vmatmul.bf16.gmra.mxu0 %v1132
    %v1648 = vpop.f32.mrf.mxu0
    %v1649 = vadd.f32 0.0, %v1648
    %v1650 = vpop.f32.mrf.mxu0
    %v1651 = vadd.f32 0.0, %v1650
    %1652 = vmatmul.bf16.gmra.mxu0 %v1135
    %v1653 = vpop.f32.mrf.mxu0
    %v1654 = vadd.f32 0.0, %v1653
    %v1655 = vpop.f32.mrf.mxu0
    %v1656 = vadd.f32 0.0, %v1655
    %1657 = vmatmul.bf16.gmra.mxu0 %v1138
    %v1658 = vpop.f32.mrf.mxu0
    %v1659 = vadd.f32 0.0, %v1658
    %v1660 = vpop.f32.mrf.mxu0
    %v1661 = vadd.f32 0.0, %v1660
    %1662 = vmatmul.bf16.gmra.mxu0 %v1141
    %v1663 = vpop.f32.mrf.mxu0
    %v1664 = vadd.f32 0.0, %v1663
    %v1665 = vpop.f32.mrf.mxu0
    %v1666 = vadd.f32 0.0, %v1665
    %1667 = vmatmul.bf16.gmra.mxu0 %v1144
    %v1668 = vpop.f32.mrf.mxu0
    %v1669 = vadd.f32 0.0, %v1668
    %v1670 = vpop.f32.mrf.mxu0
    %v1671 = vadd.f32 0.0, %v1670
    %1672 = vmatmul.bf16.gmra.mxu0 %v1147
    %v1673 = vpop.f32.mrf.mxu0
    %v1674 = vadd.f32 0.0, %v1673
    %v1675 = vpop.f32.mrf.mxu0
    %v1676 = vadd.f32 0.0, %v1675
    %1677 = vmatmul.bf16.gmra.mxu0 %v1150
    %v1678 = vpop.f32.mrf.mxu0
    %v1679 = vadd.f32 0.0, %v1678
    %v1680 = vpop.f32.mrf.mxu0
    %v1681 = vadd.f32 0.0, %v1680
    %1682 = vmatmul.bf16.gmra.mxu0 %v1153
    %v1683 = vpop.f32.mrf.mxu0
    %v1684 = vadd.f32 0.0, %v1683
    %v1685 = vpop.f32.mrf.mxu0
    %v1686 = vadd.f32 0.0, %v1685
    %1687 = vmatmul.bf16.gmra.mxu0 %v1156
    %v1688 = vpop.f32.mrf.mxu0
    %v1689 = vadd.f32 0.0, %v1688
    %v1690 = vpop.f32.mrf.mxu0
    %v1691 = vadd.f32 0.0, %v1690
    %1692 = vmatmul.bf16.gmra.mxu0 %v1159
    %v1693 = vpop.f32.mrf.mxu0
    %v1694 = vadd.f32 0.0, %v1693
    %v1695 = vpop.f32.mrf.mxu0
    %v1696 = vadd.f32 0.0, %v1695
    %1697 = vmatmul.bf16.gmra.mxu0 %v1162
    %v1698 = vpop.f32.mrf.mxu0
    %v1699 = vadd.f32 0.0, %v1698
    %v1700 = vpop.f32.mrf.mxu0
    %v1701 = vadd.f32 0.0, %v1700
    %1702 = vmatmul.bf16.gmra.mxu0 %v1165
    %v1703 = vpop.f32.mrf.mxu0
    %v1704 = vadd.f32 0.0, %v1703
    %v1705 = vpop.f32.mrf.mxu0
    %v1706 = vadd.f32 0.0, %v1705
    %1707 = vmatmul.bf16.gmra.mxu0 %v1168
    %v1708 = vpop.f32.mrf.mxu0
    %v1709 = vadd.f32 0.0, %v1708
    %v1710 = vpop.f32.mrf.mxu0
    %v1711 = vadd.f32 0.0, %v1710
    %1712 = vmatmul.bf16.gmra.mxu0 %v1171
    %v1713 = vpop.f32.mrf.mxu0
    %v1714 = vadd.f32 0.0, %v1713
    %v1715 = vpop.f32.mrf.mxu0
    %v1716 = vadd.f32 0.0, %v1715
    %1717 = vmatmul.bf16.gmra.mxu0 %v1174
    %v1718 = vpop.f32.mrf.mxu0
    %v1719 = vadd.f32 0.0, %v1718
    %v1720 = vpop.f32.mrf.mxu0
    %v1721 = vadd.f32 0.0, %v1720
    %1722 = vmatmul.bf16.gmra.mxu0 %v1177
    %v1723 = vpop.f32.mrf.mxu0
    %v1724 = vadd.f32 0.0, %v1723
    %v1725 = vpop.f32.mrf.mxu0
    %v1726 = vadd.f32 0.0, %v1725
    %1727 = vmatmul.bf16.gmra.mxu0 %v1180
    %v1728 = vpop.f32.mrf.mxu0
    %v1729 = vadd.f32 0.0, %v1728
    %v1730 = vpop.f32.mrf.mxu0
    %v1731 = vadd.f32 0.0, %v1730
    %1732 = vmatmul.bf16.gmra.mxu0 %v1183
    %v1733 = vpop.f32.mrf.mxu0
    %v1734 = vadd.f32 0.0, %v1733
    %v1735 = vpop.f32.mrf.mxu0
    %v1736 = vadd.f32 0.0, %v1735
    %1737 = vmatmul.bf16.gmra.mxu0 %v1186
    %v1738 = vpop.f32.mrf.mxu0
    %v1739 = vadd.f32 0.0, %v1738
    %v1740 = vpop.f32.mrf.mxu0
    %v1741 = vadd.f32 0.0, %v1740
    %1742 = vmatmul.bf16.gmra.mxu0 %v1189
    %v1743 = vpop.f32.mrf.mxu0
    %v1744 = vadd.f32 0.0, %v1743
    %v1745 = vpop.f32.mrf.mxu0
    %v1746 = vadd.f32 0.0, %v1745
    %1747 = vmatmul.bf16.gmra.mxu0 %v1192
    %v1748 = vpop.f32.mrf.mxu0
    %v1749 = vadd.f32 0.0, %v1748
    %v1750 = vpop.f32.mrf.mxu0
    %v1751 = vadd.f32 0.0, %v1750
    %1752 = vmatmul.bf16.gmra.mxu0 %v1195
    %v1753 = vpop.f32.mrf.mxu0
    %v1754 = vadd.f32 0.0, %v1753
    %v1755 = vpop.f32.mrf.mxu0
    %v1756 = vadd.f32 0.0, %v1755
    %1757 = vmatmul.bf16.gmra.mxu0 %v1198
    %v1758 = vpop.f32.mrf.mxu0
    %v1759 = vadd.f32 0.0, %v1758
    %v1760 = vpop.f32.mrf.mxu0
    %v1761 = vadd.f32 0.0, %v1760
    %1762 = vmatmul.bf16.gmra.mxu0 %v1201
    %v1763 = vpop.f32.mrf.mxu0
    %v1764 = vadd.f32 0.0, %v1763
    %v1765 = vpop.f32.mrf.mxu0
    %v1766 = vadd.f32 0.0, %v1765
    %1767 = vmatmul.bf16.gmra.mxu0 %v1204
    %v1768 = vpop.f32.mrf.mxu0
    %v1769 = vadd.f32 0.0, %v1768
    %v1770 = vpop.f32.mrf.mxu0
    %v1771 = vadd.f32 0.0, %v1770
    %1772 = vmatmul.bf16.gmra.mxu0 %v1207
    %v1773 = vpop.f32.mrf.mxu0
    %v1774 = vadd.f32 0.0, %v1773
    %v1775 = vpop.f32.mrf.mxu0
    %v1776 = vadd.f32 0.0, %v1775
    %1777 = vmatmul.bf16.gmra.mxu0 %v1210
    %v1778 = vpop.f32.mrf.mxu0
    %v1779 = vadd.f32 0.0, %v1778
    %v1780 = vpop.f32.mrf.mxu0
    %v1781 = vadd.f32 0.0, %v1780
    %1782 = vmatmul.bf16.gmra.mxu0 %v1213
    %v1783 = vpop.f32.mrf.mxu0
    %v1784 = vadd.f32 0.0, %v1783
    %v1785 = vpop.f32.mrf.mxu0
    %v1786 = vadd.f32 0.0, %v1785
    %1787 = vmatmul.bf16.gmra.mxu0 %v1216
    %v1788 = vpop.f32.mrf.mxu0
    %v1789 = vadd.f32 0.0, %v1788
    %v1790 = vpop.f32.mrf.mxu0
    %v1791 = vadd.f32 0.0, %v1790
    %1792 = vmatmul.bf16.gmra.mxu0 %v1219
    %v1793 = vpop.f32.mrf.mxu0
    %v1794 = vadd.f32 0.0, %v1793
    %v1795 = vpop.f32.mrf.mxu0
    %v1796 = vadd.f32 0.0, %v1795
    %1797 = vmatmul.bf16.gmra.mxu0 %v1222
    %v1798 = vpop.f32.mrf.mxu0
    %v1799 = vadd.f32 0.0, %v1798
    %v1800 = vpop.f32.mrf.mxu0
    %v1801 = vadd.f32 0.0, %v1800
    %1802 = vmatmul.bf16.gmra.mxu0 %v1225
    %v1803 = vpop.f32.mrf.mxu0
    %v1804 = vadd.f32 0.0, %v1803
    %v1805 = vpop.f32.mrf.mxu0
    %v1806 = vadd.f32 0.0, %v1805
    %1807 = vmatmul.bf16.gmra.mxu0 %v1228
    %v1808 = vpop.f32.mrf.mxu0
    %v1809 = vadd.f32 0.0, %v1808
    %v1810 = vpop.f32.mrf.mxu0
    %v1811 = vadd.f32 0.0, %v1810
    %1812 = vmatmul.bf16.gmra.mxu0 %v1231
    %v1813 = vpop.f32.mrf.mxu0
    %v1814 = vadd.f32 0.0, %v1813
    %v1815 = vpop.f32.mrf.mxu0
    %v1816 = vadd.f32 0.0, %v1815
    %1817 = vmatmul.bf16.gmra.mxu0 %v1234
    %v1818 = vpop.f32.mrf.mxu0
    %v1819 = vadd.f32 0.0, %v1818
    %v1820 = vpop.f32.mrf.mxu0
    %v1821 = vadd.f32 0.0, %v1820
    %1822 = vmatmul.bf16.gmra.mxu0 %v1237
    %v1823 = vpop.f32.mrf.mxu0
    %v1824 = vadd.f32 0.0, %v1823
    %v1825 = vpop.f32.mrf.mxu0
    %v1826 = vadd.f32 0.0, %v1825
    %1827 = vmatmul.bf16.gmra.mxu0 %v1240
    %v1828 = vpop.f32.mrf.mxu0
    %v1829 = vadd.f32 0.0, %v1828
    %v1830 = vpop.f32.mrf.mxu0
    %v1831 = vadd.f32 0.0, %v1830
    %1832 = vmatmul.bf16.gmra.mxu0 %v1243
    %v1833 = vpop.f32.mrf.mxu0
    %v1834 = vadd.f32 0.0, %v1833
    %v1835 = vpop.f32.mrf.mxu0
    %v1836 = vadd.f32 0.0, %v1835
    %1837 = vmatmul.bf16.gmra.mxu0 %v1246
    %v1838 = vpop.f32.mrf.mxu0
    %v1839 = vadd.f32 0.0, %v1838
    %v1840 = vpop.f32.mrf.mxu0
    %v1841 = vadd.f32 0.0, %v1840
    %1842 = vmatmul.bf16.gmra.mxu0 %v1249
    %v1843 = vpop.f32.mrf.mxu0
    %v1844 = vadd.f32 0.0, %v1843
    %v1845 = vpop.f32.mrf.mxu0
    %v1846 = vadd.f32 0.0, %v1845
    %1847 = vmatmul.bf16.gmra.mxu0 %v1252
    %v1848 = vpop.f32.mrf.mxu0
    %v1849 = vadd.f32 0.0, %v1848
    %v1850 = vpop.f32.mrf.mxu0
    %v1851 = vadd.f32 0.0, %v1850
    %1852 = vmatmul.bf16.gmra.mxu0 %v1255
    %v1853 = vpop.f32.mrf.mxu0
    %v1854 = vadd.f32 0.0, %v1853
    %v1855 = vpop.f32.mrf.mxu0
    %v1856 = vadd.f32 0.0, %v1855
    %1857 = vmatmul.bf16.gmra.mxu0 %v1258
    %v1858 = vpop.f32.mrf.mxu0
    %v1859 = vadd.f32 0.0, %v1858
    %v1860 = vpop.f32.mrf.mxu0
    %v1861 = vadd.f32 0.0, %v1860
    %1862 = vmatmul.bf16.gmra.mxu0 %v1261
    %v1863 = vpop.f32.mrf.mxu0
    %v1864 = vadd.f32 0.0, %v1863
    %v1865 = vpop.f32.mrf.mxu0
    %v1866 = vadd.f32 0.0, %v1865
    %1867 = vmatmul.bf16.gmra.mxu0 %v1264
    %v1868 = vpop.f32.mrf.mxu0
    %v1869 = vadd.f32 0.0, %v1868
    %v1870 = vpop.f32.mrf.mxu0
    %v1871 = vadd.f32 0.0, %v1870
    %1872 = vmatmul.bf16.gmra.mxu0 %v1267
    %v1873 = vpop.f32.mrf.mxu0
    %v1874 = vadd.f32 0.0, %v1873
    %v1875 = vpop.f32.mrf.mxu0
    %v1876 = vadd.f32 0.0, %v1875
    %1877 = vmatmul.bf16.gmra.mxu0 %v1270
    %v1878 = vpop.f32.mrf.mxu0
    %v1879 = vadd.f32 0.0, %v1878
    %v1880 = vpop.f32.mrf.mxu0
    %v1881 = vadd.f32 0.0, %v1880
    %1882 = vmatmul.bf16.gmra.mxu0 %v1273
    %v1883 = vpop.f32.mrf.mxu0
    %v1884 = vadd.f32 0.0, %v1883
    %v1885 = vpop.f32.mrf.mxu0
    %v1886 = vadd.f32 0.0, %v1885
    %1887 = vmatmul.bf16.gmra.mxu0 %v1276
    %v1888 = vpop.f32.mrf.mxu0
    %v1889 = vadd.f32 0.0, %v1888
    %v1890 = vpop.f32.mrf.mxu0
    %v1891 = vadd.f32 0.0, %v1890
    %1892 = vmatmul.bf16.gmra.mxu0 %v1279
    %v1893 = vpop.f32.mrf.mxu0
    %v1894 = vadd.f32 0.0, %v1893
    %v1895 = vpop.f32.mrf.mxu0
    %v1896 = vadd.f32 0.0, %v1895
    %1897 = vmatmul.bf16.gmra.mxu0 %v1282
    %v1898 = vpop.f32.mrf.mxu0
    %v1899 = vadd.f32 0.0, %v1898
    %v1900 = vpop.f32.mrf.mxu0
    %v1901 = vadd.f32 0.0, %v1900
    %1902 = vmatmul.bf16.gmra.mxu0 %v1285
    %v1903 = vpop.f32.mrf.mxu0
    %v1904 = vadd.f32 0.0, %v1903
    %v1905 = vpop.f32.mrf.mxu0
    %v1906 = vadd.f32 0.0, %v1905
    %1907 = vmatmul.bf16.gmra.mxu0 %v1288
    %v1908 = vpop.f32.mrf.mxu0
    %v1909 = vadd.f32 0.0, %v1908
    %v1910 = vpop.f32.mrf.mxu0
    %v1911 = vadd.f32 0.0, %v1910
    %1912 = vmatmul.bf16.gmra.mxu0 %v1291
    %v1913 = vpop.f32.mrf.mxu0
    %v1914 = vadd.f32 0.0, %v1913
    %v1915 = vpop.f32.mrf.mxu0
    %v1916 = vadd.f32 0.0, %v1915
    %1917 = vmatmul.bf16.gmra.mxu0 %v1294
    %v1918 = vpop.f32.mrf.mxu0
    %v1919 = vadd.f32 0.0, %v1918
    %v1920 = vpop.f32.mrf.mxu0
    %v1921 = vadd.f32 0.0, %v1920
    %1922 = vmatmul.bf16.gmra.mxu0 %v1297
    %v1923 = vpop.f32.mrf.mxu0
    %v1924 = vadd.f32 0.0, %v1923
    %v1925 = vpop.f32.mrf.mxu0
    %v1926 = vadd.f32 0.0, %v1925
    %1927 = vmatmul.bf16.gmra.mxu0 %v1300
    %v1928 = vpop.f32.mrf.mxu0
    %v1929 = vadd.f32 0.0, %v1928
    %v1930 = vpop.f32.mrf.mxu0
    %v1931 = vadd.f32 0.0, %v1930
    %1932 = vmatmul.bf16.gmra.mxu0 %v1303
    %v1933 = vpop.f32.mrf.mxu0
    %v1934 = vadd.f32 0.0, %v1933
    %v1935 = vpop.f32.mrf.mxu0
    %v1936 = vadd.f32 0.0, %v1935
    %1937 = vmatmul.bf16.gmra.mxu0 %v1306
    %v1938 = vpop.f32.mrf.mxu0
    %v1939 = vadd.f32 0.0, %v1938
    %v1940 = vpop.f32.mrf.mxu0
    %v1941 = vadd.f32 0.0, %v1940
    %1942 = vmatmul.bf16.gmra.mxu0 %v1309
    %v1943 = vpop.f32.mrf.mxu0
    %v1944 = vadd.f32 0.0, %v1943
    %v1945 = vpop.f32.mrf.mxu0
    %v1946 = vadd.f32 0.0, %v1945
    %1947 = vmatmul.bf16.gmra.mxu0 %v1312
    %v1948 = vpop.f32.mrf.mxu0
    %v1949 = vadd.f32 0.0, %v1948
    %v1950 = vpop.f32.mrf.mxu0
    %v1951 = vadd.f32 0.0, %v1950
    %1952 = vmatmul.bf16.gmra.mxu0 %v1315
    %v1953 = vpop.f32.mrf.mxu0
    %v1954 = vadd.f32 0.0, %v1953
    %v1955 = vpop.f32.mrf.mxu0
    %v1956 = vadd.f32 0.0, %v1955
    %1957 = vmatmul.bf16.gmra.mxu0 %v1318
    %v1958 = vpop.f32.mrf.mxu0
    %v1959 = vadd.f32 0.0, %v1958
    %v1960 = vpop.f32.mrf.mxu0
    %v1961 = vadd.f32 0.0, %v1960
    %1962 = vmatmul.bf16.gmra.mxu0 %v1321
    %v1963 = vpop.f32.mrf.mxu0
    %v1964 = vadd.f32 0.0, %v1963
    %v1965 = vpop.f32.mrf.mxu0
    %v1966 = vadd.f32 0.0, %v1965
    %1967 = vmatmul.bf16.gmra.mxu0 %v1324
    %v1968 = vpop.f32.mrf.mxu0
    %v1969 = vadd.f32 0.0, %v1968
    %v1970 = vpop.f32.mrf.mxu0
    %v1971 = vadd.f32 0.0, %v1970
    %1972 = vmatmul.bf16.gmra.mxu0 %v1327
    %v1973 = vpop.f32.mrf.mxu0
    %v1974 = vadd.f32 0.0, %v1973
    %v1975 = vpop.f32.mrf.mxu0
    %v1976 = vadd.f32 0.0, %v1975
    %1977 = vdwg.mxu0
    %v1978 = vld [vmem:[%s1] sm:$0xf]
    %v1979 = vld [vmem:[%s1 + $0x4] sm:$0xf]
    %v1980 = vld [vmem:[%s3] sm:$0xf]
    %v1981 = vld [vmem:[%s3 + $0x4] sm:$0xf]
    %v1982 = vld [vmem:[%s3 + $0x8] sm:$0xf]
    %v1983 = vld [vmem:[%s3 + $0xc] sm:$0xf]
    %v1986 = vunpack.c.l.b16 %v1978
    %v1987 = vunpack.c.l.b16 %v1979
    %v1988 = vpack.c.b16 %v1987, %v1986
    %v1993 = vunpack.c.l.b16 %v1980
    %v1994 = vunpack.c.l.b16 %v1981
    %v1995 = vunpack.c.l.b16 %v1982
    %v1996 = vunpack.c.l.b16 %v1983
    %v1997 = vpack.c.b16 %v1994, %v1993
    %v1998 = vpack.c.b16 %v1996, %v1995
    %v2002 = vsel %vm944, %v1988, 0
    %2004 = vmatpush.bf16.msra.mxu0 0
    %2005 = vmatpush.bf16.msra.mxu0 0
    %2006 = vmatpush.bf16.msra.mxu0 0
    %2007 = vmatpush.bf16.msra.mxu0 0
    %2008 = vmatpush.bf16.msra.mxu0 0
    %2009 = vmatpush.bf16.msra.mxu0 0
    %2010 = vmatpush.bf16.msra.mxu0 %v1998
    %2011 = vmatpush.bf16.msra.mxu0 %v1997
    %2012 = vmatmul.bf16.gmra.mxu0 %v2002
    %v2013 = vpop.f32.mrf.mxu0
    %v2014 = vadd.f32 0.0, %v2013
    %v2015 = vpop.f32.mrf.mxu0
    %v2016 = vadd.f32 0.0, %v2015
    %2017 = vdwg.mxu0
    %v2020 = vrot.slane %v2014, 1
    %v2021 = vrot.slane %v2014, 2
    %v2022 = vrot.slane %v2014, 3
    %v2023 = vrot.slane %v2014, 4
    %v2024 = vrot.slane %v2014, 5
    %v2025 = vrot.slane %v2014, 6
    %v2026 = vrot.slane %v2014, 7
    %v2027 = vrot.slane %v2016, 1
    %v2028 = vrot.slane %v2016, 2
    %v2029 = vrot.slane %v2016, 3
    %v2030 = vrot.slane %v2016, 4
    %v2031 = vrot.slane %v2016, 5
    %v2032 = vrot.slane %v2016, 6
    %v2033 = vrot.slane %v2016, 7
    %v2034 = vperm.slane %v2014, 0
    %v2035 = vperm.slane %v2020, 0
    %v2036 = vperm.slane %v2021, 0
    %v2037 = vperm.slane %v2022, 0
    %v2038 = vperm.slane %v2023, 0
    %v2039 = vperm.slane %v2024, 0
    %v2040 = vperm.slane %v2025, 0
    %v2041 = vperm.slane %v2026, 0
    %v2042 = vperm.slane %v2016, 0
    %v2043 = vperm.slane %v2027, 0
    %v2044 = vperm.slane %v2028, 0
    %v2045 = vperm.slane %v2029, 0
    %v2046 = vperm.slane %v2030, 0
    %v2047 = vperm.slane %v2031, 0
    %v2048 = vperm.slane %v2032, 0
    %v2049 = vperm.slane %v2033, 0
    %v2066 = vadd.f32 %v1339, %v2034
    %v2067 = vadd.f32 %v1341, %v2034
    %v2068 = vadd.f32 %v1344, %v2034
    %v2069 = vadd.f32 %v1346, %v2034
    %v2070 = vadd.f32 %v1349, %v2034
    %v2071 = vadd.f32 %v1351, %v2034
    %v2072 = vadd.f32 %v1354, %v2034
    %v2073 = vadd.f32 %v1356, %v2034
    %v2074 = vadd.f32 %v1359, %v2034
    %v2075 = vadd.f32 %v1361, %v2034
    %v2076 = vadd.f32 %v1364, %v2034
    %v2077 = vadd.f32 %v1366, %v2034
    %v2078 = vadd.f32 %v1369, %v2034
    %v2079 = vadd.f32 %v1371, %v2034
    %v2080 = vadd.f32 %v1374, %v2034
    %v2081 = vadd.f32 %v1376, %v2034
    %v2082 = vadd.f32 %v1379, %v2035
    %v2083 = vadd.f32 %v1381, %v2035
    %v2084 = vadd.f32 %v1384, %v2035
    %v2085 = vadd.f32 %v1386, %v2035
    %v2086 = vadd.f32 %v1389, %v2035
    %v2087 = vadd.f32 %v1391, %v2035
    %v2088 = vadd.f32 %v1394, %v2035
    %v2089 = vadd.f32 %v1396, %v2035
    %v2090 = vadd.f32 %v1399, %v2035
    %v2091 = vadd.f32 %v1401, %v2035
    %v2092 = vadd.f32 %v1404, %v2035
    %v2093 = vadd.f32 %v1406, %v2035
    %v2094 = vadd.f32 %v1409, %v2035
    %v2095 = vadd.f32 %v1411, %v2035
    %v2096 = vadd.f32 %v1414, %v2035
    %v2097 = vadd.f32 %v1416, %v2035
    %v2098 = vadd.f32 %v1419, %v2036
    %v2099 = vadd.f32 %v1421, %v2036
    %v2100 = vadd.f32 %v1424, %v2036
    %v2101 = vadd.f32 %v1426, %v2036
    %v2102 = vadd.f32 %v1429, %v2036
    %v2103 = vadd.f32 %v1431, %v2036
    %v2104 = vadd.f32 %v1434, %v2036
    %v2105 = vadd.f32 %v1436, %v2036
    %v2106 = vadd.f32 %v1439, %v2036
    %v2107 = vadd.f32 %v1441, %v2036
    %v2108 = vadd.f32 %v1444, %v2036
    %v2109 = vadd.f32 %v1446, %v2036
    %v2110 = vadd.f32 %v1449, %v2036
    %v2111 = vadd.f32 %v1451, %v2036
    %v2112 = vadd.f32 %v1454, %v2036
    %v2113 = vadd.f32 %v1456, %v2036
    %v2114 = vadd.f32 %v1459, %v2037
    %v2115 = vadd.f32 %v1461, %v2037
    %v2116 = vadd.f32 %v1464, %v2037
    %v2117 = vadd.f32 %v1466, %v2037
    %v2118 = vadd.f32 %v1469, %v2037
    %v2119 = vadd.f32 %v1471, %v2037
    %v2120 = vadd.f32 %v1474, %v2037
    %v2121 = vadd.f32 %v1476, %v2037
    %v2122 = vadd.f32 %v1479, %v2037
    %v2123 = vadd.f32 %v1481, %v2037
    %v2124 = vadd.f32 %v1484, %v2037
    %v2125 = vadd.f32 %v1486, %v2037
    %v2126 = vadd.f32 %v1489, %v2037
    %v2127 = vadd.f32 %v1491, %v2037
    %v2128 = vadd.f32 %v1494, %v2037
    %v2129 = vadd.f32 %v1496, %v2037
    %v2130 = vadd.f32 %v1499, %v2038
    %v2131 = vadd.f32 %v1501, %v2038
    %v2132 = vadd.f32 %v1504, %v2038
    %v2133 = vadd.f32 %v1506, %v2038
    %v2134 = vadd.f32 %v1509, %v2038
    %v2135 = vadd.f32 %v1511, %v2038
    %v2136 = vadd.f32 %v1514, %v2038
    %v2137 = vadd.f32 %v1516, %v2038
    %v2138 = vadd.f32 %v1519, %v2038
    %v2139 = vadd.f32 %v1521, %v2038
    %v2140 = vadd.f32 %v1524, %v2038
    %v2141 = vadd.f32 %v1526, %v2038
    %v2142 = vadd.f32 %v1529, %v2038
    %v2143 = vadd.f32 %v1531, %v2038
    %v2144 = vadd.f32 %v1534, %v2038
    %v2145 = vadd.f32 %v1536, %v2038
    %v2146 = vadd.f32 %v1539, %v2039
    %v2147 = vadd.f32 %v1541, %v2039
    %v2148 = vadd.f32 %v1544, %v2039
    %v2149 = vadd.f32 %v1546, %v2039
    %v2150 = vadd.f32 %v1549, %v2039
    %v2151 = vadd.f32 %v1551, %v2039
    %v2152 = vadd.f32 %v1554, %v2039
    %v2153 = vadd.f32 %v1556, %v2039
    %v2154 = vadd.f32 %v1559, %v2039
    %v2155 = vadd.f32 %v1561, %v2039
    %v2156 = vadd.f32 %v1564, %v2039
    %v2157 = vadd.f32 %v1566, %v2039
    %v2158 = vadd.f32 %v1569, %v2039
    %v2159 = vadd.f32 %v1571, %v2039
    %v2160 = vadd.f32 %v1574, %v2039
    %v2161 = vadd.f32 %v1576, %v2039
    %v2162 = vadd.f32 %v1579, %v2040
    %v2163 = vadd.f32 %v1581, %v2040
    %v2164 = vadd.f32 %v1584, %v2040
    %v2165 = vadd.f32 %v1586, %v2040
    %v2166 = vadd.f32 %v1589, %v2040
    %v2167 = vadd.f32 %v1591, %v2040
    %v2168 = vadd.f32 %v1594, %v2040
    %v2169 = vadd.f32 %v1596, %v2040
    %v2170 = vadd.f32 %v1599, %v2040
    %v2171 = vadd.f32 %v1601, %v2040
    %v2172 = vadd.f32 %v1604, %v2040
    %v2173 = vadd.f32 %v1606, %v2040
    %v2174 = vadd.f32 %v1609, %v2040
    %v2175 = vadd.f32 %v1611, %v2040
    %v2176 = vadd.f32 %v1614, %v2040
    %v2177 = vadd.f32 %v1616, %v2040
    %v2178 = vadd.f32 %v1619, %v2041
    %v2179 = vadd.f32 %v1621, %v2041
    %v2180 = vadd.f32 %v1624, %v2041
    %v2181 = vadd.f32 %v1626, %v2041
    %v2182 = vadd.f32 %v1629, %v2041
    %v2183 = vadd.f32 %v1631, %v2041
    %v2184 = vadd.f32 %v1634, %v2041
    %v2185 = vadd.f32 %v1636, %v2041
    %v2186 = vadd.f32 %v1639, %v2041
    %v2187 = vadd.f32 %v1641, %v2041
    %v2188 = vadd.f32 %v1644, %v2041
    %v2189 = vadd.f32 %v1646, %v2041
    %v2190 = vadd.f32 %v1649, %v2041
    %v2191 = vadd.f32 %v1651, %v2041
    %v2192 = vadd.f32 %v1654, %v2041
    %v2193 = vadd.f32 %v1656, %v2041
    %v2194 = vadd.f32 %v1659, %v2042
    %v2195 = vadd.f32 %v1661, %v2042
    %v2196 = vadd.f32 %v1664, %v2042
    %v2197 = vadd.f32 %v1666, %v2042
    %v2198 = vadd.f32 %v1669, %v2042
    %v2199 = vadd.f32 %v1671, %v2042
    %v2200 = vadd.f32 %v1674, %v2042
    %v2201 = vadd.f32 %v1676, %v2042
    %v2202 = vadd.f32 %v1679, %v2042
    %v2203 = vadd.f32 %v1681, %v2042
    %v2204 = vadd.f32 %v1684, %v2042
    %v2205 = vadd.f32 %v1686, %v2042
    %v2206 = vadd.f32 %v1689, %v2042
    %v2207 = vadd.f32 %v1691, %v2042
    %v2208 = vadd.f32 %v1694, %v2042
    %v2209 = vadd.f32 %v1696, %v2042
    %v2210 = vadd.f32 %v1699, %v2043
    %v2211 = vadd.f32 %v1701, %v2043
    %v2212 = vadd.f32 %v1704, %v2043
    %v2213 = vadd.f32 %v1706, %v2043
    %v2214 = vadd.f32 %v1709, %v2043
    %v2215 = vadd.f32 %v1711, %v2043
    %v2216 = vadd.f32 %v1714, %v2043
    %v2217 = vadd.f32 %v1716, %v2043
    %v2218 = vadd.f32 %v1719, %v2043
    %v2219 = vadd.f32 %v1721, %v2043
    %v2220 = vadd.f32 %v1724, %v2043
    %v2221 = vadd.f32 %v1726, %v2043
    %v2222 = vadd.f32 %v1729, %v2043
    %v2223 = vadd.f32 %v1731, %v2043
    %v2224 = vadd.f32 %v1734, %v2043
    %v2225 = vadd.f32 %v1736, %v2043
    %v2226 = vadd.f32 %v1739, %v2044
    %v2227 = vadd.f32 %v1741, %v2044
    %v2228 = vadd.f32 %v1744, %v2044
    %v2229 = vadd.f32 %v1746, %v2044
    %v2230 = vadd.f32 %v1749, %v2044
    %v2231 = vadd.f32 %v1751, %v2044
    %v2232 = vadd.f32 %v1754, %v2044
    %v2233 = vadd.f32 %v1756, %v2044
    %v2234 = vadd.f32 %v1759, %v2044
    %v2235 = vadd.f32 %v1761, %v2044
    %v2236 = vadd.f32 %v1764, %v2044
    %v2237 = vadd.f32 %v1766, %v2044
    %v2238 = vadd.f32 %v1769, %v2044
    %v2239 = vadd.f32 %v1771, %v2044
    %v2240 = vadd.f32 %v1774, %v2044
    %v2241 = vadd.f32 %v1776, %v2044
    %v2242 = vadd.f32 %v1779, %v2045
    %v2243 = vadd.f32 %v1781, %v2045
    %v2244 = vadd.f32 %v1784, %v2045
    %v2245 = vadd.f32 %v1786, %v2045
    %v2246 = vadd.f32 %v1789, %v2045
    %v2247 = vadd.f32 %v1791, %v2045
    %v2248 = vadd.f32 %v1794, %v2045
    %v2249 = vadd.f32 %v1796, %v2045
    %v2250 = vadd.f32 %v1799, %v2045
    %v2251 = vadd.f32 %v1801, %v2045
    %v2252 = vadd.f32 %v1804, %v2045
    %v2253 = vadd.f32 %v1806, %v2045
    %v2254 = vadd.f32 %v1809, %v2045
    %v2255 = vadd.f32 %v1811, %v2045
    %v2256 = vadd.f32 %v1814, %v2045
    %v2257 = vadd.f32 %v1816, %v2045
    %v2258 = vadd.f32 %v1819, %v2046
    %v2259 = vadd.f32 %v1821, %v2046
    %v2260 = vadd.f32 %v1824, %v2046
    %v2261 = vadd.f32 %v1826, %v2046
    %v2262 = vadd.f32 %v1829, %v2046
    %v2263 = vadd.f32 %v1831, %v2046
    %v2264 = vadd.f32 %v1834, %v2046
    %v2265 = vadd.f32 %v1836, %v2046
    %v2266 = vadd.f32 %v1839, %v2046
    %v2267 = vadd.f32 %v1841, %v2046
    %v2268 = vadd.f32 %v1844, %v2046
    %v2269 = vadd.f32 %v1846, %v2046
    %v2270 = vadd.f32 %v1849, %v2046
    %v2271 = vadd.f32 %v1851, %v2046
    %v2272 = vadd.f32 %v1854, %v2046
    %v2273 = vadd.f32 %v1856, %v2046
    %v2274 = vadd.f32 %v1859, %v2047
    %v2275 = vadd.f32 %v1861, %v2047
    %v2276 = vadd.f32 %v1864, %v2047
    %v2277 = vadd.f32 %v1866, %v2047
    %v2278 = vadd.f32 %v1869, %v2047
    %v2279 = vadd.f32 %v1871, %v2047
    %v2280 = vadd.f32 %v1874, %v2047
    %v2281 = vadd.f32 %v1876, %v2047
    %v2282 = vadd.f32 %v1879, %v2047
    %v2283 = vadd.f32 %v1881, %v2047
    %v2284 = vadd.f32 %v1884, %v2047
    %v2285 = vadd.f32 %v1886, %v2047
    %v2286 = vadd.f32 %v1889, %v2047
    %v2287 = vadd.f32 %v1891, %v2047
    %v2288 = vadd.f32 %v1894, %v2047
    %v2289 = vadd.f32 %v1896, %v2047
    %v2290 = vadd.f32 %v1899, %v2048
    %v2291 = vadd.f32 %v1901, %v2048
    %v2292 = vadd.f32 %v1904, %v2048
    %v2293 = vadd.f32 %v1906, %v2048
    %v2294 = vadd.f32 %v1909, %v2048
    %v2295 = vadd.f32 %v1911, %v2048
    %v2296 = vadd.f32 %v1914, %v2048
    %v2297 = vadd.f32 %v1916, %v2048
    %v2298 = vadd.f32 %v1919, %v2048
    %v2299 = vadd.f32 %v1921, %v2048
    %v2300 = vadd.f32 %v1924, %v2048
    %v2301 = vadd.f32 %v1926, %v2048
    %v2302 = vadd.f32 %v1929, %v2048
    %v2303 = vadd.f32 %v1931, %v2048
    %v2304 = vadd.f32 %v1934, %v2048
    %v2305 = vadd.f32 %v1936, %v2048
    %v2306 = vadd.f32 %v1939, %v2049
    %v2307 = vadd.f32 %v1941, %v2049
    %v2308 = vadd.f32 %v1944, %v2049
    %v2309 = vadd.f32 %v1946, %v2049
    %v2310 = vadd.f32 %v1949, %v2049
    %v2311 = vadd.f32 %v1951, %v2049
    %v2312 = vadd.f32 %v1954, %v2049
    %v2313 = vadd.f32 %v1956, %v2049
    %v2314 = vadd.f32 %v1959, %v2049
    %v2315 = vadd.f32 %v1961, %v2049
    %v2316 = vadd.f32 %v1964, %v2049
    %v2317 = vadd.f32 %v1966, %v2049
    %v2318 = vadd.f32 %v1969, %v2049
    %v2319 = vadd.f32 %v1971, %v2049
    %v2320 = vadd.f32 %v1974, %v2049
    %v2321 = vadd.f32 %v1976, %v2049
    %v2322 = vld [vmem:[%s4] sm:$0x1]
    %v2324 = vperm.slane %v2322, 0
    %v2326 = vadd.f32 %v2066, %v2324
    %v2327 = vadd.f32 %v2067, %v2324
    %v2328 = vadd.f32 %v2068, %v2324
    %v2329 = vadd.f32 %v2069, %v2324
    %v2330 = vadd.f32 %v2070, %v2324
    %v2331 = vadd.f32 %v2071, %v2324
    %v2332 = vadd.f32 %v2072, %v2324
    %v2333 = vadd.f32 %v2073, %v2324
    %v2334 = vadd.f32 %v2074, %v2324
    %v2335 = vadd.f32 %v2075, %v2324
    %v2336 = vadd.f32 %v2076, %v2324
    %v2337 = vadd.f32 %v2077, %v2324
    %v2338 = vadd.f32 %v2078, %v2324
    %v2339 = vadd.f32 %v2079, %v2324
    %v2340 = vadd.f32 %v2080, %v2324
    %v2341 = vadd.f32 %v2081, %v2324
    %v2342 = vadd.f32 %v2082, %v2324
    %v2343 = vadd.f32 %v2083, %v2324
    %v2344 = vadd.f32 %v2084, %v2324
    %v2345 = vadd.f32 %v2085, %v2324
    %v2346 = vadd.f32 %v2086, %v2324
    %v2347 = vadd.f32 %v2087, %v2324
    %v2348 = vadd.f32 %v2088, %v2324
    %v2349 = vadd.f32 %v2089, %v2324
    %v2350 = vadd.f32 %v2090, %v2324
    %v2351 = vadd.f32 %v2091, %v2324
    %v2352 = vadd.f32 %v2092, %v2324
    %v2353 = vadd.f32 %v2093, %v2324
    %v2354 = vadd.f32 %v2094, %v2324
    %v2355 = vadd.f32 %v2095, %v2324
    %v2356 = vadd.f32 %v2096, %v2324
    %v2357 = vadd.f32 %v2097, %v2324
    %v2358 = vadd.f32 %v2098, %v2324
    %v2359 = vadd.f32 %v2099, %v2324
    %v2360 = vadd.f32 %v2100, %v2324
    %v2361 = vadd.f32 %v2101, %v2324
    %v2362 = vadd.f32 %v2102, %v2324
    %v2363 = vadd.f32 %v2103, %v2324
    %v2364 = vadd.f32 %v2104, %v2324
    %v2365 = vadd.f32 %v2105, %v2324
    %v2366 = vadd.f32 %v2106, %v2324
    %v2367 = vadd.f32 %v2107, %v2324
    %v2368 = vadd.f32 %v2108, %v2324
    %v2369 = vadd.f32 %v2109, %v2324
    %v2370 = vadd.f32 %v2110, %v2324
    %v2371 = vadd.f32 %v2111, %v2324
    %v2372 = vadd.f32 %v2112, %v2324
    %v2373 = vadd.f32 %v2113, %v2324
    %v2374 = vadd.f32 %v2114, %v2324
    %v2375 = vadd.f32 %v2115, %v2324
    %v2376 = vadd.f32 %v2116, %v2324
    %v2377 = vadd.f32 %v2117, %v2324
    %v2378 = vadd.f32 %v2118, %v2324
    %v2379 = vadd.f32 %v2119, %v2324
    %v2380 = vadd.f32 %v2120, %v2324
    %v2381 = vadd.f32 %v2121, %v2324
    %v2382 = vadd.f32 %v2122, %v2324
    %v2383 = vadd.f32 %v2123, %v2324
    %v2384 = vadd.f32 %v2124, %v2324
    %v2385 = vadd.f32 %v2125, %v2324
    %v2386 = vadd.f32 %v2126, %v2324
    %v2387 = vadd.f32 %v2127, %v2324
    %v2388 = vadd.f32 %v2128, %v2324
    %v2389 = vadd.f32 %v2129, %v2324
    %v2390 = vadd.f32 %v2130, %v2324
    %v2391 = vadd.f32 %v2131, %v2324
    %v2392 = vadd.f32 %v2132, %v2324
    %v2393 = vadd.f32 %v2133, %v2324
    %v2394 = vadd.f32 %v2134, %v2324
    %v2395 = vadd.f32 %v2135, %v2324
    %v2396 = vadd.f32 %v2136, %v2324
    %v2397 = vadd.f32 %v2137, %v2324
    %v2398 = vadd.f32 %v2138, %v2324
    %v2399 = vadd.f32 %v2139, %v2324
    %v2400 = vadd.f32 %v2140, %v2324
    %v2401 = vadd.f32 %v2141, %v2324
    %v2402 = vadd.f32 %v2142, %v2324
    %v2403 = vadd.f32 %v2143, %v2324
    %v2404 = vadd.f32 %v2144, %v2324
    %v2405 = vadd.f32 %v2145, %v2324
    %v2406 = vadd.f32 %v2146, %v2324
    %v2407 = vadd.f32 %v2147, %v2324
    %v2408 = vadd.f32 %v2148, %v2324
    %v2409 = vadd.f32 %v2149, %v2324
    %v2410 = vadd.f32 %v2150, %v2324
    %v2411 = vadd.f32 %v2151, %v2324
    %v2412 = vadd.f32 %v2152, %v2324
    %v2413 = vadd.f32 %v2153, %v2324
    %v2414 = vadd.f32 %v2154, %v2324
    %v2415 = vadd.f32 %v2155, %v2324
    %v2416 = vadd.f32 %v2156, %v2324
    %v2417 = vadd.f32 %v2157, %v2324
    %v2418 = vadd.f32 %v2158, %v2324
    %v2419 = vadd.f32 %v2159, %v2324
    %v2420 = vadd.f32 %v2160, %v2324
    %v2421 = vadd.f32 %v2161, %v2324
    %v2422 = vadd.f32 %v2162, %v2324
    %v2423 = vadd.f32 %v2163, %v2324
    %v2424 = vadd.f32 %v2164, %v2324
    %v2425 = vadd.f32 %v2165, %v2324
    %v2426 = vadd.f32 %v2166, %v2324
    %v2427 = vadd.f32 %v2167, %v2324
    %v2428 = vadd.f32 %v2168, %v2324
    %v2429 = vadd.f32 %v2169, %v2324
    %v2430 = vadd.f32 %v2170, %v2324
    %v2431 = vadd.f32 %v2171, %v2324
    %v2432 = vadd.f32 %v2172, %v2324
    %v2433 = vadd.f32 %v2173, %v2324
    %v2434 = vadd.f32 %v2174, %v2324
    %v2435 = vadd.f32 %v2175, %v2324
    %v2436 = vadd.f32 %v2176, %v2324
    %v2437 = vadd.f32 %v2177, %v2324
    %v2438 = vadd.f32 %v2178, %v2324
    %v2439 = vadd.f32 %v2179, %v2324
    %v2440 = vadd.f32 %v2180, %v2324
    %v2441 = vadd.f32 %v2181, %v2324
    %v2442 = vadd.f32 %v2182, %v2324
    %v2443 = vadd.f32 %v2183, %v2324
    %v2444 = vadd.f32 %v2184, %v2324
    %v2445 = vadd.f32 %v2185, %v2324
    %v2446 = vadd.f32 %v2186, %v2324
    %v2447 = vadd.f32 %v2187, %v2324
    %v2448 = vadd.f32 %v2188, %v2324
    %v2449 = vadd.f32 %v2189, %v2324
    %v2450 = vadd.f32 %v2190, %v2324
    %v2451 = vadd.f32 %v2191, %v2324
    %v2452 = vadd.f32 %v2192, %v2324
    %v2453 = vadd.f32 %v2193, %v2324
    %v2454 = vadd.f32 %v2194, %v2324
    %v2455 = vadd.f32 %v2195, %v2324
    %v2456 = vadd.f32 %v2196, %v2324
    %v2457 = vadd.f32 %v2197, %v2324
    %v2458 = vadd.f32 %v2198, %v2324
    %v2459 = vadd.f32 %v2199, %v2324
    %v2460 = vadd.f32 %v2200, %v2324
    %v2461 = vadd.f32 %v2201, %v2324
    %v2462 = vadd.f32 %v2202, %v2324
    %v2463 = vadd.f32 %v2203, %v2324
    %v2464 = vadd.f32 %v2204, %v2324
    %v2465 = vadd.f32 %v2205, %v2324
    %v2466 = vadd.f32 %v2206, %v2324
    %v2467 = vadd.f32 %v2207, %v2324
    %v2468 = vadd.f32 %v2208, %v2324
    %v2469 = vadd.f32 %v2209, %v2324
    %v2470 = vadd.f32 %v2210, %v2324
    %v2471 = vadd.f32 %v2211, %v2324
    %v2472 = vadd.f32 %v2212, %v2324
    %v2473 = vadd.f32 %v2213, %v2324
    %v2474 = vadd.f32 %v2214, %v2324
    %v2475 = vadd.f32 %v2215, %v2324
    %v2476 = vadd.f32 %v2216, %v2324
    %v2477 = vadd.f32 %v2217, %v2324
    %v2478 = vadd.f32 %v2218, %v2324
    %v2479 = vadd.f32 %v2219, %v2324
    %v2480 = vadd.f32 %v2220, %v2324
    %v2481 = vadd.f32 %v2221, %v2324
    %v2482 = vadd.f32 %v2222, %v2324
    %v2483 = vadd.f32 %v2223, %v2324
    %v2484 = vadd.f32 %v2224, %v2324
    %v2485 = vadd.f32 %v2225, %v2324
    %v2486 = vadd.f32 %v2226, %v2324
    %v2487 = vadd.f32 %v2227, %v2324
    %v2488 = vadd.f32 %v2228, %v2324
    %v2489 = vadd.f32 %v2229, %v2324
    %v2490 = vadd.f32 %v2230, %v2324
    %v2491 = vadd.f32 %v2231, %v2324
    %v2492 = vadd.f32 %v2232, %v2324
    %v2493 = vadd.f32 %v2233, %v2324
    %v2494 = vadd.f32 %v2234, %v2324
    %v2495 = vadd.f32 %v2235, %v2324
    %v2496 = vadd.f32 %v2236, %v2324
    %v2497 = vadd.f32 %v2237, %v2324
    %v2498 = vadd.f32 %v2238, %v2324
    %v2499 = vadd.f32 %v2239, %v2324
    %v2500 = vadd.f32 %v2240, %v2324
    %v2501 = vadd.f32 %v2241, %v2324
    %v2502 = vadd.f32 %v2242, %v2324
    %v2503 = vadd.f32 %v2243, %v2324
    %v2504 = vadd.f32 %v2244, %v2324
    %v2505 = vadd.f32 %v2245, %v2324
    %v2506 = vadd.f32 %v2246, %v2324
    %v2507 = vadd.f32 %v2247, %v2324
    %v2508 = vadd.f32 %v2248, %v2324
    %v2509 = vadd.f32 %v2249, %v2324
    %v2510 = vadd.f32 %v2250, %v2324
    %v2511 = vadd.f32 %v2251, %v2324
    %v2512 = vadd.f32 %v2252, %v2324
    %v2513 = vadd.f32 %v2253, %v2324
    %v2514 = vadd.f32 %v2254, %v2324
    %v2515 = vadd.f32 %v2255, %v2324
    %v2516 = vadd.f32 %v2256, %v2324
    %v2517 = vadd.f32 %v2257, %v2324
    %v2518 = vadd.f32 %v2258, %v2324
    %v2519 = vadd.f32 %v2259, %v2324
    %v2520 = vadd.f32 %v2260, %v2324
    %v2521 = vadd.f32 %v2261, %v2324
    %v2522 = vadd.f32 %v2262, %v2324
    %v2523 = vadd.f32 %v2263, %v2324
    %v2524 = vadd.f32 %v2264, %v2324
    %v2525 = vadd.f32 %v2265, %v2324
    %v2526 = vadd.f32 %v2266, %v2324
    %v2527 = vadd.f32 %v2267, %v2324
    %v2528 = vadd.f32 %v2268, %v2324
    %v2529 = vadd.f32 %v2269, %v2324
    %v2530 = vadd.f32 %v2270, %v2324
    %v2531 = vadd.f32 %v2271, %v2324
    %v2532 = vadd.f32 %v2272, %v2324
    %v2533 = vadd.f32 %v2273, %v2324
    %v2534 = vadd.f32 %v2274, %v2324
    %v2535 = vadd.f32 %v2275, %v2324
    %v2536 = vadd.f32 %v2276, %v2324
    %v2537 = vadd.f32 %v2277, %v2324
    %v2538 = vadd.f32 %v2278, %v2324
    %v2539 = vadd.f32 %v2279, %v2324
    %v2540 = vadd.f32 %v2280, %v2324
    %v2541 = vadd.f32 %v2281, %v2324
    %v2542 = vadd.f32 %v2282, %v2324
    %v2543 = vadd.f32 %v2283, %v2324
    %v2544 = vadd.f32 %v2284, %v2324
    %v2545 = vadd.f32 %v2285, %v2324
    %v2546 = vadd.f32 %v2286, %v2324
    %v2547 = vadd.f32 %v2287, %v2324
    %v2548 = vadd.f32 %v2288, %v2324
    %v2549 = vadd.f32 %v2289, %v2324
    %v2550 = vadd.f32 %v2290, %v2324
    %v2551 = vadd.f32 %v2291, %v2324
    %v2552 = vadd.f32 %v2292, %v2324
    %v2553 = vadd.f32 %v2293, %v2324
    %v2554 = vadd.f32 %v2294, %v2324
    %v2555 = vadd.f32 %v2295, %v2324
    %v2556 = vadd.f32 %v2296, %v2324
    %v2557 = vadd.f32 %v2297, %v2324
    %v2558 = vadd.f32 %v2298, %v2324
    %v2559 = vadd.f32 %v2299, %v2324
    %v2560 = vadd.f32 %v2300, %v2324
    %v2561 = vadd.f32 %v2301, %v2324
    %v2562 = vadd.f32 %v2302, %v2324
    %v2563 = vadd.f32 %v2303, %v2324
    %v2564 = vadd.f32 %v2304, %v2324
    %v2565 = vadd.f32 %v2305, %v2324
    %v2566 = vadd.f32 %v2306, %v2324
    %v2567 = vadd.f32 %v2307, %v2324
    %v2568 = vadd.f32 %v2308, %v2324
    %v2569 = vadd.f32 %v2309, %v2324
    %v2570 = vadd.f32 %v2310, %v2324
    %v2571 = vadd.f32 %v2311, %v2324
    %v2572 = vadd.f32 %v2312, %v2324
    %v2573 = vadd.f32 %v2313, %v2324
    %v2574 = vadd.f32 %v2314, %v2324
    %v2575 = vadd.f32 %v2315, %v2324
    %v2576 = vadd.f32 %v2316, %v2324
    %v2577 = vadd.f32 %v2317, %v2324
    %v2578 = vadd.f32 %v2318, %v2324
    %v2579 = vadd.f32 %v2319, %v2324
    %v2580 = vadd.f32 %v2320, %v2324
    %v2581 = vadd.f32 %v2321, %v2324
    %v2582 = vmax.f32 %v2326, 0.0
    %v2583 = vmax.f32 %v2327, 0.0
    %v2584 = vmax.f32 %v2328, 0.0
    %v2585 = vmax.f32 %v2329, 0.0
    %v2586 = vmax.f32 %v2330, 0.0
    %v2587 = vmax.f32 %v2331, 0.0
    %v2588 = vmax.f32 %v2332, 0.0
    %v2589 = vmax.f32 %v2333, 0.0
    %v2590 = vmax.f32 %v2334, 0.0
    %v2591 = vmax.f32 %v2335, 0.0
    %v2592 = vmax.f32 %v2336, 0.0
    %v2593 = vmax.f32 %v2337, 0.0
    %v2594 = vmax.f32 %v2338, 0.0
    %v2595 = vmax.f32 %v2339, 0.0
    %v2596 = vmax.f32 %v2340, 0.0
    %v2597 = vmax.f32 %v2341, 0.0
    %v2598 = vmax.f32 %v2342, 0.0
    %v2599 = vmax.f32 %v2343, 0.0
    %v2600 = vmax.f32 %v2344, 0.0
    %v2601 = vmax.f32 %v2345, 0.0
    %v2602 = vmax.f32 %v2346, 0.0
    %v2603 = vmax.f32 %v2347, 0.0
    %v2604 = vmax.f32 %v2348, 0.0
    %v2605 = vmax.f32 %v2349, 0.0
    %v2606 = vmax.f32 %v2350, 0.0
    %v2607 = vmax.f32 %v2351, 0.0
    %v2608 = vmax.f32 %v2352, 0.0
    %v2609 = vmax.f32 %v2353, 0.0
    %v2610 = vmax.f32 %v2354, 0.0
    %v2611 = vmax.f32 %v2355, 0.0
    %v2612 = vmax.f32 %v2356, 0.0
    %v2613 = vmax.f32 %v2357, 0.0
    %v2614 = vmax.f32 %v2358, 0.0
    %v2615 = vmax.f32 %v2359, 0.0
    %v2616 = vmax.f32 %v2360, 0.0
    %v2617 = vmax.f32 %v2361, 0.0
    %v2618 = vmax.f32 %v2362, 0.0
    %v2619 = vmax.f32 %v2363, 0.0
    %v2620 = vmax.f32 %v2364, 0.0
    %v2621 = vmax.f32 %v2365, 0.0
    %v2622 = vmax.f32 %v2366, 0.0
    %v2623 = vmax.f32 %v2367, 0.0
    %v2624 = vmax.f32 %v2368, 0.0
    %v2625 = vmax.f32 %v2369, 0.0
    %v2626 = vmax.f32 %v2370, 0.0
    %v2627 = vmax.f32 %v2371, 0.0
    %v2628 = vmax.f32 %v2372, 0.0
    %v2629 = vmax.f32 %v2373, 0.0
    %v2630 = vmax.f32 %v2374, 0.0
    %v2631 = vmax.f32 %v2375, 0.0
    %v2632 = vmax.f32 %v2376, 0.0
    %v2633 = vmax.f32 %v2377, 0.0
    %v2634 = vmax.f32 %v2378, 0.0
    %v2635 = vmax.f32 %v2379, 0.0
    %v2636 = vmax.f32 %v2380, 0.0
    %v2637 = vmax.f32 %v2381, 0.0
    %v2638 = vmax.f32 %v2382, 0.0
    %v2639 = vmax.f32 %v2383, 0.0
    %v2640 = vmax.f32 %v2384, 0.0
    %v2641 = vmax.f32 %v2385, 0.0
    %v2642 = vmax.f32 %v2386, 0.0
    %v2643 = vmax.f32 %v2387, 0.0
    %v2644 = vmax.f32 %v2388, 0.0
    %v2645 = vmax.f32 %v2389, 0.0
    %v2646 = vmax.f32 %v2390, 0.0
    %v2647 = vmax.f32 %v2391, 0.0
    %v2648 = vmax.f32 %v2392, 0.0
    %v2649 = vmax.f32 %v2393, 0.0
    %v2650 = vmax.f32 %v2394, 0.0
    %v2651 = vmax.f32 %v2395, 0.0
    %v2652 = vmax.f32 %v2396, 0.0
    %v2653 = vmax.f32 %v2397, 0.0
    %v2654 = vmax.f32 %v2398, 0.0
    %v2655 = vmax.f32 %v2399, 0.0
    %v2656 = vmax.f32 %v2400, 0.0
    %v2657 = vmax.f32 %v2401, 0.0
    %v2658 = vmax.f32 %v2402, 0.0
    %v2659 = vmax.f32 %v2403, 0.0
    %v2660 = vmax.f32 %v2404, 0.0
    %v2661 = vmax.f32 %v2405, 0.0
    %v2662 = vmax.f32 %v2406, 0.0
    %v2663 = vmax.f32 %v2407, 0.0
    %v2664 = vmax.f32 %v2408, 0.0
    %v2665 = vmax.f32 %v2409, 0.0
    %v2666 = vmax.f32 %v2410, 0.0
    %v2667 = vmax.f32 %v2411, 0.0
    %v2668 = vmax.f32 %v2412, 0.0
    %v2669 = vmax.f32 %v2413, 0.0
    %v2670 = vmax.f32 %v2414, 0.0
    %v2671 = vmax.f32 %v2415, 0.0
    %v2672 = vmax.f32 %v2416, 0.0
    %v2673 = vmax.f32 %v2417, 0.0
    %v2674 = vmax.f32 %v2418, 0.0
    %v2675 = vmax.f32 %v2419, 0.0
    %v2676 = vmax.f32 %v2420, 0.0
    %v2677 = vmax.f32 %v2421, 0.0
    %v2678 = vmax.f32 %v2422, 0.0
    %v2679 = vmax.f32 %v2423, 0.0
    %v2680 = vmax.f32 %v2424, 0.0
    %v2681 = vmax.f32 %v2425, 0.0
    %v2682 = vmax.f32 %v2426, 0.0
    %v2683 = vmax.f32 %v2427, 0.0
    %v2684 = vmax.f32 %v2428, 0.0
    %v2685 = vmax.f32 %v2429, 0.0
    %v2686 = vmax.f32 %v2430, 0.0
    %v2687 = vmax.f32 %v2431, 0.0
    %v2688 = vmax.f32 %v2432, 0.0
    %v2689 = vmax.f32 %v2433, 0.0
    %v2690 = vmax.f32 %v2434, 0.0
    %v2691 = vmax.f32 %v2435, 0.0
    %v2692 = vmax.f32 %v2436, 0.0
    %v2693 = vmax.f32 %v2437, 0.0
    %v2694 = vmax.f32 %v2438, 0.0
    %v2695 = vmax.f32 %v2439, 0.0
    %v2696 = vmax.f32 %v2440, 0.0
    %v2697 = vmax.f32 %v2441, 0.0
    %v2698 = vmax.f32 %v2442, 0.0
    %v2699 = vmax.f32 %v2443, 0.0
    %v2700 = vmax.f32 %v2444, 0.0
    %v2701 = vmax.f32 %v2445, 0.0
    %v2702 = vmax.f32 %v2446, 0.0
    %v2703 = vmax.f32 %v2447, 0.0
    %v2704 = vmax.f32 %v2448, 0.0
    %v2705 = vmax.f32 %v2449, 0.0
    %v2706 = vmax.f32 %v2450, 0.0
    %v2707 = vmax.f32 %v2451, 0.0
    %v2708 = vmax.f32 %v2452, 0.0
    %v2709 = vmax.f32 %v2453, 0.0
    %v2710 = vmax.f32 %v2454, 0.0
    %v2711 = vmax.f32 %v2455, 0.0
    %v2712 = vmax.f32 %v2456, 0.0
    %v2713 = vmax.f32 %v2457, 0.0
    %v2714 = vmax.f32 %v2458, 0.0
    %v2715 = vmax.f32 %v2459, 0.0
    %v2716 = vmax.f32 %v2460, 0.0
    %v2717 = vmax.f32 %v2461, 0.0
    %v2718 = vmax.f32 %v2462, 0.0
    %v2719 = vmax.f32 %v2463, 0.0
    %v2720 = vmax.f32 %v2464, 0.0
    %v2721 = vmax.f32 %v2465, 0.0
    %v2722 = vmax.f32 %v2466, 0.0
    %v2723 = vmax.f32 %v2467, 0.0
    %v2724 = vmax.f32 %v2468, 0.0
    %v2725 = vmax.f32 %v2469, 0.0
    %v2726 = vmax.f32 %v2470, 0.0
    %v2727 = vmax.f32 %v2471, 0.0
    %v2728 = vmax.f32 %v2472, 0.0
    %v2729 = vmax.f32 %v2473, 0.0
    %v2730 = vmax.f32 %v2474, 0.0
    %v2731 = vmax.f32 %v2475, 0.0
    %v2732 = vmax.f32 %v2476, 0.0
    %v2733 = vmax.f32 %v2477, 0.0
    %v2734 = vmax.f32 %v2478, 0.0
    %v2735 = vmax.f32 %v2479, 0.0
    %v2736 = vmax.f32 %v2480, 0.0
    %v2737 = vmax.f32 %v2481, 0.0
    %v2738 = vmax.f32 %v2482, 0.0
    %v2739 = vmax.f32 %v2483, 0.0
    %v2740 = vmax.f32 %v2484, 0.0
    %v2741 = vmax.f32 %v2485, 0.0
    %v2742 = vmax.f32 %v2486, 0.0
    %v2743 = vmax.f32 %v2487, 0.0
    %v2744 = vmax.f32 %v2488, 0.0
    %v2745 = vmax.f32 %v2489, 0.0
    %v2746 = vmax.f32 %v2490, 0.0
    %v2747 = vmax.f32 %v2491, 0.0
    %v2748 = vmax.f32 %v2492, 0.0
    %v2749 = vmax.f32 %v2493, 0.0
    %v2750 = vmax.f32 %v2494, 0.0
    %v2751 = vmax.f32 %v2495, 0.0
    %v2752 = vmax.f32 %v2496, 0.0
    %v2753 = vmax.f32 %v2497, 0.0
    %v2754 = vmax.f32 %v2498, 0.0
    %v2755 = vmax.f32 %v2499, 0.0
    %v2756 = vmax.f32 %v2500, 0.0
    %v2757 = vmax.f32 %v2501, 0.0
    %v2758 = vmax.f32 %v2502, 0.0
    %v2759 = vmax.f32 %v2503, 0.0
    %v2760 = vmax.f32 %v2504, 0.0
    %v2761 = vmax.f32 %v2505, 0.0
    %v2762 = vmax.f32 %v2506, 0.0
    %v2763 = vmax.f32 %v2507, 0.0
    %v2764 = vmax.f32 %v2508, 0.0
    %v2765 = vmax.f32 %v2509, 0.0
    %v2766 = vmax.f32 %v2510, 0.0
    %v2767 = vmax.f32 %v2511, 0.0
    %v2768 = vmax.f32 %v2512, 0.0
    %v2769 = vmax.f32 %v2513, 0.0
    %v2770 = vmax.f32 %v2514, 0.0
    %v2771 = vmax.f32 %v2515, 0.0
    %v2772 = vmax.f32 %v2516, 0.0
    %v2773 = vmax.f32 %v2517, 0.0
    %v2774 = vmax.f32 %v2518, 0.0
    %v2775 = vmax.f32 %v2519, 0.0
    %v2776 = vmax.f32 %v2520, 0.0
    %v2777 = vmax.f32 %v2521, 0.0
    %v2778 = vmax.f32 %v2522, 0.0
    %v2779 = vmax.f32 %v2523, 0.0
    %v2780 = vmax.f32 %v2524, 0.0
    %v2781 = vmax.f32 %v2525, 0.0
    %v2782 = vmax.f32 %v2526, 0.0
    %v2783 = vmax.f32 %v2527, 0.0
    %v2784 = vmax.f32 %v2528, 0.0
    %v2785 = vmax.f32 %v2529, 0.0
    %v2786 = vmax.f32 %v2530, 0.0
    %v2787 = vmax.f32 %v2531, 0.0
    %v2788 = vmax.f32 %v2532, 0.0
    %v2789 = vmax.f32 %v2533, 0.0
    %v2790 = vmax.f32 %v2534, 0.0
    %v2791 = vmax.f32 %v2535, 0.0
    %v2792 = vmax.f32 %v2536, 0.0
    %v2793 = vmax.f32 %v2537, 0.0
    %v2794 = vmax.f32 %v2538, 0.0
    %v2795 = vmax.f32 %v2539, 0.0
    %v2796 = vmax.f32 %v2540, 0.0
    %v2797 = vmax.f32 %v2541, 0.0
    %v2798 = vmax.f32 %v2542, 0.0
    %v2799 = vmax.f32 %v2543, 0.0
    %v2800 = vmax.f32 %v2544, 0.0
    %v2801 = vmax.f32 %v2545, 0.0
    %v2802 = vmax.f32 %v2546, 0.0
    %v2803 = vmax.f32 %v2547, 0.0
    %v2804 = vmax.f32 %v2548, 0.0
    %v2805 = vmax.f32 %v2549, 0.0
    %v2806 = vmax.f32 %v2550, 0.0
    %v2807 = vmax.f32 %v2551, 0.0
    %v2808 = vmax.f32 %v2552, 0.0
    %v2809 = vmax.f32 %v2553, 0.0
    %v2810 = vmax.f32 %v2554, 0.0
    %v2811 = vmax.f32 %v2555, 0.0
    %v2812 = vmax.f32 %v2556, 0.0
    %v2813 = vmax.f32 %v2557, 0.0
    %v2814 = vmax.f32 %v2558, 0.0
    %v2815 = vmax.f32 %v2559, 0.0
    %v2816 = vmax.f32 %v2560, 0.0
    %v2817 = vmax.f32 %v2561, 0.0
    %v2818 = vmax.f32 %v2562, 0.0
    %v2819 = vmax.f32 %v2563, 0.0
    %v2820 = vmax.f32 %v2564, 0.0
    %v2821 = vmax.f32 %v2565, 0.0
    %v2822 = vmax.f32 %v2566, 0.0
    %v2823 = vmax.f32 %v2567, 0.0
    %v2824 = vmax.f32 %v2568, 0.0
    %v2825 = vmax.f32 %v2569, 0.0
    %v2826 = vmax.f32 %v2570, 0.0
    %v2827 = vmax.f32 %v2571, 0.0
    %v2828 = vmax.f32 %v2572, 0.0
    %v2829 = vmax.f32 %v2573, 0.0
    %v2830 = vmax.f32 %v2574, 0.0
    %v2831 = vmax.f32 %v2575, 0.0
    %v2832 = vmax.f32 %v2576, 0.0
    %v2833 = vmax.f32 %v2577, 0.0
    %v2834 = vmax.f32 %v2578, 0.0
    %v2835 = vmax.f32 %v2579, 0.0
    %v2836 = vmax.f32 %v2580, 0.0
    %v2837 = vmax.f32 %v2581, 0.0
    %v2838 = vld [vmem:[%s5] sm:$0x1]
    %v2840 = vperm.slane %v2838, 0
    %v2842 = vmul.f32 %v2582, %v2840
    %v2843 = vmul.f32 %v2583, %v2840
    %v2844 = vmul.f32 %v2584, %v2840
    %v2845 = vmul.f32 %v2585, %v2840
    %v2846 = vmul.f32 %v2586, %v2840
    %v2847 = vmul.f32 %v2587, %v2840
    %v2848 = vmul.f32 %v2588, %v2840
    %v2849 = vmul.f32 %v2589, %v2840
    %v2850 = vmul.f32 %v2590, %v2840
    %v2851 = vmul.f32 %v2591, %v2840
    %v2852 = vmul.f32 %v2592, %v2840
    %v2853 = vmul.f32 %v2593, %v2840
    %v2854 = vmul.f32 %v2594, %v2840
    %v2855 = vmul.f32 %v2595, %v2840
    %v2856 = vmul.f32 %v2596, %v2840
    %v2857 = vmul.f32 %v2597, %v2840
    %v2858 = vmul.f32 %v2598, %v2840
    %v2859 = vmul.f32 %v2599, %v2840
    %v2860 = vmul.f32 %v2600, %v2840
    %v2861 = vmul.f32 %v2601, %v2840
    %v2862 = vmul.f32 %v2602, %v2840
    %v2863 = vmul.f32 %v2603, %v2840
    %v2864 = vmul.f32 %v2604, %v2840
    %v2865 = vmul.f32 %v2605, %v2840
    %v2866 = vmul.f32 %v2606, %v2840
    %v2867 = vmul.f32 %v2607, %v2840
    %v2868 = vmul.f32 %v2608, %v2840
    %v2869 = vmul.f32 %v2609, %v2840
    %v2870 = vmul.f32 %v2610, %v2840
    %v2871 = vmul.f32 %v2611, %v2840
    %v2872 = vmul.f32 %v2612, %v2840
    %v2873 = vmul.f32 %v2613, %v2840
    %v2874 = vmul.f32 %v2614, %v2840
    %v2875 = vmul.f32 %v2615, %v2840
    %v2876 = vmul.f32 %v2616, %v2840
    %v2877 = vmul.f32 %v2617, %v2840
    %v2878 = vmul.f32 %v2618, %v2840
    %v2879 = vmul.f32 %v2619, %v2840
    %v2880 = vmul.f32 %v2620, %v2840
    %v2881 = vmul.f32 %v2621, %v2840
    %v2882 = vmul.f32 %v2622, %v2840
    %v2883 = vmul.f32 %v2623, %v2840
    %v2884 = vmul.f32 %v2624, %v2840
    %v2885 = vmul.f32 %v2625, %v2840
    %v2886 = vmul.f32 %v2626, %v2840
    %v2887 = vmul.f32 %v2627, %v2840
    %v2888 = vmul.f32 %v2628, %v2840
    %v2889 = vmul.f32 %v2629, %v2840
    %v2890 = vmul.f32 %v2630, %v2840
    %v2891 = vmul.f32 %v2631, %v2840
    %v2892 = vmul.f32 %v2632, %v2840
    %v2893 = vmul.f32 %v2633, %v2840
    %v2894 = vmul.f32 %v2634, %v2840
    %v2895 = vmul.f32 %v2635, %v2840
    %v2896 = vmul.f32 %v2636, %v2840
    %v2897 = vmul.f32 %v2637, %v2840
    %v2898 = vmul.f32 %v2638, %v2840
    %v2899 = vmul.f32 %v2639, %v2840
    %v2900 = vmul.f32 %v2640, %v2840
    %v2901 = vmul.f32 %v2641, %v2840
    %v2902 = vmul.f32 %v2642, %v2840
    %v2903 = vmul.f32 %v2643, %v2840
    %v2904 = vmul.f32 %v2644, %v2840
    %v2905 = vmul.f32 %v2645, %v2840
    %v2906 = vmul.f32 %v2646, %v2840
    %v2907 = vmul.f32 %v2647, %v2840
    %v2908 = vmul.f32 %v2648, %v2840
    %v2909 = vmul.f32 %v2649, %v2840
    %v2910 = vmul.f32 %v2650, %v2840
    %v2911 = vmul.f32 %v2651, %v2840
    %v2912 = vmul.f32 %v2652, %v2840
    %v2913 = vmul.f32 %v2653, %v2840
    %v2914 = vmul.f32 %v2654, %v2840
    %v2915 = vmul.f32 %v2655, %v2840
    %v2916 = vmul.f32 %v2656, %v2840
    %v2917 = vmul.f32 %v2657, %v2840
    %v2918 = vmul.f32 %v2658, %v2840
    %v2919 = vmul.f32 %v2659, %v2840
    %v2920 = vmul.f32 %v2660, %v2840
    %v2921 = vmul.f32 %v2661, %v2840
    %v2922 = vmul.f32 %v2662, %v2840
    %v2923 = vmul.f32 %v2663, %v2840
    %v2924 = vmul.f32 %v2664, %v2840
    %v2925 = vmul.f32 %v2665, %v2840
    %v2926 = vmul.f32 %v2666, %v2840
    %v2927 = vmul.f32 %v2667, %v2840
    %v2928 = vmul.f32 %v2668, %v2840
    %v2929 = vmul.f32 %v2669, %v2840
    %v2930 = vmul.f32 %v2670, %v2840
    %v2931 = vmul.f32 %v2671, %v2840
    %v2932 = vmul.f32 %v2672, %v2840
    %v2933 = vmul.f32 %v2673, %v2840
    %v2934 = vmul.f32 %v2674, %v2840
    %v2935 = vmul.f32 %v2675, %v2840
    %v2936 = vmul.f32 %v2676, %v2840
    %v2937 = vmul.f32 %v2677, %v2840
    %v2938 = vmul.f32 %v2678, %v2840
    %v2939 = vmul.f32 %v2679, %v2840
    %v2940 = vmul.f32 %v2680, %v2840
    %v2941 = vmul.f32 %v2681, %v2840
    %v2942 = vmul.f32 %v2682, %v2840
    %v2943 = vmul.f32 %v2683, %v2840
    %v2944 = vmul.f32 %v2684, %v2840
    %v2945 = vmul.f32 %v2685, %v2840
    %v2946 = vmul.f32 %v2686, %v2840
    %v2947 = vmul.f32 %v2687, %v2840
    %v2948 = vmul.f32 %v2688, %v2840
    %v2949 = vmul.f32 %v2689, %v2840
    %v2950 = vmul.f32 %v2690, %v2840
    %v2951 = vmul.f32 %v2691, %v2840
    %v2952 = vmul.f32 %v2692, %v2840
    %v2953 = vmul.f32 %v2693, %v2840
    %v2954 = vmul.f32 %v2694, %v2840
    %v2955 = vmul.f32 %v2695, %v2840
    %v2956 = vmul.f32 %v2696, %v2840
    %v2957 = vmul.f32 %v2697, %v2840
    %v2958 = vmul.f32 %v2698, %v2840
    %v2959 = vmul.f32 %v2699, %v2840
    %v2960 = vmul.f32 %v2700, %v2840
    %v2961 = vmul.f32 %v2701, %v2840
    %v2962 = vmul.f32 %v2702, %v2840
    %v2963 = vmul.f32 %v2703, %v2840
    %v2964 = vmul.f32 %v2704, %v2840
    %v2965 = vmul.f32 %v2705, %v2840
    %v2966 = vmul.f32 %v2706, %v2840
    %v2967 = vmul.f32 %v2707, %v2840
    %v2968 = vmul.f32 %v2708, %v2840
    %v2969 = vmul.f32 %v2709, %v2840
    %v2970 = vmul.f32 %v2710, %v2840
    %v2971 = vmul.f32 %v2711, %v2840
    %v2972 = vmul.f32 %v2712, %v2840
    %v2973 = vmul.f32 %v2713, %v2840
    %v2974 = vmul.f32 %v2714, %v2840
    %v2975 = vmul.f32 %v2715, %v2840
    %v2976 = vmul.f32 %v2716, %v2840
    %v2977 = vmul.f32 %v2717, %v2840
    %v2978 = vmul.f32 %v2718, %v2840
    %v2979 = vmul.f32 %v2719, %v2840
    %v2980 = vmul.f32 %v2720, %v2840
    %v2981 = vmul.f32 %v2721, %v2840
    %v2982 = vmul.f32 %v2722, %v2840
    %v2983 = vmul.f32 %v2723, %v2840
    %v2984 = vmul.f32 %v2724, %v2840
    %v2985 = vmul.f32 %v2725, %v2840
    %v2986 = vmul.f32 %v2726, %v2840
    %v2987 = vmul.f32 %v2727, %v2840
    %v2988 = vmul.f32 %v2728, %v2840
    %v2989 = vmul.f32 %v2729, %v2840
    %v2990 = vmul.f32 %v2730, %v2840
    %v2991 = vmul.f32 %v2731, %v2840
    %v2992 = vmul.f32 %v2732, %v2840
    %v2993 = vmul.f32 %v2733, %v2840
    %v2994 = vmul.f32 %v2734, %v2840
    %v2995 = vmul.f32 %v2735, %v2840
    %v2996 = vmul.f32 %v2736, %v2840
    %v2997 = vmul.f32 %v2737, %v2840
    %v2998 = vmul.f32 %v2738, %v2840
    %v2999 = vmul.f32 %v2739, %v2840
    %v3000 = vmul.f32 %v2740, %v2840
    %v3001 = vmul.f32 %v2741, %v2840
    %v3002 = vmul.f32 %v2742, %v2840
    %v3003 = vmul.f32 %v2743, %v2840
    %v3004 = vmul.f32 %v2744, %v2840
    %v3005 = vmul.f32 %v2745, %v2840
    %v3006 = vmul.f32 %v2746, %v2840
    %v3007 = vmul.f32 %v2747, %v2840
    %v3008 = vmul.f32 %v2748, %v2840
    %v3009 = vmul.f32 %v2749, %v2840
    %v3010 = vmul.f32 %v2750, %v2840
    %v3011 = vmul.f32 %v2751, %v2840
    %v3012 = vmul.f32 %v2752, %v2840
    %v3013 = vmul.f32 %v2753, %v2840
    %v3014 = vmul.f32 %v2754, %v2840
    %v3015 = vmul.f32 %v2755, %v2840
    %v3016 = vmul.f32 %v2756, %v2840
    %v3017 = vmul.f32 %v2757, %v2840
    %v3018 = vmul.f32 %v2758, %v2840
    %v3019 = vmul.f32 %v2759, %v2840
    %v3020 = vmul.f32 %v2760, %v2840
    %v3021 = vmul.f32 %v2761, %v2840
    %v3022 = vmul.f32 %v2762, %v2840
    %v3023 = vmul.f32 %v2763, %v2840
    %v3024 = vmul.f32 %v2764, %v2840
    %v3025 = vmul.f32 %v2765, %v2840
    %v3026 = vmul.f32 %v2766, %v2840
    %v3027 = vmul.f32 %v2767, %v2840
    %v3028 = vmul.f32 %v2768, %v2840
    %v3029 = vmul.f32 %v2769, %v2840
    %v3030 = vmul.f32 %v2770, %v2840
    %v3031 = vmul.f32 %v2771, %v2840
    %v3032 = vmul.f32 %v2772, %v2840
    %v3033 = vmul.f32 %v2773, %v2840
    %v3034 = vmul.f32 %v2774, %v2840
    %v3035 = vmul.f32 %v2775, %v2840
    %v3036 = vmul.f32 %v2776, %v2840
    %v3037 = vmul.f32 %v2777, %v2840
    %v3038 = vmul.f32 %v2778, %v2840
    %v3039 = vmul.f32 %v2779, %v2840
    %v3040 = vmul.f32 %v2780, %v2840
    %v3041 = vmul.f32 %v2781, %v2840
    %v3042 = vmul.f32 %v2782, %v2840
    %v3043 = vmul.f32 %v2783, %v2840
    %v3044 = vmul.f32 %v2784, %v2840
    %v3045 = vmul.f32 %v2785, %v2840
    %v3046 = vmul.f32 %v2786, %v2840
    %v3047 = vmul.f32 %v2787, %v2840
    %v3048 = vmul.f32 %v2788, %v2840
    %v3049 = vmul.f32 %v2789, %v2840
    %v3050 = vmul.f32 %v2790, %v2840
    %v3051 = vmul.f32 %v2791, %v2840
    %v3052 = vmul.f32 %v2792, %v2840
    %v3053 = vmul.f32 %v2793, %v2840
    %v3054 = vmul.f32 %v2794, %v2840
    %v3055 = vmul.f32 %v2795, %v2840
    %v3056 = vmul.f32 %v2796, %v2840
    %v3057 = vmul.f32 %v2797, %v2840
    %v3058 = vmul.f32 %v2798, %v2840
    %v3059 = vmul.f32 %v2799, %v2840
    %v3060 = vmul.f32 %v2800, %v2840
    %v3061 = vmul.f32 %v2801, %v2840
    %v3062 = vmul.f32 %v2802, %v2840
    %v3063 = vmul.f32 %v2803, %v2840
    %v3064 = vmul.f32 %v2804, %v2840
    %v3065 = vmul.f32 %v2805, %v2840
    %v3066 = vmul.f32 %v2806, %v2840
    %v3067 = vmul.f32 %v2807, %v2840
    %v3068 = vmul.f32 %v2808, %v2840
    %v3069 = vmul.f32 %v2809, %v2840
    %v3070 = vmul.f32 %v2810, %v2840
    %v3071 = vmul.f32 %v2811, %v2840
    %v3072 = vmul.f32 %v2812, %v2840
    %v3073 = vmul.f32 %v2813, %v2840
    %v3074 = vmul.f32 %v2814, %v2840
    %v3075 = vmul.f32 %v2815, %v2840
    %v3076 = vmul.f32 %v2816, %v2840
    %v3077 = vmul.f32 %v2817, %v2840
    %v3078 = vmul.f32 %v2818, %v2840
    %v3079 = vmul.f32 %v2819, %v2840
    %v3080 = vmul.f32 %v2820, %v2840
    %v3081 = vmul.f32 %v2821, %v2840
    %v3082 = vmul.f32 %v2822, %v2840
    %v3083 = vmul.f32 %v2823, %v2840
    %v3084 = vmul.f32 %v2824, %v2840
    %v3085 = vmul.f32 %v2825, %v2840
    %v3086 = vmul.f32 %v2826, %v2840
    %v3087 = vmul.f32 %v2827, %v2840
    %v3088 = vmul.f32 %v2828, %v2840
    %v3089 = vmul.f32 %v2829, %v2840
    %v3090 = vmul.f32 %v2830, %v2840
    %v3091 = vmul.f32 %v2831, %v2840
    %v3092 = vmul.f32 %v2832, %v2840
    %v3093 = vmul.f32 %v2833, %v2840
    %v3094 = vmul.f32 %v2834, %v2840
    %v3095 = vmul.f32 %v2835, %v2840
    %v3096 = vmul.f32 %v2836, %v2840
    %v3097 = vmul.f32 %v2837, %v2840
    %v3098 = vsel %vm944, %v2842, 0.0
    %3099 = vadd.xlane.f32.xlu0 %v3098
    %v3100 = vpop.xlane.xlu0 %3099
    %v3101 = vsel %vm944, %v2843, 0.0
    %3102 = vadd.xlane.f32.xlu0 %v3101
    %v3103 = vpop.xlane.xlu0 %3102
    %v3104 = vsel %vm944, %v2844, 0.0
    %3105 = vadd.xlane.f32.xlu0 %v3104
    %v3106 = vpop.xlane.xlu0 %3105
    %v3107 = vsel %vm944, %v2845, 0.0
    %3108 = vadd.xlane.f32.xlu0 %v3107
    %v3109 = vpop.xlane.xlu0 %3108
    %v3110 = vsel %vm944, %v2846, 0.0
    %3111 = vadd.xlane.f32.xlu0 %v3110
    %v3112 = vpop.xlane.xlu0 %3111
    %v3113 = vsel %vm944, %v2847, 0.0
    %3114 = vadd.xlane.f32.xlu0 %v3113
    %v3115 = vpop.xlane.xlu0 %3114
    %v3116 = vsel %vm944, %v2848, 0.0
    %3117 = vadd.xlane.f32.xlu0 %v3116
    %v3118 = vpop.xlane.xlu0 %3117
    %v3119 = vsel %vm944, %v2849, 0.0
    %3120 = vadd.xlane.f32.xlu0 %v3119
    %v3121 = vpop.xlane.xlu0 %3120
    %v3122 = vsel %vm944, %v2850, 0.0
    %3123 = vadd.xlane.f32.xlu0 %v3122
    %v3124 = vpop.xlane.xlu0 %3123
    %v3125 = vsel %vm944, %v2851, 0.0
    %3126 = vadd.xlane.f32.xlu0 %v3125
    %v3127 = vpop.xlane.xlu0 %3126
    %v3128 = vsel %vm944, %v2852, 0.0
    %3129 = vadd.xlane.f32.xlu0 %v3128
    %v3130 = vpop.xlane.xlu0 %3129
    %v3131 = vsel %vm944, %v2853, 0.0
    %3132 = vadd.xlane.f32.xlu0 %v3131
    %v3133 = vpop.xlane.xlu0 %3132
    %v3134 = vsel %vm944, %v2854, 0.0
    %3135 = vadd.xlane.f32.xlu0 %v3134
    %v3136 = vpop.xlane.xlu0 %3135
    %v3137 = vsel %vm944, %v2855, 0.0
    %3138 = vadd.xlane.f32.xlu0 %v3137
    %v3139 = vpop.xlane.xlu0 %3138
    %v3140 = vsel %vm944, %v2856, 0.0
    %3141 = vadd.xlane.f32.xlu0 %v3140
    %v3142 = vpop.xlane.xlu0 %3141
    %v3143 = vsel %vm944, %v2857, 0.0
    %3144 = vadd.xlane.f32.xlu0 %v3143
    %v3145 = vpop.xlane.xlu0 %3144
    %v3146 = vsel %vm944, %v2858, 0.0
    %3147 = vadd.xlane.f32.xlu0 %v3146
    %v3148 = vpop.xlane.xlu0 %3147
    %v3149 = vsel %vm944, %v2859, 0.0
    %3150 = vadd.xlane.f32.xlu0 %v3149
    %v3151 = vpop.xlane.xlu0 %3150
    %v3152 = vsel %vm944, %v2860, 0.0
    %3153 = vadd.xlane.f32.xlu0 %v3152
    %v3154 = vpop.xlane.xlu0 %3153
    %v3155 = vsel %vm944, %v2861, 0.0
    %3156 = vadd.xlane.f32.xlu0 %v3155
    %v3157 = vpop.xlane.xlu0 %3156
    %v3158 = vsel %vm944, %v2862, 0.0
    %3159 = vadd.xlane.f32.xlu0 %v3158
    %v3160 = vpop.xlane.xlu0 %3159
    %v3161 = vsel %vm944, %v2863, 0.0
    %3162 = vadd.xlane.f32.xlu0 %v3161
    %v3163 = vpop.xlane.xlu0 %3162
    %v3164 = vsel %vm944, %v2864, 0.0
    %3165 = vadd.xlane.f32.xlu0 %v3164
    %v3166 = vpop.xlane.xlu0 %3165
    %v3167 = vsel %vm944, %v2865, 0.0
    %3168 = vadd.xlane.f32.xlu0 %v3167
    %v3169 = vpop.xlane.xlu0 %3168
    %v3170 = vsel %vm944, %v2866, 0.0
    %3171 = vadd.xlane.f32.xlu0 %v3170
    %v3172 = vpop.xlane.xlu0 %3171
    %v3173 = vsel %vm944, %v2867, 0.0
    %3174 = vadd.xlane.f32.xlu0 %v3173
    %v3175 = vpop.xlane.xlu0 %3174
    %v3176 = vsel %vm944, %v2868, 0.0
    %3177 = vadd.xlane.f32.xlu0 %v3176
    %v3178 = vpop.xlane.xlu0 %3177
    %v3179 = vsel %vm944, %v2869, 0.0
    %3180 = vadd.xlane.f32.xlu0 %v3179
    %v3181 = vpop.xlane.xlu0 %3180
    %v3182 = vsel %vm944, %v2870, 0.0
    %3183 = vadd.xlane.f32.xlu0 %v3182
    %v3184 = vpop.xlane.xlu0 %3183
    %v3185 = vsel %vm944, %v2871, 0.0
    %3186 = vadd.xlane.f32.xlu0 %v3185
    %v3187 = vpop.xlane.xlu0 %3186
    %v3188 = vsel %vm944, %v2872, 0.0
    %3189 = vadd.xlane.f32.xlu0 %v3188
    %v3190 = vpop.xlane.xlu0 %3189
    %v3191 = vsel %vm944, %v2873, 0.0
    %3192 = vadd.xlane.f32.xlu0 %v3191
    %v3193 = vpop.xlane.xlu0 %3192
    %v3194 = vsel %vm944, %v2874, 0.0
    %3195 = vadd.xlane.f32.xlu0 %v3194
    %v3196 = vpop.xlane.xlu0 %3195
    %v3197 = vsel %vm944, %v2875, 0.0
    %3198 = vadd.xlane.f32.xlu0 %v3197
    %v3199 = vpop.xlane.xlu0 %3198
    %v3200 = vsel %vm944, %v2876, 0.0
    %3201 = vadd.xlane.f32.xlu0 %v3200
    %v3202 = vpop.xlane.xlu0 %3201
    %v3203 = vsel %vm944, %v2877, 0.0
    %3204 = vadd.xlane.f32.xlu0 %v3203
    %v3205 = vpop.xlane.xlu0 %3204
    %v3206 = vsel %vm944, %v2878, 0.0
    %3207 = vadd.xlane.f32.xlu0 %v3206
    %v3208 = vpop.xlane.xlu0 %3207
    %v3209 = vsel %vm944, %v2879, 0.0
    %3210 = vadd.xlane.f32.xlu0 %v3209
    %v3211 = vpop.xlane.xlu0 %3210
    %v3212 = vsel %vm944, %v2880, 0.0
    %3213 = vadd.xlane.f32.xlu0 %v3212
    %v3214 = vpop.xlane.xlu0 %3213
    %v3215 = vsel %vm944, %v2881, 0.0
    %3216 = vadd.xlane.f32.xlu0 %v3215
    %v3217 = vpop.xlane.xlu0 %3216
    %v3218 = vsel %vm944, %v2882, 0.0
    %3219 = vadd.xlane.f32.xlu0 %v3218
    %v3220 = vpop.xlane.xlu0 %3219
    %v3221 = vsel %vm944, %v2883, 0.0
    %3222 = vadd.xlane.f32.xlu0 %v3221
    %v3223 = vpop.xlane.xlu0 %3222
    %v3224 = vsel %vm944, %v2884, 0.0
    %3225 = vadd.xlane.f32.xlu0 %v3224
    %v3226 = vpop.xlane.xlu0 %3225
    %v3227 = vsel %vm944, %v2885, 0.0
    %3228 = vadd.xlane.f32.xlu0 %v3227
    %v3229 = vpop.xlane.xlu0 %3228
    %v3230 = vsel %vm944, %v2886, 0.0
    %3231 = vadd.xlane.f32.xlu0 %v3230
    %v3232 = vpop.xlane.xlu0 %3231
    %v3233 = vsel %vm944, %v2887, 0.0
    %3234 = vadd.xlane.f32.xlu0 %v3233
    %v3235 = vpop.xlane.xlu0 %3234
    %v3236 = vsel %vm944, %v2888, 0.0
    %3237 = vadd.xlane.f32.xlu0 %v3236
    %v3238 = vpop.xlane.xlu0 %3237
    %v3239 = vsel %vm944, %v2889, 0.0
    %3240 = vadd.xlane.f32.xlu0 %v3239
    %v3241 = vpop.xlane.xlu0 %3240
    %v3242 = vsel %vm944, %v2890, 0.0
    %3243 = vadd.xlane.f32.xlu0 %v3242
    %v3244 = vpop.xlane.xlu0 %3243
    %v3245 = vsel %vm944, %v2891, 0.0
    %3246 = vadd.xlane.f32.xlu0 %v3245
    %v3247 = vpop.xlane.xlu0 %3246
    %v3248 = vsel %vm944, %v2892, 0.0
    %3249 = vadd.xlane.f32.xlu0 %v3248
    %v3250 = vpop.xlane.xlu0 %3249
    %v3251 = vsel %vm944, %v2893, 0.0
    %3252 = vadd.xlane.f32.xlu0 %v3251
    %v3253 = vpop.xlane.xlu0 %3252
    %v3254 = vsel %vm944, %v2894, 0.0
    %3255 = vadd.xlane.f32.xlu0 %v3254
    %v3256 = vpop.xlane.xlu0 %3255
    %v3257 = vsel %vm944, %v2895, 0.0
    %3258 = vadd.xlane.f32.xlu0 %v3257
    %v3259 = vpop.xlane.xlu0 %3258
    %v3260 = vsel %vm944, %v2896, 0.0
    %3261 = vadd.xlane.f32.xlu0 %v3260
    %v3262 = vpop.xlane.xlu0 %3261
    %v3263 = vsel %vm944, %v2897, 0.0
    %3264 = vadd.xlane.f32.xlu0 %v3263
    %v3265 = vpop.xlane.xlu0 %3264
    %v3266 = vsel %vm944, %v2898, 0.0
    %3267 = vadd.xlane.f32.xlu0 %v3266
    %v3268 = vpop.xlane.xlu0 %3267
    %v3269 = vsel %vm944, %v2899, 0.0
    %3270 = vadd.xlane.f32.xlu0 %v3269
    %v3271 = vpop.xlane.xlu0 %3270
    %v3272 = vsel %vm944, %v2900, 0.0
    %3273 = vadd.xlane.f32.xlu0 %v3272
    %v3274 = vpop.xlane.xlu0 %3273
    %v3275 = vsel %vm944, %v2901, 0.0
    %3276 = vadd.xlane.f32.xlu0 %v3275
    %v3277 = vpop.xlane.xlu0 %3276
    %v3278 = vsel %vm944, %v2902, 0.0
    %3279 = vadd.xlane.f32.xlu0 %v3278
    %v3280 = vpop.xlane.xlu0 %3279
    %v3281 = vsel %vm944, %v2903, 0.0
    %3282 = vadd.xlane.f32.xlu0 %v3281
    %v3283 = vpop.xlane.xlu0 %3282
    %v3284 = vsel %vm944, %v2904, 0.0
    %3285 = vadd.xlane.f32.xlu0 %v3284
    %v3286 = vpop.xlane.xlu0 %3285
    %v3287 = vsel %vm944, %v2905, 0.0
    %3288 = vadd.xlane.f32.xlu0 %v3287
    %v3289 = vpop.xlane.xlu0 %3288
    %v3290 = vsel %vm944, %v2906, 0.0
    %3291 = vadd.xlane.f32.xlu0 %v3290
    %v3292 = vpop.xlane.xlu0 %3291
    %v3293 = vsel %vm944, %v2907, 0.0
    %3294 = vadd.xlane.f32.xlu0 %v3293
    %v3295 = vpop.xlane.xlu0 %3294
    %v3296 = vsel %vm944, %v2908, 0.0
    %3297 = vadd.xlane.f32.xlu0 %v3296
    %v3298 = vpop.xlane.xlu0 %3297
    %v3299 = vsel %vm944, %v2909, 0.0
    %3300 = vadd.xlane.f32.xlu0 %v3299
    %v3301 = vpop.xlane.xlu0 %3300
    %v3302 = vsel %vm944, %v2910, 0.0
    %3303 = vadd.xlane.f32.xlu0 %v3302
    %v3304 = vpop.xlane.xlu0 %3303
    %v3305 = vsel %vm944, %v2911, 0.0
    %3306 = vadd.xlane.f32.xlu0 %v3305
    %v3307 = vpop.xlane.xlu0 %3306
    %v3308 = vsel %vm944, %v2912, 0.0
    %3309 = vadd.xlane.f32.xlu0 %v3308
    %v3310 = vpop.xlane.xlu0 %3309
    %v3311 = vsel %vm944, %v2913, 0.0
    %3312 = vadd.xlane.f32.xlu0 %v3311
    %v3313 = vpop.xlane.xlu0 %3312
    %v3314 = vsel %vm944, %v2914, 0.0
    %3315 = vadd.xlane.f32.xlu0 %v3314
    %v3316 = vpop.xlane.xlu0 %3315
    %v3317 = vsel %vm944, %v2915, 0.0
    %3318 = vadd.xlane.f32.xlu0 %v3317
    %v3319 = vpop.xlane.xlu0 %3318
    %v3320 = vsel %vm944, %v2916, 0.0
    %3321 = vadd.xlane.f32.xlu0 %v3320
    %v3322 = vpop.xlane.xlu0 %3321
    %v3323 = vsel %vm944, %v2917, 0.0
    %3324 = vadd.xlane.f32.xlu0 %v3323
    %v3325 = vpop.xlane.xlu0 %3324
    %v3326 = vsel %vm944, %v2918, 0.0
    %3327 = vadd.xlane.f32.xlu0 %v3326
    %v3328 = vpop.xlane.xlu0 %3327
    %v3329 = vsel %vm944, %v2919, 0.0
    %3330 = vadd.xlane.f32.xlu0 %v3329
    %v3331 = vpop.xlane.xlu0 %3330
    %v3332 = vsel %vm944, %v2920, 0.0
    %3333 = vadd.xlane.f32.xlu0 %v3332
    %v3334 = vpop.xlane.xlu0 %3333
    %v3335 = vsel %vm944, %v2921, 0.0
    %3336 = vadd.xlane.f32.xlu0 %v3335
    %v3337 = vpop.xlane.xlu0 %3336
    %v3338 = vsel %vm944, %v2922, 0.0
    %3339 = vadd.xlane.f32.xlu0 %v3338
    %v3340 = vpop.xlane.xlu0 %3339
    %v3341 = vsel %vm944, %v2923, 0.0
    %3342 = vadd.xlane.f32.xlu0 %v3341
    %v3343 = vpop.xlane.xlu0 %3342
    %v3344 = vsel %vm944, %v2924, 0.0
    %3345 = vadd.xlane.f32.xlu0 %v3344
    %v3346 = vpop.xlane.xlu0 %3345
    %v3347 = vsel %vm944, %v2925, 0.0
    %3348 = vadd.xlane.f32.xlu0 %v3347
    %v3349 = vpop.xlane.xlu0 %3348
    %v3350 = vsel %vm944, %v2926, 0.0
    %3351 = vadd.xlane.f32.xlu0 %v3350
    %v3352 = vpop.xlane.xlu0 %3351
    %v3353 = vsel %vm944, %v2927, 0.0
    %3354 = vadd.xlane.f32.xlu0 %v3353
    %v3355 = vpop.xlane.xlu0 %3354
    %v3356 = vsel %vm944, %v2928, 0.0
    %3357 = vadd.xlane.f32.xlu0 %v3356
    %v3358 = vpop.xlane.xlu0 %3357
    %v3359 = vsel %vm944, %v2929, 0.0
    %3360 = vadd.xlane.f32.xlu0 %v3359
    %v3361 = vpop.xlane.xlu0 %3360
    %v3362 = vsel %vm944, %v2930, 0.0
    %3363 = vadd.xlane.f32.xlu0 %v3362
    %v3364 = vpop.xlane.xlu0 %3363
    %v3365 = vsel %vm944, %v2931, 0.0
    %3366 = vadd.xlane.f32.xlu0 %v3365
    %v3367 = vpop.xlane.xlu0 %3366
    %v3368 = vsel %vm944, %v2932, 0.0
    %3369 = vadd.xlane.f32.xlu0 %v3368
    %v3370 = vpop.xlane.xlu0 %3369
    %v3371 = vsel %vm944, %v2933, 0.0
    %3372 = vadd.xlane.f32.xlu0 %v3371
    %v3373 = vpop.xlane.xlu0 %3372
    %v3374 = vsel %vm944, %v2934, 0.0
    %3375 = vadd.xlane.f32.xlu0 %v3374
    %v3376 = vpop.xlane.xlu0 %3375
    %v3377 = vsel %vm944, %v2935, 0.0
    %3378 = vadd.xlane.f32.xlu0 %v3377
    %v3379 = vpop.xlane.xlu0 %3378
    %v3380 = vsel %vm944, %v2936, 0.0
    %3381 = vadd.xlane.f32.xlu0 %v3380
    %v3382 = vpop.xlane.xlu0 %3381
    %v3383 = vsel %vm944, %v2937, 0.0
    %3384 = vadd.xlane.f32.xlu0 %v3383
    %v3385 = vpop.xlane.xlu0 %3384
    %v3386 = vsel %vm944, %v2938, 0.0
    %3387 = vadd.xlane.f32.xlu0 %v3386
    %v3388 = vpop.xlane.xlu0 %3387
    %v3389 = vsel %vm944, %v2939, 0.0
    %3390 = vadd.xlane.f32.xlu0 %v3389
    %v3391 = vpop.xlane.xlu0 %3390
    %v3392 = vsel %vm944, %v2940, 0.0
    %3393 = vadd.xlane.f32.xlu0 %v3392
    %v3394 = vpop.xlane.xlu0 %3393
    %v3395 = vsel %vm944, %v2941, 0.0
    %3396 = vadd.xlane.f32.xlu0 %v3395
    %v3397 = vpop.xlane.xlu0 %3396
    %v3398 = vsel %vm944, %v2942, 0.0
    %3399 = vadd.xlane.f32.xlu0 %v3398
    %v3400 = vpop.xlane.xlu0 %3399
    %v3401 = vsel %vm944, %v2943, 0.0
    %3402 = vadd.xlane.f32.xlu0 %v3401
    %v3403 = vpop.xlane.xlu0 %3402
    %v3404 = vsel %vm944, %v2944, 0.0
    %3405 = vadd.xlane.f32.xlu0 %v3404
    %v3406 = vpop.xlane.xlu0 %3405
    %v3407 = vsel %vm944, %v2945, 0.0
    %3408 = vadd.xlane.f32.xlu0 %v3407
    %v3409 = vpop.xlane.xlu0 %3408
    %v3410 = vsel %vm944, %v2946, 0.0
    %3411 = vadd.xlane.f32.xlu0 %v3410
    %v3412 = vpop.xlane.xlu0 %3411
    %v3413 = vsel %vm944, %v2947, 0.0
    %3414 = vadd.xlane.f32.xlu0 %v3413
    %v3415 = vpop.xlane.xlu0 %3414
    %v3416 = vsel %vm944, %v2948, 0.0
    %3417 = vadd.xlane.f32.xlu0 %v3416
    %v3418 = vpop.xlane.xlu0 %3417
    %v3419 = vsel %vm944, %v2949, 0.0
    %3420 = vadd.xlane.f32.xlu0 %v3419
    %v3421 = vpop.xlane.xlu0 %3420
    %v3422 = vsel %vm944, %v2950, 0.0
    %3423 = vadd.xlane.f32.xlu0 %v3422
    %v3424 = vpop.xlane.xlu0 %3423
    %v3425 = vsel %vm944, %v2951, 0.0
    %3426 = vadd.xlane.f32.xlu0 %v3425
    %v3427 = vpop.xlane.xlu0 %3426
    %v3428 = vsel %vm944, %v2952, 0.0
    %3429 = vadd.xlane.f32.xlu0 %v3428
    %v3430 = vpop.xlane.xlu0 %3429
    %v3431 = vsel %vm944, %v2953, 0.0
    %3432 = vadd.xlane.f32.xlu0 %v3431
    %v3433 = vpop.xlane.xlu0 %3432
    %v3434 = vsel %vm944, %v2954, 0.0
    %3435 = vadd.xlane.f32.xlu0 %v3434
    %v3436 = vpop.xlane.xlu0 %3435
    %v3437 = vsel %vm944, %v2955, 0.0
    %3438 = vadd.xlane.f32.xlu0 %v3437
    %v3439 = vpop.xlane.xlu0 %3438
    %v3440 = vsel %vm944, %v2956, 0.0
    %3441 = vadd.xlane.f32.xlu0 %v3440
    %v3442 = vpop.xlane.xlu0 %3441
    %v3443 = vsel %vm944, %v2957, 0.0
    %3444 = vadd.xlane.f32.xlu0 %v3443
    %v3445 = vpop.xlane.xlu0 %3444
    %v3446 = vsel %vm944, %v2958, 0.0
    %3447 = vadd.xlane.f32.xlu0 %v3446
    %v3448 = vpop.xlane.xlu0 %3447
    %v3449 = vsel %vm944, %v2959, 0.0
    %3450 = vadd.xlane.f32.xlu0 %v3449
    %v3451 = vpop.xlane.xlu0 %3450
    %v3452 = vsel %vm944, %v2960, 0.0
    %3453 = vadd.xlane.f32.xlu0 %v3452
    %v3454 = vpop.xlane.xlu0 %3453
    %v3455 = vsel %vm944, %v2961, 0.0
    %3456 = vadd.xlane.f32.xlu0 %v3455
    %v3457 = vpop.xlane.xlu0 %3456
    %v3458 = vsel %vm944, %v2962, 0.0
    %3459 = vadd.xlane.f32.xlu0 %v3458
    %v3460 = vpop.xlane.xlu0 %3459
    %v3461 = vsel %vm944, %v2963, 0.0
    %3462 = vadd.xlane.f32.xlu0 %v3461
    %v3463 = vpop.xlane.xlu0 %3462
    %v3464 = vsel %vm944, %v2964, 0.0
    %3465 = vadd.xlane.f32.xlu0 %v3464
    %v3466 = vpop.xlane.xlu0 %3465
    %v3467 = vsel %vm944, %v2965, 0.0
    %3468 = vadd.xlane.f32.xlu0 %v3467
    %v3469 = vpop.xlane.xlu0 %3468
    %v3470 = vsel %vm944, %v2966, 0.0
    %3471 = vadd.xlane.f32.xlu0 %v3470
    %v3472 = vpop.xlane.xlu0 %3471
    %v3473 = vsel %vm944, %v2967, 0.0
    %3474 = vadd.xlane.f32.xlu0 %v3473
    %v3475 = vpop.xlane.xlu0 %3474
    %v3476 = vsel %vm944, %v2968, 0.0
    %3477 = vadd.xlane.f32.xlu0 %v3476
    %v3478 = vpop.xlane.xlu0 %3477
    %v3479 = vsel %vm944, %v2969, 0.0
    %3480 = vadd.xlane.f32.xlu0 %v3479
    %v3481 = vpop.xlane.xlu0 %3480
    %v3482 = vsel %vm944, %v2970, 0.0
    %3483 = vadd.xlane.f32.xlu0 %v3482
    %v3484 = vpop.xlane.xlu0 %3483
    %v3485 = vsel %vm944, %v2971, 0.0
    %3486 = vadd.xlane.f32.xlu0 %v3485
    %v3487 = vpop.xlane.xlu0 %3486
    %v3488 = vsel %vm944, %v2972, 0.0
    %3489 = vadd.xlane.f32.xlu0 %v3488
    %v3490 = vpop.xlane.xlu0 %3489
    %v3491 = vsel %vm944, %v2973, 0.0
    %3492 = vadd.xlane.f32.xlu0 %v3491
    %v3493 = vpop.xlane.xlu0 %3492
    %v3494 = vsel %vm944, %v2974, 0.0
    %3495 = vadd.xlane.f32.xlu0 %v3494
    %v3496 = vpop.xlane.xlu0 %3495
    %v3497 = vsel %vm944, %v2975, 0.0
    %3498 = vadd.xlane.f32.xlu0 %v3497
    %v3499 = vpop.xlane.xlu0 %3498
    %v3500 = vsel %vm944, %v2976, 0.0
    %3501 = vadd.xlane.f32.xlu0 %v3500
    %v3502 = vpop.xlane.xlu0 %3501
    %v3503 = vsel %vm944, %v2977, 0.0
    %3504 = vadd.xlane.f32.xlu0 %v3503
    %v3505 = vpop.xlane.xlu0 %3504
    %v3506 = vsel %vm944, %v2978, 0.0
    %3507 = vadd.xlane.f32.xlu0 %v3506
    %v3508 = vpop.xlane.xlu0 %3507
    %v3509 = vsel %vm944, %v2979, 0.0
    %3510 = vadd.xlane.f32.xlu0 %v3509
    %v3511 = vpop.xlane.xlu0 %3510
    %v3512 = vsel %vm944, %v2980, 0.0
    %3513 = vadd.xlane.f32.xlu0 %v3512
    %v3514 = vpop.xlane.xlu0 %3513
    %v3515 = vsel %vm944, %v2981, 0.0
    %3516 = vadd.xlane.f32.xlu0 %v3515
    %v3517 = vpop.xlane.xlu0 %3516
    %v3518 = vsel %vm944, %v2982, 0.0
    %3519 = vadd.xlane.f32.xlu0 %v3518
    %v3520 = vpop.xlane.xlu0 %3519
    %v3521 = vsel %vm944, %v2983, 0.0
    %3522 = vadd.xlane.f32.xlu0 %v3521
    %v3523 = vpop.xlane.xlu0 %3522
    %v3524 = vsel %vm944, %v2984, 0.0
    %3525 = vadd.xlane.f32.xlu0 %v3524
    %v3526 = vpop.xlane.xlu0 %3525
    %v3527 = vsel %vm944, %v2985, 0.0
    %3528 = vadd.xlane.f32.xlu0 %v3527
    %v3529 = vpop.xlane.xlu0 %3528
    %v3530 = vsel %vm944, %v2986, 0.0
    %3531 = vadd.xlane.f32.xlu0 %v3530
    %v3532 = vpop.xlane.xlu0 %3531
    %v3533 = vsel %vm944, %v2987, 0.0
    %3534 = vadd.xlane.f32.xlu0 %v3533
    %v3535 = vpop.xlane.xlu0 %3534
    %v3536 = vsel %vm944, %v2988, 0.0
    %3537 = vadd.xlane.f32.xlu0 %v3536
    %v3538 = vpop.xlane.xlu0 %3537
    %v3539 = vsel %vm944, %v2989, 0.0
    %3540 = vadd.xlane.f32.xlu0 %v3539
    %v3541 = vpop.xlane.xlu0 %3540
    %v3542 = vsel %vm944, %v2990, 0.0
    %3543 = vadd.xlane.f32.xlu0 %v3542
    %v3544 = vpop.xlane.xlu0 %3543
    %v3545 = vsel %vm944, %v2991, 0.0
    %3546 = vadd.xlane.f32.xlu0 %v3545
    %v3547 = vpop.xlane.xlu0 %3546
    %v3548 = vsel %vm944, %v2992, 0.0
    %3549 = vadd.xlane.f32.xlu0 %v3548
    %v3550 = vpop.xlane.xlu0 %3549
    %v3551 = vsel %vm944, %v2993, 0.0
    %3552 = vadd.xlane.f32.xlu0 %v3551
    %v3553 = vpop.xlane.xlu0 %3552
    %v3554 = vsel %vm944, %v2994, 0.0
    %3555 = vadd.xlane.f32.xlu0 %v3554
    %v3556 = vpop.xlane.xlu0 %3555
    %v3557 = vsel %vm944, %v2995, 0.0
    %3558 = vadd.xlane.f32.xlu0 %v3557
    %v3559 = vpop.xlane.xlu0 %3558
    %v3560 = vsel %vm944, %v2996, 0.0
    %3561 = vadd.xlane.f32.xlu0 %v3560
    %v3562 = vpop.xlane.xlu0 %3561
    %v3563 = vsel %vm944, %v2997, 0.0
    %3564 = vadd.xlane.f32.xlu0 %v3563
    %v3565 = vpop.xlane.xlu0 %3564
    %v3566 = vsel %vm944, %v2998, 0.0
    %3567 = vadd.xlane.f32.xlu0 %v3566
    %v3568 = vpop.xlane.xlu0 %3567
    %v3569 = vsel %vm944, %v2999, 0.0
    %3570 = vadd.xlane.f32.xlu0 %v3569
    %v3571 = vpop.xlane.xlu0 %3570
    %v3572 = vsel %vm944, %v3000, 0.0
    %3573 = vadd.xlane.f32.xlu0 %v3572
    %v3574 = vpop.xlane.xlu0 %3573
    %v3575 = vsel %vm944, %v3001, 0.0
    %3576 = vadd.xlane.f32.xlu0 %v3575
    %v3577 = vpop.xlane.xlu0 %3576
    %v3578 = vsel %vm944, %v3002, 0.0
    %3579 = vadd.xlane.f32.xlu0 %v3578
    %v3580 = vpop.xlane.xlu0 %3579
    %v3581 = vsel %vm944, %v3003, 0.0
    %3582 = vadd.xlane.f32.xlu0 %v3581
    %v3583 = vpop.xlane.xlu0 %3582
    %v3584 = vsel %vm944, %v3004, 0.0
    %3585 = vadd.xlane.f32.xlu0 %v3584
    %v3586 = vpop.xlane.xlu0 %3585
    %v3587 = vsel %vm944, %v3005, 0.0
    %3588 = vadd.xlane.f32.xlu0 %v3587
    %v3589 = vpop.xlane.xlu0 %3588
    %v3590 = vsel %vm944, %v3006, 0.0
    %3591 = vadd.xlane.f32.xlu0 %v3590
    %v3592 = vpop.xlane.xlu0 %3591
    %v3593 = vsel %vm944, %v3007, 0.0
    %3594 = vadd.xlane.f32.xlu0 %v3593
    %v3595 = vpop.xlane.xlu0 %3594
    %v3596 = vsel %vm944, %v3008, 0.0
    %3597 = vadd.xlane.f32.xlu0 %v3596
    %v3598 = vpop.xlane.xlu0 %3597
    %v3599 = vsel %vm944, %v3009, 0.0
    %3600 = vadd.xlane.f32.xlu0 %v3599
    %v3601 = vpop.xlane.xlu0 %3600
    %v3602 = vsel %vm944, %v3010, 0.0
    %3603 = vadd.xlane.f32.xlu0 %v3602
    %v3604 = vpop.xlane.xlu0 %3603
    %v3605 = vsel %vm944, %v3011, 0.0
    %3606 = vadd.xlane.f32.xlu0 %v3605
    %v3607 = vpop.xlane.xlu0 %3606
    %v3608 = vsel %vm944, %v3012, 0.0
    %3609 = vadd.xlane.f32.xlu0 %v3608
    %v3610 = vpop.xlane.xlu0 %3609
    %v3611 = vsel %vm944, %v3013, 0.0
    %3612 = vadd.xlane.f32.xlu0 %v3611
    %v3613 = vpop.xlane.xlu0 %3612
    %v3614 = vsel %vm944, %v3014, 0.0
    %3615 = vadd.xlane.f32.xlu0 %v3614
    %v3616 = vpop.xlane.xlu0 %3615
    %v3617 = vsel %vm944, %v3015, 0.0
    %3618 = vadd.xlane.f32.xlu0 %v3617
    %v3619 = vpop.xlane.xlu0 %3618
    %v3620 = vsel %vm944, %v3016, 0.0
    %3621 = vadd.xlane.f32.xlu0 %v3620
    %v3622 = vpop.xlane.xlu0 %3621
    %v3623 = vsel %vm944, %v3017, 0.0
    %3624 = vadd.xlane.f32.xlu0 %v3623
    %v3625 = vpop.xlane.xlu0 %3624
    %v3626 = vsel %vm944, %v3018, 0.0
    %3627 = vadd.xlane.f32.xlu0 %v3626
    %v3628 = vpop.xlane.xlu0 %3627
    %v3629 = vsel %vm944, %v3019, 0.0
    %3630 = vadd.xlane.f32.xlu0 %v3629
    %v3631 = vpop.xlane.xlu0 %3630
    %v3632 = vsel %vm944, %v3020, 0.0
    %3633 = vadd.xlane.f32.xlu0 %v3632
    %v3634 = vpop.xlane.xlu0 %3633
    %v3635 = vsel %vm944, %v3021, 0.0
    %3636 = vadd.xlane.f32.xlu0 %v3635
    %v3637 = vpop.xlane.xlu0 %3636
    %v3638 = vsel %vm944, %v3022, 0.0
    %3639 = vadd.xlane.f32.xlu0 %v3638
    %v3640 = vpop.xlane.xlu0 %3639
    %v3641 = vsel %vm944, %v3023, 0.0
    %3642 = vadd.xlane.f32.xlu0 %v3641
    %v3643 = vpop.xlane.xlu0 %3642
    %v3644 = vsel %vm944, %v3024, 0.0
    %3645 = vadd.xlane.f32.xlu0 %v3644
    %v3646 = vpop.xlane.xlu0 %3645
    %v3647 = vsel %vm944, %v3025, 0.0
    %3648 = vadd.xlane.f32.xlu0 %v3647
    %v3649 = vpop.xlane.xlu0 %3648
    %v3650 = vsel %vm944, %v3026, 0.0
    %3651 = vadd.xlane.f32.xlu0 %v3650
    %v3652 = vpop.xlane.xlu0 %3651
    %v3653 = vsel %vm944, %v3027, 0.0
    %3654 = vadd.xlane.f32.xlu0 %v3653
    %v3655 = vpop.xlane.xlu0 %3654
    %v3656 = vsel %vm944, %v3028, 0.0
    %3657 = vadd.xlane.f32.xlu0 %v3656
    %v3658 = vpop.xlane.xlu0 %3657
    %v3659 = vsel %vm944, %v3029, 0.0
    %3660 = vadd.xlane.f32.xlu0 %v3659
    %v3661 = vpop.xlane.xlu0 %3660
    %v3662 = vsel %vm944, %v3030, 0.0
    %3663 = vadd.xlane.f32.xlu0 %v3662
    %v3664 = vpop.xlane.xlu0 %3663
    %v3665 = vsel %vm944, %v3031, 0.0
    %3666 = vadd.xlane.f32.xlu0 %v3665
    %v3667 = vpop.xlane.xlu0 %3666
    %v3668 = vsel %vm944, %v3032, 0.0
    %3669 = vadd.xlane.f32.xlu0 %v3668
    %v3670 = vpop.xlane.xlu0 %3669
    %v3671 = vsel %vm944, %v3033, 0.0
    %3672 = vadd.xlane.f32.xlu0 %v3671
    %v3673 = vpop.xlane.xlu0 %3672
    %v3674 = vsel %vm944, %v3034, 0.0
    %3675 = vadd.xlane.f32.xlu0 %v3674
    %v3676 = vpop.xlane.xlu0 %3675
    %v3677 = vsel %vm944, %v3035, 0.0
    %3678 = vadd.xlane.f32.xlu0 %v3677
    %v3679 = vpop.xlane.xlu0 %3678
    %v3680 = vsel %vm944, %v3036, 0.0
    %3681 = vadd.xlane.f32.xlu0 %v3680
    %v3682 = vpop.xlane.xlu0 %3681
    %v3683 = vsel %vm944, %v3037, 0.0
    %3684 = vadd.xlane.f32.xlu0 %v3683
    %v3685 = vpop.xlane.xlu0 %3684
    %v3686 = vsel %vm944, %v3038, 0.0
    %3687 = vadd.xlane.f32.xlu0 %v3686
    %v3688 = vpop.xlane.xlu0 %3687
    %v3689 = vsel %vm944, %v3039, 0.0
    %3690 = vadd.xlane.f32.xlu0 %v3689
    %v3691 = vpop.xlane.xlu0 %3690
    %v3692 = vsel %vm944, %v3040, 0.0
    %3693 = vadd.xlane.f32.xlu0 %v3692
    %v3694 = vpop.xlane.xlu0 %3693
    %v3695 = vsel %vm944, %v3041, 0.0
    %3696 = vadd.xlane.f32.xlu0 %v3695
    %v3697 = vpop.xlane.xlu0 %3696
    %v3698 = vsel %vm944, %v3042, 0.0
    %3699 = vadd.xlane.f32.xlu0 %v3698
    %v3700 = vpop.xlane.xlu0 %3699
    %v3701 = vsel %vm944, %v3043, 0.0
    %3702 = vadd.xlane.f32.xlu0 %v3701
    %v3703 = vpop.xlane.xlu0 %3702
    %v3704 = vsel %vm944, %v3044, 0.0
    %3705 = vadd.xlane.f32.xlu0 %v3704
    %v3706 = vpop.xlane.xlu0 %3705
    %v3707 = vsel %vm944, %v3045, 0.0
    %3708 = vadd.xlane.f32.xlu0 %v3707
    %v3709 = vpop.xlane.xlu0 %3708
    %v3710 = vsel %vm944, %v3046, 0.0
    %3711 = vadd.xlane.f32.xlu0 %v3710
    %v3712 = vpop.xlane.xlu0 %3711
    %v3713 = vsel %vm944, %v3047, 0.0
    %3714 = vadd.xlane.f32.xlu0 %v3713
    %v3715 = vpop.xlane.xlu0 %3714
    %v3716 = vsel %vm944, %v3048, 0.0
    %3717 = vadd.xlane.f32.xlu0 %v3716
    %v3718 = vpop.xlane.xlu0 %3717
    %v3719 = vsel %vm944, %v3049, 0.0
    %3720 = vadd.xlane.f32.xlu0 %v3719
    %v3721 = vpop.xlane.xlu0 %3720
    %v3722 = vsel %vm944, %v3050, 0.0
    %3723 = vadd.xlane.f32.xlu0 %v3722
    %v3724 = vpop.xlane.xlu0 %3723
    %v3725 = vsel %vm944, %v3051, 0.0
    %3726 = vadd.xlane.f32.xlu0 %v3725
    %v3727 = vpop.xlane.xlu0 %3726
    %v3728 = vsel %vm944, %v3052, 0.0
    %3729 = vadd.xlane.f32.xlu0 %v3728
    %v3730 = vpop.xlane.xlu0 %3729
    %v3731 = vsel %vm944, %v3053, 0.0
    %3732 = vadd.xlane.f32.xlu0 %v3731
    %v3733 = vpop.xlane.xlu0 %3732
    %v3734 = vsel %vm944, %v3054, 0.0
    %3735 = vadd.xlane.f32.xlu0 %v3734
    %v3736 = vpop.xlane.xlu0 %3735
    %v3737 = vsel %vm944, %v3055, 0.0
    %3738 = vadd.xlane.f32.xlu0 %v3737
    %v3739 = vpop.xlane.xlu0 %3738
    %v3740 = vsel %vm944, %v3056, 0.0
    %3741 = vadd.xlane.f32.xlu0 %v3740
    %v3742 = vpop.xlane.xlu0 %3741
    %v3743 = vsel %vm944, %v3057, 0.0
    %3744 = vadd.xlane.f32.xlu0 %v3743
    %v3745 = vpop.xlane.xlu0 %3744
    %v3746 = vsel %vm944, %v3058, 0.0
    %3747 = vadd.xlane.f32.xlu0 %v3746
    %v3748 = vpop.xlane.xlu0 %3747
    %v3749 = vsel %vm944, %v3059, 0.0
    %3750 = vadd.xlane.f32.xlu0 %v3749
    %v3751 = vpop.xlane.xlu0 %3750
    %v3752 = vsel %vm944, %v3060, 0.0
    %3753 = vadd.xlane.f32.xlu0 %v3752
    %v3754 = vpop.xlane.xlu0 %3753
    %v3755 = vsel %vm944, %v3061, 0.0
    %3756 = vadd.xlane.f32.xlu0 %v3755
    %v3757 = vpop.xlane.xlu0 %3756
    %v3758 = vsel %vm944, %v3062, 0.0
    %3759 = vadd.xlane.f32.xlu0 %v3758
    %v3760 = vpop.xlane.xlu0 %3759
    %v3761 = vsel %vm944, %v3063, 0.0
    %3762 = vadd.xlane.f32.xlu0 %v3761
    %v3763 = vpop.xlane.xlu0 %3762
    %v3764 = vsel %vm944, %v3064, 0.0
    %3765 = vadd.xlane.f32.xlu0 %v3764
    %v3766 = vpop.xlane.xlu0 %3765
    %v3767 = vsel %vm944, %v3065, 0.0
    %3768 = vadd.xlane.f32.xlu0 %v3767
    %v3769 = vpop.xlane.xlu0 %3768
    %v3770 = vsel %vm944, %v3066, 0.0
    %3771 = vadd.xlane.f32.xlu0 %v3770
    %v3772 = vpop.xlane.xlu0 %3771
    %v3773 = vsel %vm944, %v3067, 0.0
    %3774 = vadd.xlane.f32.xlu0 %v3773
    %v3775 = vpop.xlane.xlu0 %3774
    %v3776 = vsel %vm944, %v3068, 0.0
    %3777 = vadd.xlane.f32.xlu0 %v3776
    %v3778 = vpop.xlane.xlu0 %3777
    %v3779 = vsel %vm944, %v3069, 0.0
    %3780 = vadd.xlane.f32.xlu0 %v3779
    %v3781 = vpop.xlane.xlu0 %3780
    %v3782 = vsel %vm944, %v3070, 0.0
    %3783 = vadd.xlane.f32.xlu0 %v3782
    %v3784 = vpop.xlane.xlu0 %3783
    %v3785 = vsel %vm944, %v3071, 0.0
    %3786 = vadd.xlane.f32.xlu0 %v3785
    %v3787 = vpop.xlane.xlu0 %3786
    %v3788 = vsel %vm944, %v3072, 0.0
    %3789 = vadd.xlane.f32.xlu0 %v3788
    %v3790 = vpop.xlane.xlu0 %3789
    %v3791 = vsel %vm944, %v3073, 0.0
    %3792 = vadd.xlane.f32.xlu0 %v3791
    %v3793 = vpop.xlane.xlu0 %3792
    %v3794 = vsel %vm944, %v3074, 0.0
    %3795 = vadd.xlane.f32.xlu0 %v3794
    %v3796 = vpop.xlane.xlu0 %3795
    %v3797 = vsel %vm944, %v3075, 0.0
    %3798 = vadd.xlane.f32.xlu0 %v3797
    %v3799 = vpop.xlane.xlu0 %3798
    %v3800 = vsel %vm944, %v3076, 0.0
    %3801 = vadd.xlane.f32.xlu0 %v3800
    %v3802 = vpop.xlane.xlu0 %3801
    %v3803 = vsel %vm944, %v3077, 0.0
    %3804 = vadd.xlane.f32.xlu0 %v3803
    %v3805 = vpop.xlane.xlu0 %3804
    %v3806 = vsel %vm944, %v3078, 0.0
    %3807 = vadd.xlane.f32.xlu0 %v3806
    %v3808 = vpop.xlane.xlu0 %3807
    %v3809 = vsel %vm944, %v3079, 0.0
    %3810 = vadd.xlane.f32.xlu0 %v3809
    %v3811 = vpop.xlane.xlu0 %3810
    %v3812 = vsel %vm944, %v3080, 0.0
    %3813 = vadd.xlane.f32.xlu0 %v3812
    %v3814 = vpop.xlane.xlu0 %3813
    %v3815 = vsel %vm944, %v3081, 0.0
    %3816 = vadd.xlane.f32.xlu0 %v3815
    %v3817 = vpop.xlane.xlu0 %3816
    %v3818 = vsel %vm944, %v3082, 0.0
    %3819 = vadd.xlane.f32.xlu0 %v3818
    %v3820 = vpop.xlane.xlu0 %3819
    %v3821 = vsel %vm944, %v3083, 0.0
    %3822 = vadd.xlane.f32.xlu0 %v3821
    %v3823 = vpop.xlane.xlu0 %3822
    %v3824 = vsel %vm944, %v3084, 0.0
    %3825 = vadd.xlane.f32.xlu0 %v3824
    %v3826 = vpop.xlane.xlu0 %3825
    %v3827 = vsel %vm944, %v3085, 0.0
    %3828 = vadd.xlane.f32.xlu0 %v3827
    %v3829 = vpop.xlane.xlu0 %3828
    %v3830 = vsel %vm944, %v3086, 0.0
    %3831 = vadd.xlane.f32.xlu0 %v3830
    %v3832 = vpop.xlane.xlu0 %3831
    %v3833 = vsel %vm944, %v3087, 0.0
    %3834 = vadd.xlane.f32.xlu0 %v3833
    %v3835 = vpop.xlane.xlu0 %3834
    %v3836 = vsel %vm944, %v3088, 0.0
    %3837 = vadd.xlane.f32.xlu0 %v3836
    %v3838 = vpop.xlane.xlu0 %3837
    %v3839 = vsel %vm944, %v3089, 0.0
    %3840 = vadd.xlane.f32.xlu0 %v3839
    %v3841 = vpop.xlane.xlu0 %3840
    %v3842 = vsel %vm944, %v3090, 0.0
    %3843 = vadd.xlane.f32.xlu0 %v3842
    %v3844 = vpop.xlane.xlu0 %3843
    %v3845 = vsel %vm944, %v3091, 0.0
    %3846 = vadd.xlane.f32.xlu0 %v3845
    %v3847 = vpop.xlane.xlu0 %3846
    %v3848 = vsel %vm944, %v3092, 0.0
    %3849 = vadd.xlane.f32.xlu0 %v3848
    %v3850 = vpop.xlane.xlu0 %3849
    %v3851 = vsel %vm944, %v3093, 0.0
    %3852 = vadd.xlane.f32.xlu0 %v3851
    %v3853 = vpop.xlane.xlu0 %3852
    %v3854 = vsel %vm944, %v3094, 0.0
    %3855 = vadd.xlane.f32.xlu0 %v3854
    %v3856 = vpop.xlane.xlu0 %3855
    %v3857 = vsel %vm944, %v3095, 0.0
    %3858 = vadd.xlane.f32.xlu0 %v3857
    %v3859 = vpop.xlane.xlu0 %3858
    %v3860 = vsel %vm944, %v3096, 0.0
    %3861 = vadd.xlane.f32.xlu0 %v3860
    %v3862 = vpop.xlane.xlu0 %3861
    %v3863 = vsel %vm944, %v3097, 0.0
    %3864 = vadd.xlane.f32.xlu0 %v3863
    %v3865 = vpop.xlane.xlu0 %3864
    %s3866 = sld [smem:[#allocation2]]
    %v3867 = vstv %s3866
    %v3868 = vadd.f32 %v3100, %v3867
    %v3869 = vadd.f32 %v3103, %v3867
    %v3870 = vadd.f32 %v3106, %v3867
    %v3871 = vadd.f32 %v3109, %v3867
    %v3872 = vadd.f32 %v3112, %v3867
    %v3873 = vadd.f32 %v3115, %v3867
    %v3874 = vadd.f32 %v3118, %v3867
    %v3875 = vadd.f32 %v3121, %v3867
    %v3876 = vadd.f32 %v3124, %v3867
    %v3877 = vadd.f32 %v3127, %v3867
    %v3878 = vadd.f32 %v3130, %v3867
    %v3879 = vadd.f32 %v3133, %v3867
    %v3880 = vadd.f32 %v3136, %v3867
    %v3881 = vadd.f32 %v3139, %v3867
    %v3882 = vadd.f32 %v3142, %v3867
    %v3883 = vadd.f32 %v3145, %v3867
    %v3884 = vadd.f32 %v3148, %v3867
    %v3885 = vadd.f32 %v3151, %v3867
    %v3886 = vadd.f32 %v3154, %v3867
    %v3887 = vadd.f32 %v3157, %v3867
    %v3888 = vadd.f32 %v3160, %v3867
    %v3889 = vadd.f32 %v3163, %v3867
    %v3890 = vadd.f32 %v3166, %v3867
    %v3891 = vadd.f32 %v3169, %v3867
    %v3892 = vadd.f32 %v3172, %v3867
    %v3893 = vadd.f32 %v3175, %v3867
    %v3894 = vadd.f32 %v3178, %v3867
    %v3895 = vadd.f32 %v3181, %v3867
    %v3896 = vadd.f32 %v3184, %v3867
    %v3897 = vadd.f32 %v3187, %v3867
    %v3898 = vadd.f32 %v3190, %v3867
    %v3899 = vadd.f32 %v3193, %v3867
    %v3900 = vadd.f32 %v3196, %v3867
    %v3901 = vadd.f32 %v3199, %v3867
    %v3902 = vadd.f32 %v3202, %v3867
    %v3903 = vadd.f32 %v3205, %v3867
    %v3904 = vadd.f32 %v3208, %v3867
    %v3905 = vadd.f32 %v3211, %v3867
    %v3906 = vadd.f32 %v3214, %v3867
    %v3907 = vadd.f32 %v3217, %v3867
    %v3908 = vadd.f32 %v3220, %v3867
    %v3909 = vadd.f32 %v3223, %v3867
    %v3910 = vadd.f32 %v3226, %v3867
    %v3911 = vadd.f32 %v3229, %v3867
    %v3912 = vadd.f32 %v3232, %v3867
    %v3913 = vadd.f32 %v3235, %v3867
    %v3914 = vadd.f32 %v3238, %v3867
    %v3915 = vadd.f32 %v3241, %v3867
    %v3916 = vadd.f32 %v3244, %v3867
    %v3917 = vadd.f32 %v3247, %v3867
    %v3918 = vadd.f32 %v3250, %v3867
    %v3919 = vadd.f32 %v3253, %v3867
    %v3920 = vadd.f32 %v3256, %v3867
    %v3921 = vadd.f32 %v3259, %v3867
    %v3922 = vadd.f32 %v3262, %v3867
    %v3923 = vadd.f32 %v3265, %v3867
    %v3924 = vadd.f32 %v3268, %v3867
    %v3925 = vadd.f32 %v3271, %v3867
    %v3926 = vadd.f32 %v3274, %v3867
    %v3927 = vadd.f32 %v3277, %v3867
    %v3928 = vadd.f32 %v3280, %v3867
    %v3929 = vadd.f32 %v3283, %v3867
    %v3930 = vadd.f32 %v3286, %v3867
    %v3931 = vadd.f32 %v3289, %v3867
    %v3932 = vadd.f32 %v3292, %v3867
    %v3933 = vadd.f32 %v3295, %v3867
    %v3934 = vadd.f32 %v3298, %v3867
    %v3935 = vadd.f32 %v3301, %v3867
    %v3936 = vadd.f32 %v3304, %v3867
    %v3937 = vadd.f32 %v3307, %v3867
    %v3938 = vadd.f32 %v3310, %v3867
    %v3939 = vadd.f32 %v3313, %v3867
    %v3940 = vadd.f32 %v3316, %v3867
    %v3941 = vadd.f32 %v3319, %v3867
    %v3942 = vadd.f32 %v3322, %v3867
    %v3943 = vadd.f32 %v3325, %v3867
    %v3944 = vadd.f32 %v3328, %v3867
    %v3945 = vadd.f32 %v3331, %v3867
    %v3946 = vadd.f32 %v3334, %v3867
    %v3947 = vadd.f32 %v3337, %v3867
    %v3948 = vadd.f32 %v3340, %v3867
    %v3949 = vadd.f32 %v3343, %v3867
    %v3950 = vadd.f32 %v3346, %v3867
    %v3951 = vadd.f32 %v3349, %v3867
    %v3952 = vadd.f32 %v3352, %v3867
    %v3953 = vadd.f32 %v3355, %v3867
    %v3954 = vadd.f32 %v3358, %v3867
    %v3955 = vadd.f32 %v3361, %v3867
    %v3956 = vadd.f32 %v3364, %v3867
    %v3957 = vadd.f32 %v3367, %v3867
    %v3958 = vadd.f32 %v3370, %v3867
    %v3959 = vadd.f32 %v3373, %v3867
    %v3960 = vadd.f32 %v3376, %v3867
    %v3961 = vadd.f32 %v3379, %v3867
    %v3962 = vadd.f32 %v3382, %v3867
    %v3963 = vadd.f32 %v3385, %v3867
    %v3964 = vadd.f32 %v3388, %v3867
    %v3965 = vadd.f32 %v3391, %v3867
    %v3966 = vadd.f32 %v3394, %v3867
    %v3967 = vadd.f32 %v3397, %v3867
    %v3968 = vadd.f32 %v3400, %v3867
    %v3969 = vadd.f32 %v3403, %v3867
    %v3970 = vadd.f32 %v3406, %v3867
    %v3971 = vadd.f32 %v3409, %v3867
    %v3972 = vadd.f32 %v3412, %v3867
    %v3973 = vadd.f32 %v3415, %v3867
    %v3974 = vadd.f32 %v3418, %v3867
    %v3975 = vadd.f32 %v3421, %v3867
    %v3976 = vadd.f32 %v3424, %v3867
    %v3977 = vadd.f32 %v3427, %v3867
    %v3978 = vadd.f32 %v3430, %v3867
    %v3979 = vadd.f32 %v3433, %v3867
    %v3980 = vadd.f32 %v3436, %v3867
    %v3981 = vadd.f32 %v3439, %v3867
    %v3982 = vadd.f32 %v3442, %v3867
    %v3983 = vadd.f32 %v3445, %v3867
    %v3984 = vadd.f32 %v3448, %v3867
    %v3985 = vadd.f32 %v3451, %v3867
    %v3986 = vadd.f32 %v3454, %v3867
    %v3987 = vadd.f32 %v3457, %v3867
    %v3988 = vadd.f32 %v3460, %v3867
    %v3989 = vadd.f32 %v3463, %v3867
    %v3990 = vadd.f32 %v3466, %v3867
    %v3991 = vadd.f32 %v3469, %v3867
    %v3992 = vadd.f32 %v3472, %v3867
    %v3993 = vadd.f32 %v3475, %v3867
    %v3994 = vadd.f32 %v3478, %v3867
    %v3995 = vadd.f32 %v3481, %v3867
    %v3996 = vadd.f32 %v3484, %v3867
    %v3997 = vadd.f32 %v3487, %v3867
    %v3998 = vadd.f32 %v3490, %v3867
    %v3999 = vadd.f32 %v3493, %v3867
    %v4000 = vadd.f32 %v3496, %v3867
    %v4001 = vadd.f32 %v3499, %v3867
    %v4002 = vadd.f32 %v3502, %v3867
    %v4003 = vadd.f32 %v3505, %v3867
    %v4004 = vadd.f32 %v3508, %v3867
    %v4005 = vadd.f32 %v3511, %v3867
    %v4006 = vadd.f32 %v3514, %v3867
    %v4007 = vadd.f32 %v3517, %v3867
    %v4008 = vadd.f32 %v3520, %v3867
    %v4009 = vadd.f32 %v3523, %v3867
    %v4010 = vadd.f32 %v3526, %v3867
    %v4011 = vadd.f32 %v3529, %v3867
    %v4012 = vadd.f32 %v3532, %v3867
    %v4013 = vadd.f32 %v3535, %v3867
    %v4014 = vadd.f32 %v3538, %v3867
    %v4015 = vadd.f32 %v3541, %v3867
    %v4016 = vadd.f32 %v3544, %v3867
    %v4017 = vadd.f32 %v3547, %v3867
    %v4018 = vadd.f32 %v3550, %v3867
    %v4019 = vadd.f32 %v3553, %v3867
    %v4020 = vadd.f32 %v3556, %v3867
    %v4021 = vadd.f32 %v3559, %v3867
    %v4022 = vadd.f32 %v3562, %v3867
    %v4023 = vadd.f32 %v3565, %v3867
    %v4024 = vadd.f32 %v3568, %v3867
    %v4025 = vadd.f32 %v3571, %v3867
    %v4026 = vadd.f32 %v3574, %v3867
    %v4027 = vadd.f32 %v3577, %v3867
    %v4028 = vadd.f32 %v3580, %v3867
    %v4029 = vadd.f32 %v3583, %v3867
    %v4030 = vadd.f32 %v3586, %v3867
    %v4031 = vadd.f32 %v3589, %v3867
    %v4032 = vadd.f32 %v3592, %v3867
    %v4033 = vadd.f32 %v3595, %v3867
    %v4034 = vadd.f32 %v3598, %v3867
    %v4035 = vadd.f32 %v3601, %v3867
    %v4036 = vadd.f32 %v3604, %v3867
    %v4037 = vadd.f32 %v3607, %v3867
    %v4038 = vadd.f32 %v3610, %v3867
    %v4039 = vadd.f32 %v3613, %v3867
    %v4040 = vadd.f32 %v3616, %v3867
    %v4041 = vadd.f32 %v3619, %v3867
    %v4042 = vadd.f32 %v3622, %v3867
    %v4043 = vadd.f32 %v3625, %v3867
    %v4044 = vadd.f32 %v3628, %v3867
    %v4045 = vadd.f32 %v3631, %v3867
    %v4046 = vadd.f32 %v3634, %v3867
    %v4047 = vadd.f32 %v3637, %v3867
    %v4048 = vadd.f32 %v3640, %v3867
    %v4049 = vadd.f32 %v3643, %v3867
    %v4050 = vadd.f32 %v3646, %v3867
    %v4051 = vadd.f32 %v3649, %v3867
    %v4052 = vadd.f32 %v3652, %v3867
    %v4053 = vadd.f32 %v3655, %v3867
    %v4054 = vadd.f32 %v3658, %v3867
    %v4055 = vadd.f32 %v3661, %v3867
    %v4056 = vadd.f32 %v3664, %v3867
    %v4057 = vadd.f32 %v3667, %v3867
    %v4058 = vadd.f32 %v3670, %v3867
    %v4059 = vadd.f32 %v3673, %v3867
    %v4060 = vadd.f32 %v3676, %v3867
    %v4061 = vadd.f32 %v3679, %v3867
    %v4062 = vadd.f32 %v3682, %v3867
    %v4063 = vadd.f32 %v3685, %v3867
    %v4064 = vadd.f32 %v3688, %v3867
    %v4065 = vadd.f32 %v3691, %v3867
    %v4066 = vadd.f32 %v3694, %v3867
    %v4067 = vadd.f32 %v3697, %v3867
    %v4068 = vadd.f32 %v3700, %v3867
    %v4069 = vadd.f32 %v3703, %v3867
    %v4070 = vadd.f32 %v3706, %v3867
    %v4071 = vadd.f32 %v3709, %v3867
    %v4072 = vadd.f32 %v3712, %v3867
    %v4073 = vadd.f32 %v3715, %v3867
    %v4074 = vadd.f32 %v3718, %v3867
    %v4075 = vadd.f32 %v3721, %v3867
    %v4076 = vadd.f32 %v3724, %v3867
    %v4077 = vadd.f32 %v3727, %v3867
    %v4078 = vadd.f32 %v3730, %v3867
    %v4079 = vadd.f32 %v3733, %v3867
    %v4080 = vadd.f32 %v3736, %v3867
    %v4081 = vadd.f32 %v3739, %v3867
    %v4082 = vadd.f32 %v3742, %v3867
    %v4083 = vadd.f32 %v3745, %v3867
    %v4084 = vadd.f32 %v3748, %v3867
    %v4085 = vadd.f32 %v3751, %v3867
    %v4086 = vadd.f32 %v3754, %v3867
    %v4087 = vadd.f32 %v3757, %v3867
    %v4088 = vadd.f32 %v3760, %v3867
    %v4089 = vadd.f32 %v3763, %v3867
    %v4090 = vadd.f32 %v3766, %v3867
    %v4091 = vadd.f32 %v3769, %v3867
    %v4092 = vadd.f32 %v3772, %v3867
    %v4093 = vadd.f32 %v3775, %v3867
    %v4094 = vadd.f32 %v3778, %v3867
    %v4095 = vadd.f32 %v3781, %v3867
    %v4096 = vadd.f32 %v3784, %v3867
    %v4097 = vadd.f32 %v3787, %v3867
    %v4098 = vadd.f32 %v3790, %v3867
    %v4099 = vadd.f32 %v3793, %v3867
    %v4100 = vadd.f32 %v3796, %v3867
    %v4101 = vadd.f32 %v3799, %v3867
    %v4102 = vadd.f32 %v3802, %v3867
    %v4103 = vadd.f32 %v3805, %v3867
    %v4104 = vadd.f32 %v3808, %v3867
    %v4105 = vadd.f32 %v3811, %v3867
    %v4106 = vadd.f32 %v3814, %v3867
    %v4107 = vadd.f32 %v3817, %v3867
    %v4108 = vadd.f32 %v3820, %v3867
    %v4109 = vadd.f32 %v3823, %v3867
    %v4110 = vadd.f32 %v3826, %v3867
    %v4111 = vadd.f32 %v3829, %v3867
    %v4112 = vadd.f32 %v3832, %v3867
    %v4113 = vadd.f32 %v3835, %v3867
    %v4114 = vadd.f32 %v3838, %v3867
    %v4115 = vadd.f32 %v3841, %v3867
    %v4116 = vadd.f32 %v3844, %v3867
    %v4117 = vadd.f32 %v3847, %v3867
    %v4118 = vadd.f32 %v3850, %v3867
    %v4119 = vadd.f32 %v3853, %v3867
    %v4120 = vadd.f32 %v3856, %v3867
    %v4121 = vadd.f32 %v3859, %v3867
    %v4122 = vadd.f32 %v3862, %v3867
    %v4123 = vadd.f32 %v3865, %v3867
    %v4124 = vlaneseq
    %v4125 = vand.u32 %v4124, 127
    %vm4126 = vcmp.lt.s32.totalorder %v4125, 16
    %v4383 = vperm.slane %v3868, %v4125
    %v4384 = vadd.s32 %v4125, 4294967288
    %v4385 = vperm.slane %v3869, %v4384
    %vm4386 = vcmask 130112
    %v4387 = vsel %vm4386, %v4385, %v4383
    %v4388 = vadd.s32 %v4125, 4294967280
    %v4389 = vperm.slane %v3870, %v4388
    %vm4390 = vcmask 195712
    %v4391 = vsel %vm4390, %v4389, %v4387
    %v4392 = vadd.s32 %v4125, 4294967272
    %v4393 = vperm.slane %v3871, %v4392
    %vm4394 = vcmask 261312
    %v4395 = vsel %vm4394, %v4393, %v4391
    %v4396 = vadd.s32 %v4125, 4294967264
    %v4397 = vperm.slane %v3872, %v4396
    %vm4398 = vcmask 326912
    %v4399 = vsel %vm4398, %v4397, %v4395
    %v4400 = vadd.s32 %v4125, 4294967256
    %v4401 = vperm.slane %v3873, %v4400
    %vm4402 = vcmask 392512
    %v4403 = vsel %vm4402, %v4401, %v4399
    %v4404 = vadd.s32 %v4125, 4294967248
    %v4405 = vperm.slane %v3874, %v4404
    %vm4406 = vcmask 458112
    %v4407 = vsel %vm4406, %v4405, %v4403
    %v4408 = vadd.s32 %v4125, 4294967240
    %v4409 = vperm.slane %v3875, %v4408
    %vm4410 = vcmask 523712
    %v4411 = vsel %vm4410, %v4409, %v4407
    %v4412 = vadd.s32 %v4125, 4294967232
    %v4413 = vperm.slane %v3876, %v4412
    %vm4414 = vcmask 589312
    %v4415 = vsel %vm4414, %v4413, %v4411
    %v4416 = vadd.s32 %v4125, 4294967224
    %v4417 = vperm.slane %v3877, %v4416
    %vm4418 = vcmask 654912
    %v4419 = vsel %vm4418, %v4417, %v4415
    %v4420 = vadd.s32 %v4125, 4294967216
    %v4421 = vperm.slane %v3878, %v4420
    %vm4422 = vcmask 720512
    %v4423 = vsel %vm4422, %v4421, %v4419
    %v4424 = vadd.s32 %v4125, 4294967208
    %v4425 = vperm.slane %v3879, %v4424
    %vm4426 = vcmask 786112
    %v4427 = vsel %vm4426, %v4425, %v4423
    %v4428 = vadd.s32 %v4125, 4294967200
    %v4429 = vperm.slane %v3880, %v4428
    %vm4430 = vcmask 851712
    %v4431 = vsel %vm4430, %v4429, %v4427
    %v4432 = vadd.s32 %v4125, 4294967192
    %v4433 = vperm.slane %v3881, %v4432
    %vm4434 = vcmask 917312
    %v4435 = vsel %vm4434, %v4433, %v4431
    %v4436 = vadd.s32 %v4125, 4294967184
    %v4437 = vperm.slane %v3882, %v4436
    %vm4438 = vcmask 982912
    %v4439 = vsel %vm4438, %v4437, %v4435
    %v4440 = vadd.s32 %v4125, 4294967176
    %v4441 = vperm.slane %v3883, %v4440
    %vm4442 = vcmask 1048512
    %v4443 = vsel %vm4442, %v4441, %v4439
    %v4444 = vperm.slane %v3884, %v4125
    %v4445 = vperm.slane %v3885, %v4384
    %v4446 = vsel %vm4386, %v4445, %v4444
    %v4447 = vperm.slane %v3886, %v4388
    %v4448 = vsel %vm4390, %v4447, %v4446
    %v4449 = vperm.slane %v3887, %v4392
    %v4450 = vsel %vm4394, %v4449, %v4448
    %v4451 = vperm.slane %v3888, %v4396
    %v4452 = vsel %vm4398, %v4451, %v4450
    %v4453 = vperm.slane %v3889, %v4400
    %v4454 = vsel %vm4402, %v4453, %v4452
    %v4455 = vperm.slane %v3890, %v4404
    %v4456 = vsel %vm4406, %v4455, %v4454
    %v4457 = vperm.slane %v3891, %v4408
    %v4458 = vsel %vm4410, %v4457, %v4456
    %v4459 = vperm.slane %v3892, %v4412
    %v4460 = vsel %vm4414, %v4459, %v4458
    %v4461 = vperm.slane %v3893, %v4416
    %v4462 = vsel %vm4418, %v4461, %v4460
    %v4463 = vperm.slane %v3894, %v4420
    %v4464 = vsel %vm4422, %v4463, %v4462
    %v4465 = vperm.slane %v3895, %v4424
    %v4466 = vsel %vm4426, %v4465, %v4464
    %v4467 = vperm.slane %v3896, %v4428
    %v4468 = vsel %vm4430, %v4467, %v4466
    %v4469 = vperm.slane %v3897, %v4432
    %v4470 = vsel %vm4434, %v4469, %v4468
    %v4471 = vperm.slane %v3898, %v4436
    %v4472 = vsel %vm4438, %v4471, %v4470
    %v4473 = vperm.slane %v3899, %v4440
    %v4474 = vsel %vm4442, %v4473, %v4472
    %v4475 = vperm.slane %v3900, %v4125
    %v4476 = vperm.slane %v3901, %v4384
    %v4477 = vsel %vm4386, %v4476, %v4475
    %v4478 = vperm.slane %v3902, %v4388
    %v4479 = vsel %vm4390, %v4478, %v4477
    %v4480 = vperm.slane %v3903, %v4392
    %v4481 = vsel %vm4394, %v4480, %v4479
    %v4482 = vperm.slane %v3904, %v4396
    %v4483 = vsel %vm4398, %v4482, %v4481
    %v4484 = vperm.slane %v3905, %v4400
    %v4485 = vsel %vm4402, %v4484, %v4483
    %v4486 = vperm.slane %v3906, %v4404
    %v4487 = vsel %vm4406, %v4486, %v4485
    %v4488 = vperm.slane %v3907, %v4408
    %v4489 = vsel %vm4410, %v4488, %v4487
    %v4490 = vperm.slane %v3908, %v4412
    %v4491 = vsel %vm4414, %v4490, %v4489
    %v4492 = vperm.slane %v3909, %v4416
    %v4493 = vsel %vm4418, %v4492, %v4491
    %v4494 = vperm.slane %v3910, %v4420
    %v4495 = vsel %vm4422, %v4494, %v4493
    %v4496 = vperm.slane %v3911, %v4424
    %v4497 = vsel %vm4426, %v4496, %v4495
    %v4498 = vperm.slane %v3912, %v4428
    %v4499 = vsel %vm4430, %v4498, %v4497
    %v4500 = vperm.slane %v3913, %v4432
    %v4501 = vsel %vm4434, %v4500, %v4499
    %v4502 = vperm.slane %v3914, %v4436
    %v4503 = vsel %vm4438, %v4502, %v4501
    %v4504 = vperm.slane %v3915, %v4440
    %v4505 = vsel %vm4442, %v4504, %v4503
    %v4506 = vperm.slane %v3916, %v4125
    %v4507 = vperm.slane %v3917, %v4384
    %v4508 = vsel %vm4386, %v4507, %v4506
    %v4509 = vperm.slane %v3918, %v4388
    %v4510 = vsel %vm4390, %v4509, %v4508
    %v4511 = vperm.slane %v3919, %v4392
    %v4512 = vsel %vm4394, %v4511, %v4510
    %v4513 = vperm.slane %v3920, %v4396
    %v4514 = vsel %vm4398, %v4513, %v4512
    %v4515 = vperm.slane %v3921, %v4400
    %v4516 = vsel %vm4402, %v4515, %v4514
    %v4517 = vperm.slane %v3922, %v4404
    %v4518 = vsel %vm4406, %v4517, %v4516
    %v4519 = vperm.slane %v3923, %v4408
    %v4520 = vsel %vm4410, %v4519, %v4518
    %v4521 = vperm.slane %v3924, %v4412
    %v4522 = vsel %vm4414, %v4521, %v4520
    %v4523 = vperm.slane %v3925, %v4416
    %v4524 = vsel %vm4418, %v4523, %v4522
    %v4525 = vperm.slane %v3926, %v4420
    %v4526 = vsel %vm4422, %v4525, %v4524
    %v4527 = vperm.slane %v3927, %v4424
    %v4528 = vsel %vm4426, %v4527, %v4526
    %v4529 = vperm.slane %v3928, %v4428
    %v4530 = vsel %vm4430, %v4529, %v4528
    %v4531 = vperm.slane %v3929, %v4432
    %v4532 = vsel %vm4434, %v4531, %v4530
    %v4533 = vperm.slane %v3930, %v4436
    %v4534 = vsel %vm4438, %v4533, %v4532
    %v4535 = vperm.slane %v3931, %v4440
    %v4536 = vsel %vm4442, %v4535, %v4534
    %v4537 = vperm.slane %v3932, %v4125
    %v4538 = vperm.slane %v3933, %v4384
    %v4539 = vsel %vm4386, %v4538, %v4537
    %v4540 = vperm.slane %v3934, %v4388
    %v4541 = vsel %vm4390, %v4540, %v4539
    %v4542 = vperm.slane %v3935, %v4392
    %v4543 = vsel %vm4394, %v4542, %v4541
    %v4544 = vperm.slane %v3936, %v4396
    %v4545 = vsel %vm4398, %v4544, %v4543
    %v4546 = vperm.slane %v3937, %v4400
    %v4547 = vsel %vm4402, %v4546, %v4545
    %v4548 = vperm.slane %v3938, %v4404
    %v4549 = vsel %vm4406, %v4548, %v4547
    %v4550 = vperm.slane %v3939, %v4408
    %v4551 = vsel %vm4410, %v4550, %v4549
    %v4552 = vperm.slane %v3940, %v4412
    %v4553 = vsel %vm4414, %v4552, %v4551
    %v4554 = vperm.slane %v3941, %v4416
    %v4555 = vsel %vm4418, %v4554, %v4553
    %v4556 = vperm.slane %v3942, %v4420
    %v4557 = vsel %vm4422, %v4556, %v4555
    %v4558 = vperm.slane %v3943, %v4424
    %v4559 = vsel %vm4426, %v4558, %v4557
    %v4560 = vperm.slane %v3944, %v4428
    %v4561 = vsel %vm4430, %v4560, %v4559
    %v4562 = vperm.slane %v3945, %v4432
    %v4563 = vsel %vm4434, %v4562, %v4561
    %v4564 = vperm.slane %v3946, %v4436
    %v4565 = vsel %vm4438, %v4564, %v4563
    %v4566 = vperm.slane %v3947, %v4440
    %v4567 = vsel %vm4442, %v4566, %v4565
    %v4568 = vperm.slane %v3948, %v4125
    %v4569 = vperm.slane %v3949, %v4384
    %v4570 = vsel %vm4386, %v4569, %v4568
    %v4571 = vperm.slane %v3950, %v4388
    %v4572 = vsel %vm4390, %v4571, %v4570
    %v4573 = vperm.slane %v3951, %v4392
    %v4574 = vsel %vm4394, %v4573, %v4572
    %v4575 = vperm.slane %v3952, %v4396
    %v4576 = vsel %vm4398, %v4575, %v4574
    %v4577 = vperm.slane %v3953, %v4400
    %v4578 = vsel %vm4402, %v4577, %v4576
    %v4579 = vperm.slane %v3954, %v4404
    %v4580 = vsel %vm4406, %v4579, %v4578
    %v4581 = vperm.slane %v3955, %v4408
    %v4582 = vsel %vm4410, %v4581, %v4580
    %v4583 = vperm.slane %v3956, %v4412
    %v4584 = vsel %vm4414, %v4583, %v4582
    %v4585 = vperm.slane %v3957, %v4416
    %v4586 = vsel %vm4418, %v4585, %v4584
    %v4587 = vperm.slane %v3958, %v4420
    %v4588 = vsel %vm4422, %v4587, %v4586
    %v4589 = vperm.slane %v3959, %v4424
    %v4590 = vsel %vm4426, %v4589, %v4588
    %v4591 = vperm.slane %v3960, %v4428
    %v4592 = vsel %vm4430, %v4591, %v4590
    %v4593 = vperm.slane %v3961, %v4432
    %v4594 = vsel %vm4434, %v4593, %v4592
    %v4595 = vperm.slane %v3962, %v4436
    %v4596 = vsel %vm4438, %v4595, %v4594
    %v4597 = vperm.slane %v3963, %v4440
    %v4598 = vsel %vm4442, %v4597, %v4596
    %v4599 = vperm.slane %v3964, %v4125
    %v4600 = vperm.slane %v3965, %v4384
    %v4601 = vsel %vm4386, %v4600, %v4599
    %v4602 = vperm.slane %v3966, %v4388
    %v4603 = vsel %vm4390, %v4602, %v4601
    %v4604 = vperm.slane %v3967, %v4392
    %v4605 = vsel %vm4394, %v4604, %v4603
    %v4606 = vperm.slane %v3968, %v4396
    %v4607 = vsel %vm4398, %v4606, %v4605
    %v4608 = vperm.slane %v3969, %v4400
    %v4609 = vsel %vm4402, %v4608, %v4607
    %v4610 = vperm.slane %v3970, %v4404
    %v4611 = vsel %vm4406, %v4610, %v4609
    %v4612 = vperm.slane %v3971, %v4408
    %v4613 = vsel %vm4410, %v4612, %v4611
    %v4614 = vperm.slane %v3972, %v4412
    %v4615 = vsel %vm4414, %v4614, %v4613
    %v4616 = vperm.slane %v3973, %v4416
    %v4617 = vsel %vm4418, %v4616, %v4615
    %v4618 = vperm.slane %v3974, %v4420
    %v4619 = vsel %vm4422, %v4618, %v4617
    %v4620 = vperm.slane %v3975, %v4424
    %v4621 = vsel %vm4426, %v4620, %v4619
    %v4622 = vperm.slane %v3976, %v4428
    %v4623 = vsel %vm4430, %v4622, %v4621
    %v4624 = vperm.slane %v3977, %v4432
    %v4625 = vsel %vm4434, %v4624, %v4623
    %v4626 = vperm.slane %v3978, %v4436
    %v4627 = vsel %vm4438, %v4626, %v4625
    %v4628 = vperm.slane %v3979, %v4440
    %v4629 = vsel %vm4442, %v4628, %v4627
    %v4630 = vperm.slane %v3980, %v4125
    %v4631 = vperm.slane %v3981, %v4384
    %v4632 = vsel %vm4386, %v4631, %v4630
    %v4633 = vperm.slane %v3982, %v4388
    %v4634 = vsel %vm4390, %v4633, %v4632
    %v4635 = vperm.slane %v3983, %v4392
    %v4636 = vsel %vm4394, %v4635, %v4634
    %v4637 = vperm.slane %v3984, %v4396
    %v4638 = vsel %vm4398, %v4637, %v4636
    %v4639 = vperm.slane %v3985, %v4400
    %v4640 = vsel %vm4402, %v4639, %v4638
    %v4641 = vperm.slane %v3986, %v4404
    %v4642 = vsel %vm4406, %v4641, %v4640
    %v4643 = vperm.slane %v3987, %v4408
    %v4644 = vsel %vm4410, %v4643, %v4642
    %v4645 = vperm.slane %v3988, %v4412
    %v4646 = vsel %vm4414, %v4645, %v4644
    %v4647 = vperm.slane %v3989, %v4416
    %v4648 = vsel %vm4418, %v4647, %v4646
    %v4649 = vperm.slane %v3990, %v4420
    %v4650 = vsel %vm4422, %v4649, %v4648
    %v4651 = vperm.slane %v3991, %v4424
    %v4652 = vsel %vm4426, %v4651, %v4650
    %v4653 = vperm.slane %v3992, %v4428
    %v4654 = vsel %vm4430, %v4653, %v4652
    %v4655 = vperm.slane %v3993, %v4432
    %v4656 = vsel %vm4434, %v4655, %v4654
    %v4657 = vperm.slane %v3994, %v4436
    %v4658 = vsel %vm4438, %v4657, %v4656
    %v4659 = vperm.slane %v3995, %v4440
    %v4660 = vsel %vm4442, %v4659, %v4658
    %v4661 = vperm.slane %v3996, %v4125
    %v4662 = vperm.slane %v3997, %v4384
    %v4663 = vsel %vm4386, %v4662, %v4661
    %v4664 = vperm.slane %v3998, %v4388
    %v4665 = vsel %vm4390, %v4664, %v4663
    %v4666 = vperm.slane %v3999, %v4392
    %v4667 = vsel %vm4394, %v4666, %v4665
    %v4668 = vperm.slane %v4000, %v4396
    %v4669 = vsel %vm4398, %v4668, %v4667
    %v4670 = vperm.slane %v4001, %v4400
    %v4671 = vsel %vm4402, %v4670, %v4669
    %v4672 = vperm.slane %v4002, %v4404
    %v4673 = vsel %vm4406, %v4672, %v4671
    %v4674 = vperm.slane %v4003, %v4408
    %v4675 = vsel %vm4410, %v4674, %v4673
    %v4676 = vperm.slane %v4004, %v4412
    %v4677 = vsel %vm4414, %v4676, %v4675
    %v4678 = vperm.slane %v4005, %v4416
    %v4679 = vsel %vm4418, %v4678, %v4677
    %v4680 = vperm.slane %v4006, %v4420
    %v4681 = vsel %vm4422, %v4680, %v4679
    %v4682 = vperm.slane %v4007, %v4424
    %v4683 = vsel %vm4426, %v4682, %v4681
    %v4684 = vperm.slane %v4008, %v4428
    %v4685 = vsel %vm4430, %v4684, %v4683
    %v4686 = vperm.slane %v4009, %v4432
    %v4687 = vsel %vm4434, %v4686, %v4685
    %v4688 = vperm.slane %v4010, %v4436
    %v4689 = vsel %vm4438, %v4688, %v4687
    %v4690 = vperm.slane %v4011, %v4440
    %v4691 = vsel %vm4442, %v4690, %v4689
    %v4692 = vperm.slane %v4012, %v4125
    %v4693 = vperm.slane %v4013, %v4384
    %v4694 = vsel %vm4386, %v4693, %v4692
    %v4695 = vperm.slane %v4014, %v4388
    %v4696 = vsel %vm4390, %v4695, %v4694
    %v4697 = vperm.slane %v4015, %v4392
    %v4698 = vsel %vm4394, %v4697, %v4696
    %v4699 = vperm.slane %v4016, %v4396
    %v4700 = vsel %vm4398, %v4699, %v4698
    %v4701 = vperm.slane %v4017, %v4400
    %v4702 = vsel %vm4402, %v4701, %v4700
    %v4703 = vperm.slane %v4018, %v4404
    %v4704 = vsel %vm4406, %v4703, %v4702
    %v4705 = vperm.slane %v4019, %v4408
    %v4706 = vsel %vm4410, %v4705, %v4704
    %v4707 = vperm.slane %v4020, %v4412
    %v4708 = vsel %vm4414, %v4707, %v4706
    %v4709 = vperm.slane %v4021, %v4416
    %v4710 = vsel %vm4418, %v4709, %v4708
    %v4711 = vperm.slane %v4022, %v4420
    %v4712 = vsel %vm4422, %v4711, %v4710
    %v4713 = vperm.slane %v4023, %v4424
    %v4714 = vsel %vm4426, %v4713, %v4712
    %v4715 = vperm.slane %v4024, %v4428
    %v4716 = vsel %vm4430, %v4715, %v4714
    %v4717 = vperm.slane %v4025, %v4432
    %v4718 = vsel %vm4434, %v4717, %v4716
    %v4719 = vperm.slane %v4026, %v4436
    %v4720 = vsel %vm4438, %v4719, %v4718
    %v4721 = vperm.slane %v4027, %v4440
    %v4722 = vsel %vm4442, %v4721, %v4720
    %v4723 = vperm.slane %v4028, %v4125
    %v4724 = vperm.slane %v4029, %v4384
    %v4725 = vsel %vm4386, %v4724, %v4723
    %v4726 = vperm.slane %v4030, %v4388
    %v4727 = vsel %vm4390, %v4726, %v4725
    %v4728 = vperm.slane %v4031, %v4392
    %v4729 = vsel %vm4394, %v4728, %v4727
    %v4730 = vperm.slane %v4032, %v4396
    %v4731 = vsel %vm4398, %v4730, %v4729
    %v4732 = vperm.slane %v4033, %v4400
    %v4733 = vsel %vm4402, %v4732, %v4731
    %v4734 = vperm.slane %v4034, %v4404
    %v4735 = vsel %vm4406, %v4734, %v4733
    %v4736 = vperm.slane %v4035, %v4408
    %v4737 = vsel %vm4410, %v4736, %v4735
    %v4738 = vperm.slane %v4036, %v4412
    %v4739 = vsel %vm4414, %v4738, %v4737
    %v4740 = vperm.slane %v4037, %v4416
    %v4741 = vsel %vm4418, %v4740, %v4739
    %v4742 = vperm.slane %v4038, %v4420
    %v4743 = vsel %vm4422, %v4742, %v4741
    %v4744 = vperm.slane %v4039, %v4424
    %v4745 = vsel %vm4426, %v4744, %v4743
    %v4746 = vperm.slane %v4040, %v4428
    %v4747 = vsel %vm4430, %v4746, %v4745
    %v4748 = vperm.slane %v4041, %v4432
    %v4749 = vsel %vm4434, %v4748, %v4747
    %v4750 = vperm.slane %v4042, %v4436
    %v4751 = vsel %vm4438, %v4750, %v4749
    %v4752 = vperm.slane %v4043, %v4440
    %v4753 = vsel %vm4442, %v4752, %v4751
    %v4754 = vperm.slane %v4044, %v4125
    %v4755 = vperm.slane %v4045, %v4384
    %v4756 = vsel %vm4386, %v4755, %v4754
    %v4757 = vperm.slane %v4046, %v4388
    %v4758 = vsel %vm4390, %v4757, %v4756
    %v4759 = vperm.slane %v4047, %v4392
    %v4760 = vsel %vm4394, %v4759, %v4758
    %v4761 = vperm.slane %v4048, %v4396
    %v4762 = vsel %vm4398, %v4761, %v4760
    %v4763 = vperm.slane %v4049, %v4400
    %v4764 = vsel %vm4402, %v4763, %v4762
    %v4765 = vperm.slane %v4050, %v4404
    %v4766 = vsel %vm4406, %v4765, %v4764
    %v4767 = vperm.slane %v4051, %v4408
    %v4768 = vsel %vm4410, %v4767, %v4766
    %v4769 = vperm.slane %v4052, %v4412
    %v4770 = vsel %vm4414, %v4769, %v4768
    %v4771 = vperm.slane %v4053, %v4416
    %v4772 = vsel %vm4418, %v4771, %v4770
    %v4773 = vperm.slane %v4054, %v4420
    %v4774 = vsel %vm4422, %v4773, %v4772
    %v4775 = vperm.slane %v4055, %v4424
    %v4776 = vsel %vm4426, %v4775, %v4774
    %v4777 = vperm.slane %v4056, %v4428
    %v4778 = vsel %vm4430, %v4777, %v4776
    %v4779 = vperm.slane %v4057, %v4432
    %v4780 = vsel %vm4434, %v4779, %v4778
    %v4781 = vperm.slane %v4058, %v4436
    %v4782 = vsel %vm4438, %v4781, %v4780
    %v4783 = vperm.slane %v4059, %v4440
    %v4784 = vsel %vm4442, %v4783, %v4782
    %v4785 = vperm.slane %v4060, %v4125
    %v4786 = vperm.slane %v4061, %v4384
    %v4787 = vsel %vm4386, %v4786, %v4785
    %v4788 = vperm.slane %v4062, %v4388
    %v4789 = vsel %vm4390, %v4788, %v4787
    %v4790 = vperm.slane %v4063, %v4392
    %v4791 = vsel %vm4394, %v4790, %v4789
    %v4792 = vperm.slane %v4064, %v4396
    %v4793 = vsel %vm4398, %v4792, %v4791
    %v4794 = vperm.slane %v4065, %v4400
    %v4795 = vsel %vm4402, %v4794, %v4793
    %v4796 = vperm.slane %v4066, %v4404
    %v4797 = vsel %vm4406, %v4796, %v4795
    %v4798 = vperm.slane %v4067, %v4408
    %v4799 = vsel %vm4410, %v4798, %v4797
    %v4800 = vperm.slane %v4068, %v4412
    %v4801 = vsel %vm4414, %v4800, %v4799
    %v4802 = vperm.slane %v4069, %v4416
    %v4803 = vsel %vm4418, %v4802, %v4801
    %v4804 = vperm.slane %v4070, %v4420
    %v4805 = vsel %vm4422, %v4804, %v4803
    %v4806 = vperm.slane %v4071, %v4424
    %v4807 = vsel %vm4426, %v4806, %v4805
    %v4808 = vperm.slane %v4072, %v4428
    %v4809 = vsel %vm4430, %v4808, %v4807
    %v4810 = vperm.slane %v4073, %v4432
    %v4811 = vsel %vm4434, %v4810, %v4809
    %v4812 = vperm.slane %v4074, %v4436
    %v4813 = vsel %vm4438, %v4812, %v4811
    %v4814 = vperm.slane %v4075, %v4440
    %v4815 = vsel %vm4442, %v4814, %v4813
    %v4816 = vperm.slane %v4076, %v4125
    %v4817 = vperm.slane %v4077, %v4384
    %v4818 = vsel %vm4386, %v4817, %v4816
    %v4819 = vperm.slane %v4078, %v4388
    %v4820 = vsel %vm4390, %v4819, %v4818
    %v4821 = vperm.slane %v4079, %v4392
    %v4822 = vsel %vm4394, %v4821, %v4820
    %v4823 = vperm.slane %v4080, %v4396
    %v4824 = vsel %vm4398, %v4823, %v4822
    %v4825 = vperm.slane %v4081, %v4400
    %v4826 = vsel %vm4402, %v4825, %v4824
    %v4827 = vperm.slane %v4082, %v4404
    %v4828 = vsel %vm4406, %v4827, %v4826
    %v4829 = vperm.slane %v4083, %v4408
    %v4830 = vsel %vm4410, %v4829, %v4828
    %v4831 = vperm.slane %v4084, %v4412
    %v4832 = vsel %vm4414, %v4831, %v4830
    %v4833 = vperm.slane %v4085, %v4416
    %v4834 = vsel %vm4418, %v4833, %v4832
    %v4835 = vperm.slane %v4086, %v4420
    %v4836 = vsel %vm4422, %v4835, %v4834
    %v4837 = vperm.slane %v4087, %v4424
    %v4838 = vsel %vm4426, %v4837, %v4836
    %v4839 = vperm.slane %v4088, %v4428
    %v4840 = vsel %vm4430, %v4839, %v4838
    %v4841 = vperm.slane %v4089, %v4432
    %v4842 = vsel %vm4434, %v4841, %v4840
    %v4843 = vperm.slane %v4090, %v4436
    %v4844 = vsel %vm4438, %v4843, %v4842
    %v4845 = vperm.slane %v4091, %v4440
    %v4846 = vsel %vm4442, %v4845, %v4844
    %v4847 = vperm.slane %v4092, %v4125
    %v4848 = vperm.slane %v4093, %v4384
    %v4849 = vsel %vm4386, %v4848, %v4847
    %v4850 = vperm.slane %v4094, %v4388
    %v4851 = vsel %vm4390, %v4850, %v4849
    %v4852 = vperm.slane %v4095, %v4392
    %v4853 = vsel %vm4394, %v4852, %v4851
    %v4854 = vperm.slane %v4096, %v4396
    %v4855 = vsel %vm4398, %v4854, %v4853
    %v4856 = vperm.slane %v4097, %v4400
    %v4857 = vsel %vm4402, %v4856, %v4855
    %v4858 = vperm.slane %v4098, %v4404
    %v4859 = vsel %vm4406, %v4858, %v4857
    %v4860 = vperm.slane %v4099, %v4408
    %v4861 = vsel %vm4410, %v4860, %v4859
    %v4862 = vperm.slane %v4100, %v4412
    %v4863 = vsel %vm4414, %v4862, %v4861
    %v4864 = vperm.slane %v4101, %v4416
    %v4865 = vsel %vm4418, %v4864, %v4863
    %v4866 = vperm.slane %v4102, %v4420
    %v4867 = vsel %vm4422, %v4866, %v4865
    %v4868 = vperm.slane %v4103, %v4424
    %v4869 = vsel %vm4426, %v4868, %v4867
    %v4870 = vperm.slane %v4104, %v4428
    %v4871 = vsel %vm4430, %v4870, %v4869
    %v4872 = vperm.slane %v4105, %v4432
    %v4873 = vsel %vm4434, %v4872, %v4871
    %v4874 = vperm.slane %v4106, %v4436
    %v4875 = vsel %vm4438, %v4874, %v4873
    %v4876 = vperm.slane %v4107, %v4440
    %v4877 = vsel %vm4442, %v4876, %v4875
    %v4878 = vperm.slane %v4108, %v4125
    %v4879 = vperm.slane %v4109, %v4384
    %v4880 = vsel %vm4386, %v4879, %v4878
    %v4881 = vperm.slane %v4110, %v4388
    %v4882 = vsel %vm4390, %v4881, %v4880
    %v4883 = vperm.slane %v4111, %v4392
    %v4884 = vsel %vm4394, %v4883, %v4882
    %v4885 = vperm.slane %v4112, %v4396
    %v4886 = vsel %vm4398, %v4885, %v4884
    %v4887 = vperm.slane %v4113, %v4400
    %v4888 = vsel %vm4402, %v4887, %v4886
    %v4889 = vperm.slane %v4114, %v4404
    %v4890 = vsel %vm4406, %v4889, %v4888
    %v4891 = vperm.slane %v4115, %v4408
    %v4892 = vsel %vm4410, %v4891, %v4890
    %v4893 = vperm.slane %v4116, %v4412
    %v4894 = vsel %vm4414, %v4893, %v4892
    %v4895 = vperm.slane %v4117, %v4416
    %v4896 = vsel %vm4418, %v4895, %v4894
    %v4897 = vperm.slane %v4118, %v4420
    %v4898 = vsel %vm4422, %v4897, %v4896
    %v4899 = vperm.slane %v4119, %v4424
    %v4900 = vsel %vm4426, %v4899, %v4898
    %v4901 = vperm.slane %v4120, %v4428
    %v4902 = vsel %vm4430, %v4901, %v4900
    %v4903 = vperm.slane %v4121, %v4432
    %v4904 = vsel %vm4434, %v4903, %v4902
    %v4905 = vperm.slane %v4122, %v4436
    %v4906 = vsel %vm4438, %v4905, %v4904
    %v4907 = vperm.slane %v4123, %v4440
    %v4908 = vsel %vm4442, %v4907, %v4906
    %vm4909 = vcmask 1041409
    %v4910 = vsel %vm4909, %v4474, %v4443
    %vm4911 = vcmask 1042434
    %v4912 = vsel %vm4911, %v4505, %v4910
    %vm4913 = vcmask 1043459
    %v4914 = vsel %vm4913, %v4536, %v4912
    %vm4915 = vcmask 1044484
    %v4916 = vsel %vm4915, %v4567, %v4914
    %vm4917 = vcmask 1045509
    %v4918 = vsel %vm4917, %v4598, %v4916
    %vm4919 = vcmask 1046534
    %v4920 = vsel %vm4919, %v4629, %v4918
    %vm4921 = vcmask 1047559
    %v4922 = vsel %vm4921, %v4660, %v4920
    %v4923 = vsel %vm4909, %v4722, %v4691
    %v4924 = vsel %vm4911, %v4753, %v4923
    %v4925 = vsel %vm4913, %v4784, %v4924
    %v4926 = vsel %vm4915, %v4815, %v4925
    %v4927 = vsel %vm4917, %v4846, %v4926
    %v4928 = vsel %vm4919, %v4877, %v4927
    %v4929 = vsel %vm4921, %v4908, %v4928
    %v4932 = vsel %vm4126, %v4922, -1e+30
    %v4933 = vsel %vm4126, %v4929, -1e+30
    %4934 = vmax.xlane.f32.xlu0 %v4932
    %v4935 = vpop.xlane.xlu0 %4934
    %4936 = vmax.xlane.f32.xlu0 %v4933
    %v4937 = vpop.xlane.xlu0 %4936
    %v4938 = vsub.f32 %v4932, %v4935
    %v4939 = vsub.f32 %v4933, %v4937
    %v4940 = vmul.f32 %v4938, 1.442695
    %v4941 = vpow.pop %v4940
    %v4942 = vmul.f32 %v4939, 1.442695
    %v4943 = vpow.pop %v4942
    %4944 = vadd.xlane.f32.xlu0 %v4941
    %v4945 = vpop.xlane.xlu0 %4944
    %4946 = vadd.xlane.f32.xlu0 %v4943
    %v4947 = vpop.xlane.xlu0 %4946
    %v4948 = vrcp.pop %v4945
    %v4949 = vrcp.pop %v4947
    %v4950 = vmul.f32 %v4941, %v4948
    %v4951 = vmul.f32 %v4943, %v4949
    %v4952 = vpack.c.bf16 %v4950, %v4950
    %v4953 = vpack.c.bf16 %v4951, %v4951
    %v4956 = vrot.slane %v4952, 3
    %v4957 = vrot.slane %v4953, 3
    %vm4958 = vcmask 1040384
    %v4961 = vsel %vm4958, %v4952, %v4956
    %v4963 = vsel %vm4909, %v4952, %v4956
    %v4965 = vrot.slane %v4963, 1
    %v4966 = vsel %vm4911, %v4952, %v4956
    %v4968 = vrot.slane %v4966, 2
    %v4969 = vsel %vm4913, %v4952, %v4956
    %v4971 = vrot.slane %v4969, 3
    %v4974 = vsel %vm4958, %v4953, %v4957
    %v4976 = vsel %vm4909, %v4953, %v4957
    %v4978 = vrot.slane %v4976, 1
    %v4979 = vsel %vm4911, %v4953, %v4957
    %v4981 = vrot.slane %v4979, 2
    %v4982 = vsel %vm4913, %v4953, %v4957
    %v4984 = vrot.slane %v4982, 3
    %v4985 = vunpack.i.l.s16 %v4961
    %v4986 = vunpack.i.h.s16 %v4961
    %v4987 = vunpack.i.l.s16 %v4965
    %v4988 = vunpack.i.h.s16 %v4965
    %v4989 = vunpack.i.l.s16 %v4968
    %v4990 = vunpack.i.h.s16 %v4968
    %v4991 = vunpack.i.l.s16 %v4971
    %v4992 = vunpack.i.h.s16 %v4971
    %v4993 = vunpack.i.l.s16 %v4974
    %v4994 = vunpack.i.h.s16 %v4974
    %v4995 = vunpack.i.l.s16 %v4978
    %v4996 = vunpack.i.h.s16 %v4978
    %v4997 = vunpack.i.l.s16 %v4981
    %v4998 = vunpack.i.h.s16 %v4981
    %v4999 = vunpack.i.l.s16 %v4984
    %v5000 = vunpack.i.h.s16 %v4984
    %v5001 = vpack.i.b16 %v4985, %v4985
    %v5002 = vperm.slane %v5001, 0
    %5012 = vmatpush.bf16.msra.mxu0 %v811
    %5013 = vmatpush.bf16.msra.mxu0 %v810
    %5014 = vmatpush.bf16.msra.mxu0 %v809
    %5015 = vmatpush.bf16.msra.mxu0 %v808
    %5016 = vmatpush.bf16.msra.mxu0 %v807
    %5017 = vmatpush.bf16.msra.mxu0 %v806
    %5018 = vmatpush.bf16.msra.mxu0 %v805
    %5019 = vmatpush.bf16.msra.mxu0 %v804
    %5020 = vmatmul.bf16.gmra.mxu0 %v5002
    %v5021 = vpop.f32.mrf.mxu0
    %v5022 = vadd.f32 0.0, %v5021
    %v5023 = vpop.f32.mrf.mxu0
    %5024 = vdwg.mxu0
    %v5025 = vpack.i.b16 %v4986, %v4986
    %v5026 = vperm.slane %v5025, 0
    %5036 = vmatpush.bf16.msra.mxu0 %v819
    %5037 = vmatpush.bf16.msra.mxu0 %v818
    %5038 = vmatpush.bf16.msra.mxu0 %v817
    %5039 = vmatpush.bf16.msra.mxu0 %v816
    %5040 = vmatpush.bf16.msra.mxu0 %v815
    %5041 = vmatpush.bf16.msra.mxu0 %v814
    %5042 = vmatpush.bf16.msra.mxu0 %v813
    %5043 = vmatpush.bf16.msra.mxu0 %v812
    %5044 = vmatmul.bf16.gmra.mxu0 %v5026
    %v5045 = vpop.f32.mrf.mxu0
    %v5046 = vadd.f32 0.0, %v5045
    %v5047 = vpop.f32.mrf.mxu0
    %5048 = vdwg.mxu0
    %v5049 = vpack.i.b16 %v4987, %v4987
    %v5050 = vperm.slane %v5049, 0
    %5060 = vmatpush.bf16.msra.mxu0 %v827
    %5061 = vmatpush.bf16.msra.mxu0 %v826
    %5062 = vmatpush.bf16.msra.mxu0 %v825
    %5063 = vmatpush.bf16.msra.mxu0 %v824
    %5064 = vmatpush.bf16.msra.mxu0 %v823
    %5065 = vmatpush.bf16.msra.mxu0 %v822
    %5066 = vmatpush.bf16.msra.mxu0 %v821
    %5067 = vmatpush.bf16.msra.mxu0 %v820
    %5068 = vmatmul.bf16.gmra.mxu0 %v5050
    %v5069 = vpop.f32.mrf.mxu0
    %v5070 = vadd.f32 0.0, %v5069
    %v5071 = vpop.f32.mrf.mxu0
    %5072 = vdwg.mxu0
    %v5073 = vpack.i.b16 %v4988, %v4988
    %v5074 = vperm.slane %v5073, 0
    %5084 = vmatpush.bf16.msra.mxu0 %v835
    %5085 = vmatpush.bf16.msra.mxu0 %v834
    %5086 = vmatpush.bf16.msra.mxu0 %v833
    %5087 = vmatpush.bf16.msra.mxu0 %v832
    %5088 = vmatpush.bf16.msra.mxu0 %v831
    %5089 = vmatpush.bf16.msra.mxu0 %v830
    %5090 = vmatpush.bf16.msra.mxu0 %v829
    %5091 = vmatpush.bf16.msra.mxu0 %v828
    %5092 = vmatmul.bf16.gmra.mxu0 %v5074
    %v5093 = vpop.f32.mrf.mxu0
    %v5094 = vadd.f32 0.0, %v5093
    %v5095 = vpop.f32.mrf.mxu0
    %5096 = vdwg.mxu0
    %v5097 = vpack.i.b16 %v4989, %v4989
    %v5098 = vperm.slane %v5097, 0
    %5108 = vmatpush.bf16.msra.mxu0 %v843
    %5109 = vmatpush.bf16.msra.mxu0 %v842
    %5110 = vmatpush.bf16.msra.mxu0 %v841
    %5111 = vmatpush.bf16.msra.mxu0 %v840
    %5112 = vmatpush.bf16.msra.mxu0 %v839
    %5113 = vmatpush.bf16.msra.mxu0 %v838
    %5114 = vmatpush.bf16.msra.mxu0 %v837
    %5115 = vmatpush.bf16.msra.mxu0 %v836
    %5116 = vmatmul.bf16.gmra.mxu0 %v5098
    %v5117 = vpop.f32.mrf.mxu0
    %v5118 = vadd.f32 0.0, %v5117
    %v5119 = vpop.f32.mrf.mxu0
    %5120 = vdwg.mxu0
    %v5121 = vpack.i.b16 %v4990, %v4990
    %v5122 = vperm.slane %v5121, 0
    %5132 = vmatpush.bf16.msra.mxu0 %v851
    %5133 = vmatpush.bf16.msra.mxu0 %v850
    %5134 = vmatpush.bf16.msra.mxu0 %v849
    %5135 = vmatpush.bf16.msra.mxu0 %v848
    %5136 = vmatpush.bf16.msra.mxu0 %v847
    %5137 = vmatpush.bf16.msra.mxu0 %v846
    %5138 = vmatpush.bf16.msra.mxu0 %v845
    %5139 = vmatpush.bf16.msra.mxu0 %v844
    %5140 = vmatmul.bf16.gmra.mxu0 %v5122
    %v5141 = vpop.f32.mrf.mxu0
    %v5142 = vadd.f32 0.0, %v5141
    %v5143 = vpop.f32.mrf.mxu0
    %5144 = vdwg.mxu0
    %v5145 = vpack.i.b16 %v4991, %v4991
    %v5146 = vperm.slane %v5145, 0
    %5156 = vmatpush.bf16.msra.mxu0 %v859
    %5157 = vmatpush.bf16.msra.mxu0 %v858
    %5158 = vmatpush.bf16.msra.mxu0 %v857
    %5159 = vmatpush.bf16.msra.mxu0 %v856
    %5160 = vmatpush.bf16.msra.mxu0 %v855
    %5161 = vmatpush.bf16.msra.mxu0 %v854
    %5162 = vmatpush.bf16.msra.mxu0 %v853
    %5163 = vmatpush.bf16.msra.mxu0 %v852
    %5164 = vmatmul.bf16.gmra.mxu0 %v5146
    %v5165 = vpop.f32.mrf.mxu0
    %v5166 = vadd.f32 0.0, %v5165
    %v5167 = vpop.f32.mrf.mxu0
    %5168 = vdwg.mxu0
    %v5169 = vpack.i.b16 %v4992, %v4992
    %v5170 = vperm.slane %v5169, 0
    %5180 = vmatpush.bf16.msra.mxu0 %v867
    %5181 = vmatpush.bf16.msra.mxu0 %v866
    %5182 = vmatpush.bf16.msra.mxu0 %v865
    %5183 = vmatpush.bf16.msra.mxu0 %v864
    %5184 = vmatpush.bf16.msra.mxu0 %v863
    %5185 = vmatpush.bf16.msra.mxu0 %v862
    %5186 = vmatpush.bf16.msra.mxu0 %v861
    %5187 = vmatpush.bf16.msra.mxu0 %v860
    %5188 = vmatmul.bf16.gmra.mxu0 %v5170
    %v5189 = vpop.f32.mrf.mxu0
    %v5190 = vadd.f32 0.0, %v5189
    %v5191 = vpop.f32.mrf.mxu0
    %5192 = vdwg.mxu0
    %v5193 = vpack.i.b16 %v4993, %v4993
    %v5194 = vperm.slane %v5193, 0
    %5204 = vmatpush.bf16.msra.mxu0 %v875
    %5205 = vmatpush.bf16.msra.mxu0 %v874
    %5206 = vmatpush.bf16.msra.mxu0 %v873
    %5207 = vmatpush.bf16.msra.mxu0 %v872
    %5208 = vmatpush.bf16.msra.mxu0 %v871
    %5209 = vmatpush.bf16.msra.mxu0 %v870
    %5210 = vmatpush.bf16.msra.mxu0 %v869
    %5211 = vmatpush.bf16.msra.mxu0 %v868
    %5212 = vmatmul.bf16.gmra.mxu0 %v5194
    %v5213 = vpop.f32.mrf.mxu0
    %v5214 = vadd.f32 0.0, %v5213
    %v5215 = vpop.f32.mrf.mxu0
    %5216 = vdwg.mxu0
    %v5217 = vpack.i.b16 %v4994, %v4994
    %v5218 = vperm.slane %v5217, 0
    %5228 = vmatpush.bf16.msra.mxu0 %v883
    %5229 = vmatpush.bf16.msra.mxu0 %v882
    %5230 = vmatpush.bf16.msra.mxu0 %v881
    %5231 = vmatpush.bf16.msra.mxu0 %v880
    %5232 = vmatpush.bf16.msra.mxu0 %v879
    %5233 = vmatpush.bf16.msra.mxu0 %v878
    %5234 = vmatpush.bf16.msra.mxu0 %v877
    %5235 = vmatpush.bf16.msra.mxu0 %v876
    %5236 = vmatmul.bf16.gmra.mxu0 %v5218
    %v5237 = vpop.f32.mrf.mxu0
    %v5238 = vadd.f32 0.0, %v5237
    %v5239 = vpop.f32.mrf.mxu0
    %5240 = vdwg.mxu0
    %v5241 = vpack.i.b16 %v4995, %v4995
    %v5242 = vperm.slane %v5241, 0
    %5252 = vmatpush.bf16.msra.mxu0 %v891
    %5253 = vmatpush.bf16.msra.mxu0 %v890
    %5254 = vmatpush.bf16.msra.mxu0 %v889
    %5255 = vmatpush.bf16.msra.mxu0 %v888
    %5256 = vmatpush.bf16.msra.mxu0 %v887
    %5257 = vmatpush.bf16.msra.mxu0 %v886
    %5258 = vmatpush.bf16.msra.mxu0 %v885
    %5259 = vmatpush.bf16.msra.mxu0 %v884
    %5260 = vmatmul.bf16.gmra.mxu0 %v5242
    %v5261 = vpop.f32.mrf.mxu0
    %v5262 = vadd.f32 0.0, %v5261
    %v5263 = vpop.f32.mrf.mxu0
    %5264 = vdwg.mxu0
    %v5265 = vpack.i.b16 %v4996, %v4996
    %v5266 = vperm.slane %v5265, 0
    %5276 = vmatpush.bf16.msra.mxu0 %v899
    %5277 = vmatpush.bf16.msra.mxu0 %v898
    %5278 = vmatpush.bf16.msra.mxu0 %v897
    %5279 = vmatpush.bf16.msra.mxu0 %v896
    %5280 = vmatpush.bf16.msra.mxu0 %v895
    %5281 = vmatpush.bf16.msra.mxu0 %v894
    %5282 = vmatpush.bf16.msra.mxu0 %v893
    %5283 = vmatpush.bf16.msra.mxu0 %v892
    %5284 = vmatmul.bf16.gmra.mxu0 %v5266
    %v5285 = vpop.f32.mrf.mxu0
    %v5286 = vadd.f32 0.0, %v5285
    %v5287 = vpop.f32.mrf.mxu0
    %5288 = vdwg.mxu0
    %v5289 = vpack.i.b16 %v4997, %v4997
    %v5290 = vperm.slane %v5289, 0
    %5300 = vmatpush.bf16.msra.mxu0 %v907
    %5301 = vmatpush.bf16.msra.mxu0 %v906
    %5302 = vmatpush.bf16.msra.mxu0 %v905
    %5303 = vmatpush.bf16.msra.mxu0 %v904
    %5304 = vmatpush.bf16.msra.mxu0 %v903
    %5305 = vmatpush.bf16.msra.mxu0 %v902
    %5306 = vmatpush.bf16.msra.mxu0 %v901
    %5307 = vmatpush.bf16.msra.mxu0 %v900
    %5308 = vmatmul.bf16.gmra.mxu0 %v5290
    %v5309 = vpop.f32.mrf.mxu0
    %v5310 = vadd.f32 0.0, %v5309
    %v5311 = vpop.f32.mrf.mxu0
    %5312 = vdwg.mxu0
    %v5313 = vpack.i.b16 %v4998, %v4998
    %v5314 = vperm.slane %v5313, 0
    %5324 = vmatpush.bf16.msra.mxu0 %v915
    %5325 = vmatpush.bf16.msra.mxu0 %v914
    %5326 = vmatpush.bf16.msra.mxu0 %v913
    %5327 = vmatpush.bf16.msra.mxu0 %v912
    %5328 = vmatpush.bf16.msra.mxu0 %v911
    %5329 = vmatpush.bf16.msra.mxu0 %v910
    %5330 = vmatpush.bf16.msra.mxu0 %v909
    %5331 = vmatpush.bf16.msra.mxu0 %v908
    %5332 = vmatmul.bf16.gmra.mxu0 %v5314
    %v5333 = vpop.f32.mrf.mxu0
    %v5334 = vadd.f32 0.0, %v5333
    %v5335 = vpop.f32.mrf.mxu0
    %5336 = vdwg.mxu0
    %v5337 = vpack.i.b16 %v4999, %v4999
    %v5338 = vperm.slane %v5337, 0
    %5348 = vmatpush.bf16.msra.mxu0 %v923
    %5349 = vmatpush.bf16.msra.mxu0 %v922
    %5350 = vmatpush.bf16.msra.mxu0 %v921
    %5351 = vmatpush.bf16.msra.mxu0 %v920
    %5352 = vmatpush.bf16.msra.mxu0 %v919
    %5353 = vmatpush.bf16.msra.mxu0 %v918
    %5354 = vmatpush.bf16.msra.mxu0 %v917
    %5355 = vmatpush.bf16.msra.mxu0 %v916
    %5356 = vmatmul.bf16.gmra.mxu0 %v5338
    %v5357 = vpop.f32.mrf.mxu0
    %v5358 = vadd.f32 0.0, %v5357
    %v5359 = vpop.f32.mrf.mxu0
    %5360 = vdwg.mxu0
    %v5361 = vpack.i.b16 %v5000, %v5000
    %v5362 = vperm.slane %v5361, 0
    %5372 = vmatpush.bf16.msra.mxu0 %v931
    %5373 = vmatpush.bf16.msra.mxu0 %v930
    %5374 = vmatpush.bf16.msra.mxu0 %v929
    %5375 = vmatpush.bf16.msra.mxu0 %v928
    %5376 = vmatpush.bf16.msra.mxu0 %v927
    %5377 = vmatpush.bf16.msra.mxu0 %v926
    %5378 = vmatpush.bf16.msra.mxu0 %v925
    %5379 = vmatpush.bf16.msra.mxu0 %v924
    %5380 = vmatmul.bf16.gmra.mxu0 %v5362
    %v5381 = vpop.f32.mrf.mxu0
    %v5382 = vadd.f32 0.0, %v5381
    %v5383 = vpop.f32.mrf.mxu0
    %5384 = vdwg.mxu0
    %v5401 = vrot.slane %v5046, 7
    %v5402 = vsel %vm4909, %v5401, %v5022
    %v5403 = vrot.slane %v5070, 6
    %v5404 = vsel %vm4911, %v5403, %v5402
    %v5405 = vrot.slane %v5094, 5
    %v5406 = vsel %vm4913, %v5405, %v5404
    %v5407 = vrot.slane %v5118, 4
    %v5408 = vsel %vm4915, %v5407, %v5406
    %v5409 = vrot.slane %v5142, 3
    %v5410 = vsel %vm4917, %v5409, %v5408
    %v5411 = vrot.slane %v5166, 2
    %v5412 = vsel %vm4919, %v5411, %v5410
    %v5413 = vrot.slane %v5190, 1
    %v5414 = vsel %vm4921, %v5413, %v5412
    %v5415 = vrot.slane %v5238, 7
    %v5416 = vsel %vm4909, %v5415, %v5214
    %v5417 = vrot.slane %v5262, 6
    %v5418 = vsel %vm4911, %v5417, %v5416
    %v5419 = vrot.slane %v5286, 5
    %v5420 = vsel %vm4913, %v5419, %v5418
    %v5421 = vrot.slane %v5310, 4
    %v5422 = vsel %vm4915, %v5421, %v5420
    %v5423 = vrot.slane %v5334, 3
    %v5424 = vsel %vm4917, %v5423, %v5422
    %v5425 = vrot.slane %v5358, 2
    %v5426 = vsel %vm4919, %v5425, %v5424
    %v5427 = vrot.slane %v5382, 1
    %v5428 = vsel %vm4921, %v5427, %v5426
    %5431 = vst.msk [vmem:[#allocation3] sm:$0xff] %vm944, %v5414
    %5432 = vst.msk [vmem:[#allocation3 + $0x8] sm:$0xff] %vm944, %v5428
    %5433 = vst [vmem:[#allocation5] sm:$0xff] %v4950
    %5434 = vst [vmem:[#allocation5 + $0x8] sm:$0xff] %v4951
    // Predicated region
    $region30: #{tpu_custom_call.1} parent=1 // pred_check
      _
    $region31: #{tpu_custom_call.1} parent=1 // pred_check_branch
      %5436 = sbr.rel (0) target = $region33
    $region32: #{tpu_custom_call.1} parent=1 // pred_region
      %5438 = vsyncadd [#allocation4], 0
      %s5439 = sshll.u32 [#allocation3], 4
      %s5440 = int_to_ptr.vmem [resolvable:$true] %s5439
      %s5441 = sshll.u32 %s7, 4
      %s5442 = int_to_ptr.hbm [resolvable:$true] %s5441
      %5447 = dma.vmem_to_hbm [thread:$0]  %s5440, 256, %s5442, [#allocation4], 128, 128, 8
    $region33: #{tpu_custom_call.1} parent=1 // pred_fallthru
      _
    // Predicated region
    $region34: #{tpu_custom_call.1} parent=1 // pred_check
      _
    $region35: #{tpu_custom_call.1} parent=1 // pred_check_branch
      %5449 = sbr.rel (0) target = $region37
    $region36: #{tpu_custom_call.1} parent=1 // pred_region
      %5451 = vsyncadd [#allocation6], 0
      %s5452 = sshll.u32 [#allocation5], 4
      %s5453 = int_to_ptr.vmem [resolvable:$true] %s5452
      %s5454 = sshll.u32 %s8, 4
      %s5455 = int_to_ptr.hbm [resolvable:$true] %s5454
      %5460 = dma.vmem_to_hbm [thread:$0]  %s5453, 256, %s5455, [#allocation6], 128, 128, 8
    $region37: #{tpu_custom_call.1} parent=1 // pred_fallthru
      _
    // Predicated region
    $region38: #{tpu_custom_call.1} parent=1 // pred_check
      _
    $region39: #{tpu_custom_call.1} parent=1 // pred_check_branch
      %5462 = sbr.rel (0) target = $region41
    $region40: #{tpu_custom_call.1} parent=1 // pred_region
      %5464 = dma.done [#allocation4], 256
    $region41: #{tpu_custom_call.1} parent=1 // pred_fallthru
      _
    // Predicated region
    $region42: #{tpu_custom_call.1} parent=1 // pred_check
      _
    $region43: #{tpu_custom_call.1} parent=1 // pred_check_branch
      %5466 = sbr.rel (0) target = $region45
    $region44: #{tpu_custom_call.1} parent=1 // pred_region
      %5468 = dma.done [#allocation6], 256
    $region45: #{tpu_custom_call.1} parent=1 // pred_fallthru
      _
    %5469 = vsyncpa [#allocation4], 1
    %5470 = vsyncpa [#allocation6], 1

</llo_original>
